<compile_context>
chip_gen: v7x
topology: tpu7x:2x2x1
jax: 0.10.0
libtpu: 0.0.40
codegen_flags: <defaults>
</compile_context>

<pallas_src>
import numpy as np
import jax
import jax.numpy as jnp
from jax import lax
from jax.experimental import pallas as pl
from jax.experimental.pallas import tpu as pltpu

EPS = 1e-6
N_ATOMS = 6            # implied by node_in_dim = 8*n_atoms - 4 = 44
NODE_IN = 44
EDGE_IN = 688
NODE_PAD = 64          # 44 -> 64   (pack*64  = 256  = 2*128)
EDGE_PAD = 704         # 688 -> 704 (pack*704 = 2816 = 22*128)
HIDDEN = 32
CENTRAL_IDX = 1        # e.g. bb_atoms.index('CA')
LANE = 128


def _vmem_cap_bytes():
    """Per-generation VMEM budget: ~75% of the per-TensorCore capacity."""
    cap = 64 << 20  # conservative default (v7x has 64 MiB / TensorCore)
    try:
        info = pltpu.get_tpu_info()
        cap = int(getattr(info, "vmem_capacity_bytes", cap))
    except Exception:
        pass
    return max((cap * 3) // 4, 16 << 20)


# ----------------------------------------------------------------------------
# Pallas kernel: nan_to_num -> (packed) Linear -> LayerNorm, lane-dense output.
#
# `pack` consecutive rows of the original (n, d) feature matrix are packed into
# one kernel row of width pack*d so each output row is pack*hidden = 128 lanes
# wide (unmasked vector stores).  The linear layer uses a block-diagonal
# bf16 weight kron(I_pack, W), and per-row LayerNorm statistics come from two
# small group-averaging matmuls (no in-kernel reshape).
# ----------------------------------------------------------------------------
def embed_norm_kernel(x_ref, w_ref, m_ref, bgb_ref, o_ref):
    # torch.nan_to_num: NaN -> 0, done in the bf16 streaming dtype.  The
    # geometric features only produce NaN (at chain boundaries), never +/-inf,
    # so the inf clamp is dropped (finfo(f32).max is unrepresentable in bf16).
    # TODO(synk): re-add a bf16-max clamp if upstream features can produce inf.
    x = x_ref[...]
    x = jnp.where(jnp.isnan(x), jnp.zeros_like(x), x)

    bgb = bgb_ref[...]                      # rows 0..2: bias, gamma, beta (tiled)
    # bf16 x bf16 MXU matmul with f32 accumulation.
    h = jnp.dot(x, w_ref[...], preferred_element_type=jnp.float32) + bgb[0:1, :]

    # Grouped LayerNorm statistics via small averaging matmuls, issued
    # back-to-back: var = E[h^2] - mu^2 breaks the mu -> (h-mu) -> matmul
    # serial dependency on the MXU result FIFO.
    m = m_ref[...]
    mu = jnp.dot(h, m, preferred_element_type=jnp.float32)
    sq = jnp.dot(h * h, m, preferred_element_type=jnp.float32)
    var = sq - mu * mu
    hn = (h - mu) * lax.rsqrt(var + 1e-5)   # torch LayerNorm eps = 1e-5
    o_ref[...] = (hn * bgb[1:2, :] + bgb[2:3, :]).astype(o_ref.dtype)


def prepare_embed_weights(w, b, gamma, beta, d_pad, hidden=HIDDEN):
    """Build kernel-resident tensors ONCE (hoisted out of the jitted forward)."""
    d_in = w.shape[0]
    assert LANE % hidden == 0
    pack = LANE // hidden
    lane_out = pack * hidden
    assert (pack * d_pad) % LANE == 0, "pad feature dim so pack*d_pad % 128 == 0"

    # Block-diagonal bf16 weight: kron(I_pack, W_padded) -> (pack*d_pad, 128).
    w_pad = jnp.pad(w.astype(jnp.float32), ((0, d_pad - d_in), (0, 0)))
    w_big = jnp.kron(jnp.eye(pack, dtype=jnp.float32), w_pad).astype(jnp.bfloat16)

    # bias / gamma / beta tiled across the lane groups, padded to 8 sublanes.
    bgb = jnp.zeros((8, lane_out), jnp.float32)
    bgb = bgb.at[0].set(jnp.tile(b.astype(jnp.float32), pack))
    bgb = bgb.at[1].set(jnp.tile(gamma.astype(jnp.float32), pack))
    bgb = bgb.at[2].set(jnp.tile(beta.astype(jnp.float32), pack))

    # Group-averaging matrix for the LayerNorm statistics (mean over each
    # hidden-sized lane group), applied with one small MXU matmul per stat.
    gid = np.arange(lane_out) // hidden
    m_avg = jnp.asarray((gid[:, None] == gid[None, :]).astype(np.float32) / hidden)
    return {"w_big": w_big, "m_avg": m_avg, "bgb": bgb}


def embed_norm(x, prep, *, tile_rows=8192):
    """Fused nan_to_num + Linear(d_in->hidden) + LayerNorm over rows of `x`.

    x    : (n, d_pad) bf16 feature matrix, extra (padding) columns are zero.
    prep : dict from prepare_embed_weights (bf16 w_big, f32 m_avg, f32 bgb).
    returns (n, hidden) float32.
    """
    n, d_pad = x.shape
    w_big, m_avg, bgb = prep["w_big"], prep["m_avg"], prep["bgb"]
    k_packed, lane_out = w_big.shape
    pack = k_packed // d_pad
    hidden = lane_out // pack

    # Row-pad to a multiple of `pack` (cheap copy only in the ragged case).
    n_p = pl.cdiv(n, pack) * pack
    if n_p != n:
        x = jnp.pad(x, ((0, n_p - n), (0, 0)))
    n_rows = n_p // pack

    # Pack `pack` consecutive rows into one lane-dense row (contiguous reshape).
    x_packed = x.reshape(n_rows, k_packed)

    # Tile selection: large row tiles (multiple of 8 sublanes) under a
    # per-generation VMEM cap (v5e/v6e: 128 MiB/TC, v7x: 64 MiB/TC).
    cap = _vmem_cap_bytes()
    x_item = jnp.dtype(x.dtype).itemsize

    def footprint(tg):
        return (2 * tg * k_packed * x_item        # double-buffered bf16 input
                + 2 * tg * lane_out * 4           # double-buffered f32 output
                + 2 * k_packed * lane_out * 2     # resident bf16 weights
                + 2 * lane_out * lane_out * 4     # resident m_avg
                + 4 * tg * lane_out * 4           # in-kernel f32 temps (h, h*h, ...)
                + (1 << 20))                      # headroom

    tile_g = max(8, (tile_rows // pack) // 8 * 8)
    if n_rows <= tile_g:
        tile_g = n_rows
    while tile_g > 8 and footprint(tile_g) > cap:
        tile_g = max(8, (tile_g // 2) // 8 * 8)
    grid = pl.cdiv(n_rows, tile_g)
    vmem_limit = int(min(max(footprint(tile_g) + (4 << 20), 16 << 20), cap))

    out = pl.pallas_call(
        embed_norm_kernel,
        out_shape=jax.ShapeDtypeStruct((n_rows, lane_out), jnp.float32),
        grid=(grid,),
        in_specs=[
            pl.BlockSpec((tile_g, k_packed), lambda i: (i, 0)),
            pl.BlockSpec((k_packed, lane_out), lambda i: (0, 0)),
            pl.BlockSpec((lane_out, lane_out), lambda i: (0, 0)),
            pl.BlockSpec((8, lane_out), lambda i: (0, 0)),
        ],
        out_specs=pl.BlockSpec((tile_g, lane_out), lambda i: (i, 0)),
        compiler_params=pltpu.CompilerParams(
            dimension_semantics=("parallel",),
            vmem_limit_bytes=vmem_limit),
    )(x_packed, w_big, m_avg, bgb)

    # TODO(synk): downstream consumers should take the packed (rows, 128)
    # layout directly to avoid this relayout to a 32-lane array.
    return out.reshape(n_rows * pack, hidden)[:n]


# ----------------------------------------------------------------------------
# Feature construction (plain JAX glue, mirrors the PyTorch reference)
# ----------------------------------------------------------------------------
def _normalize(x, axis=-1, eps=1e-12):
    n = jnp.sqrt(jnp.sum(x * x, axis=axis, keepdims=True))
    return x / jnp.maximum(n, eps)


def _chain_masks(batch):
    diff = batch[1:] != batch[:-1]
    is_start = jnp.concatenate([jnp.array([False]), diff])   # starts a new chain
    is_end = jnp.concatenate([diff, jnp.array([False])])     # ends its chain
    return is_start, is_end


def cal_dihedral(X, batch, eps=EPS):
    n_res, n_atoms = X.shape[:2]
    Xf = X.reshape(-1, 3)
    dX = Xf[1:] - Xf[:-1]
    U = _normalize(dX)
    c1 = _normalize(jnp.cross(U[:-2], U[1:-1]))
    c2 = _normalize(jnp.cross(U[1:-1], U[2:]))
    dih = jnp.arccos(jnp.clip(jnp.sum(c1 * c2, -1), -1 + eps, 1 - eps)) * jnp.sign(
        jnp.sum(c2 * U[:-2], -1))
    nan1 = jnp.full((1,), jnp.nan, dih.dtype)
    nan2 = jnp.full((2,), jnp.nan, dih.dtype)
    dih = jnp.concatenate([nan1, dih, nan2]).reshape(n_res, n_atoms, 1)

    is_start, is_end = _chain_masks(batch)
    atom = jnp.arange(n_atoms)
    mask = (is_start[:, None] & (atom == 0)[None, :]) | \
           (is_end[:, None] & (atom >= n_atoms - 2)[None, :])
    dih = jnp.where(mask[:, :, None], jnp.nan, dih)
    return jnp.concatenate([jnp.sin(dih), jnp.cos(dih)], axis=-1).reshape(n_res, -1)


def cal_angle(X, batch, eps=EPS):
    n_res, n_atoms = X.shape[:2]
    Xf = X.reshape(-1, 3)
    d0 = _normalize(Xf[:-2] - Xf[1:-1])
    d1 = _normalize(Xf[2:] - Xf[1:-1])
    cosine = jnp.sum(d0 * d1, -1)
    sine = jnp.sqrt(1 - cosine ** 2 + eps)
    nan1 = jnp.full((1,), jnp.nan, cosine.dtype)
    sine = jnp.concatenate([nan1, sine, nan1]).reshape(n_res, n_atoms, 1)
    cosine = jnp.concatenate([nan1, cosine, nan1]).reshape(n_res, n_atoms, 1)

    is_start, is_end = _chain_masks(batch)
    atom = jnp.arange(n_atoms)
    mask = (is_start[:, None] & (atom == 0)[None, :]) | \
           (is_end[:, None] & (atom == n_atoms - 1)[None, :])
    sine = jnp.where(mask[:, :, None], jnp.nan, sine)
    cosine = jnp.where(mask[:, :, None], jnp.nan, cosine)
    return jnp.concatenate([sine[:, None], cosine[:, None]], axis=-1).reshape(n_res, -1)


def rbf(D, D_min=0.0, D_max=20.0, num_rbf=16):
    D_mu = jnp.linspace(D_min, D_max, num_rbf)
    D_sigma = (D_max - D_min) / num_rbf
    return jnp.exp(-(((D[..., None] - D_mu) / D_sigma) ** 2))


def cal_local_system(X, batch):
    dX = X[1:] - X[:-1]
    u = _normalize(dX)
    b = _normalize(u[:-1] - u[1:])
    n = _normalize(jnp.cross(u[:-1], u[1:]))
    Q = jnp.stack([b, n, jnp.cross(b, n)], axis=-1)            # (n_res-2, 3, 3)
    nan_row = jnp.full((1, 3, 3), jnp.nan, Q.dtype)
    Q = jnp.concatenate([nan_row, Q, nan_row], axis=0)         # (n_res, 3, 3)
    is_start, is_end = _chain_masks(batch)
    Q = jnp.where((is_start | is_end)[:, None, None], jnp.nan, Q)
    return Q


def quaternions(R):
    diag = jnp.diagonal(R, axis1=-2, axis2=-1)
    Rxx, Ryy, Rzz = diag[..., 0], diag[..., 1], diag[..., 2]
    mags = 0.5 * jnp.sqrt(jnp.abs(1 + jnp.stack(
        [Rxx - Ryy - Rzz, -Rxx + Ryy - Rzz, -Rxx - Ryy + Rzz], -1)))
    signs = jnp.sign(jnp.stack(
        [R[:, 2, 1] - R[:, 1, 2], R[:, 0, 2] - R[:, 2, 0], R[:, 1, 0] - R[:, 0, 1]], -1))
    xyz = signs * mags
    w = jnp.sqrt(jnp.maximum(1 + jnp.sum(diag, -1, keepdims=True), 0.0)) / 2.0
    q = jnp.concatenate([xyz, w], -1)
    return _normalize(q)


def cal_orient(Q, src_idx, tgt_idx):
    src_Q = Q[src_idx]
    tgt_Q = Q[tgt_idx]
    R = jnp.matmul(jnp.swapaxes(tgt_Q, -1, -2), src_Q)
    return quaternions(R)


def cal_dist(X, central_X, src_idx, tgt_idx, eps=EPS):
    inter = jnp.sqrt(jnp.sum(
        (X[src_idx][:, None] - X[tgt_idx][:, :, None]) ** 2, -1) + eps)
    inter = rbf(inter).reshape(inter.shape[0], -1)
    keep = np.arange(X.shape[1]) != CENTRAL_IDX
    Xk = X[:, keep]
    intra = jnp.log(jnp.sqrt(jnp.sum((Xk - central_X[:, None]) ** 2, -1) + eps))
    return intra, inter


def cal_direct(Q, X, central_X, src_idx, tgt_idx):
    tgt_Q = Q[tgt_idx]
    inter = _normalize(X[src_idx][:, None] - X[tgt_idx][:, :, None])           # (E,6,6,3)
    inter = jnp.matmul(jnp.swapaxes(tgt_Q[:, None, None], -1, -2), inter[..., None])
    inter = inter.reshape(inter.shape[0], -1)                                  # (E,108)
    keep = np.arange(X.shape[1]) != CENTRAL_IDX
    Xk = X[:, keep]
    intra = _normalize(Xk - central_X[:, None])                                # (N,5,3)
    intra = jnp.matmul(jnp.swapaxes(Q[:, None], -1, -2), intra[..., None])
    intra = intra.reshape(intra.shape[0], -1)                                  # (N,15)
    return intra, inter


# ----------------------------------------------------------------------------
# Full forward
# ----------------------------------------------------------------------------
@jax.jit
def featurizer_forward(prepped, batch, coords, central_coords, edge_index):
    src_idx, tgt_idx = edge_index[0], edge_index[1]

    dihedral = cal_dihedral(coords, batch)                    # (N, 12)
    angle = cal_angle(coords, batch)                          # (N, 12)
    Q = cal_local_system(central_coords, batch)               # (N, 3, 3)
    orient = cal_orient(Q, src_idx, tgt_idx)                  # (E, 4)
    intra_dist, inter_dist = cal_dist(coords, central_coords, src_idx, tgt_idx)
    intra_direct, inter_direct = cal_direct(Q, coords, central_coords, src_idx, tgt_idx)

    n_res = coords.shape[0]
    n_edges = src_idx.shape[0]
    feat_dtype = jnp.bfloat16   # halve HBM traffic into the embed kernel
    # TODO(synk): on v7x, stream edge features as fp8 (e4m3) for the fp8 MXU path.

    # Lane-dim padding built directly into the concatenate (no extra pad op).
    h_V = jnp.concatenate(
        [dihedral, angle, intra_dist, intra_direct,
         jnp.zeros((n_res, NODE_PAD - NODE_IN), dihedral.dtype)], -1
    ).astype(feat_dtype)                                      # (N, 64)
    h_E = jnp.concatenate(
        [orient, inter_dist, inter_direct,
         jnp.zeros((n_edges, EDGE_PAD - EDGE_IN), orient.dtype)], -1
    ).astype(feat_dtype)                                      # (E, 704)

    # TODO(synk): fuse the edge-feature gather/RBF/rotation into the Pallas
    # kernel (PrefetchScalarGridSpec + row gathers) so (E, 688) never hits HBM.
    h_V = embed_norm(h_V, prepped["node"])
    h_E = embed_norm(h_E, prepped["edge"])
    return h_V, h_E


def init_params(key, hidden=HIDDEN):
    k1, k2, k3, k4 = jax.random.split(key, 4)
    return {
        "node_w": jax.random.normal(k1, (NODE_IN, hidden), jnp.float32) * 0.05,
        "node_b": jax.random.normal(k2, (hidden,), jnp.float32) * 0.01,
        "node_gamma": jnp.ones((hidden,), jnp.float32),
        "node_beta": jnp.zeros((hidden,), jnp.float32),
        "edge_w": jax.random.normal(k3, (EDGE_IN, hidden), jnp.float32) * 0.05,
        "edge_b": jax.random.normal(k4, (hidden,), jnp.float32) * 0.01,
        "edge_gamma": jnp.ones((hidden,), jnp.float32),
        "edge_beta": jnp.zeros((hidden,), jnp.float32),
    }


def prepare_params(params, hidden=HIDDEN):
    """One-time preprocessing of the embedding weights (kept out of the jit)."""
    return {
        "node": prepare_embed_weights(params["node_w"], params["node_b"],
                                      params["node_gamma"], params["node_beta"],
                                      NODE_PAD, hidden),
        "edge": prepare_embed_weights(params["edge_w"], params["edge_b"],
                                      params["edge_gamma"], params["edge_beta"],
                                      EDGE_PAD, hidden),
    }


def _reference_embed_norm(x_raw, w, b, gamma, beta):
    # Same bf16 quantization of activations AND weights as the Pallas path,
    # then plain-JAX nan_to_num + Linear + LayerNorm with f32 math.
    x = x_raw.astype(jnp.bfloat16)
    x = jnp.where(jnp.isnan(x), 0, x).astype(jnp.float32)
    wq = w.astype(jnp.bfloat16).astype(jnp.float32)
    h = x @ wq + b
    mu = h.mean(-1, keepdims=True)
    var = ((h - mu) ** 2).mean(-1, keepdims=True)
    return (h - mu) / jnp.sqrt(var + 1e-5) * gamma + beta


if __name__ == "__main__":
    key = jax.random.PRNGKey(0)
    k_coord, k_src, k_tgt, k_param = jax.random.split(key, 4)

    n_res, n_edges = 64, 256
    coords = jax.random.normal(k_coord, (n_res, N_ATOMS, 3), jnp.float32) \
        + jnp.arange(n_res, dtype=jnp.float32)[:, None, None] * 0.5
    central_coords = coords[:, CENTRAL_IDX]
    batch = jnp.concatenate([jnp.zeros(n_res // 2, jnp.int32),
                             jnp.ones(n_res - n_res // 2, jnp.int32)])
    src_idx = jax.random.randint(k_src, (n_edges,), 0, n_res, jnp.int32)
    tgt_idx = jax.random.randint(k_tgt, (n_edges,), 0, n_res, jnp.int32)
    edge_index = jnp.stack([src_idx, tgt_idx])

    params = init_params(k_param)
    prepped = prepare_params(params)

    h_V, h_E = featurizer_forward(prepped, batch, coords, central_coords, edge_index)
    jax.block_until_ready((h_V, h_E))
    assert h_V.shape == (n_res, HIDDEN) and h_E.shape == (n_edges, HIDDEN)

    # Sanity check the fused Pallas kernel against a plain-JAX reference of the
    # nan_to_num + Linear + LayerNorm path (same bf16 quantization).
    dihedral = cal_dihedral(coords, batch)
    angle = cal_angle(coords, batch)
    Q = cal_local_system(central_coords, batch)
    orient = cal_orient(Q, src_idx, tgt_idx)
    intra_dist, inter_dist = cal_dist(coords, central_coords, src_idx, tgt_idx)
    intra_direct, inter_direct = cal_direct(Q, coords, central_coords, src_idx, tgt_idx)
    hV_raw = jnp.concatenate([dihedral, angle, intra_dist, intra_direct], -1)
    hE_raw = jnp.concatenate([orient, inter_dist, inter_direct], -1)
    assert hV_raw.shape == (n_res, NODE_IN) and hE_raw.shape == (n_edges, EDGE_IN)

    ref_V = _reference_embed_norm(hV_raw, params["node_w"], params["node_b"],
                                  params["node_gamma"], params["node_beta"])
    ref_E = _reference_embed_norm(hE_raw, params["edge_w"], params["edge_b"],
                                  params["edge_gamma"], params["edge_beta"])
    assert jnp.allclose(h_V, ref_V, atol=1e-2, rtol=1e-2)
    assert jnp.allclose(h_E, ref_E, atol=1e-2, rtol=1e-2)

    print("KERNEL_OK")
</pallas_src>

<mosaic_0001>
module attributes {stable_mosaic.version = 11 : i64} {
  func.func @embed_norm_kernel(%arg0: i32, %arg1: memref<16x256xbf16, #tpu.memory_space<vmem>>, %arg2: memref<256x128xbf16, #tpu.memory_space<vmem>>, %arg3: memref<128x128xf32, #tpu.memory_space<vmem>>, %arg4: memref<8x128xf32, #tpu.memory_space<vmem>>, %arg5: memref<16x128xf32, #tpu.memory_space<vmem>>) attributes {dimension_semantics = [#tpu.dimension_semantics<parallel>], iteration_bounds = array<i64: 1>, scalar_prefetch = 0 : i64, scratch_operands = 0 : i64, tpu.core_type = #tpu.core_type<tc>, window_params = [{transform_indices = @transform_0, window_bounds = array<i64: 16, 256>}, {pipeline_mode = #tpu.pipeline_mode<synchronous>, transform_indices = @transform_1, window_bounds = array<i64: 256, 128>}, {pipeline_mode = #tpu.pipeline_mode<synchronous>, transform_indices = @transform_2, window_bounds = array<i64: 128, 128>}, {pipeline_mode = #tpu.pipeline_mode<synchronous>, transform_indices = @transform_3, window_bounds = array<i64: 8, 128>}, {transform_indices = @transform_4, window_bounds = array<i64: 16, 128>}]} {
    %c0 = arith.constant 0 : index
    %c0_0 = arith.constant 0 : index
    %0 = vector.load %arg1[%c0, %c0_0] : memref<16x256xbf16, #tpu.memory_space<vmem>>, vector<16x256xbf16>
    %1 = arith.cmpf one, %0, %0 : vector<16x256xbf16>
    %cst = arith.constant 0.000000e+00 : bf16
    %2 = vector.broadcast %cst : bf16 to vector<16x256xbf16>
    %3 = arith.select %1, %2, %0 : vector<16x256xi1>, vector<16x256xbf16>
    %c0_1 = arith.constant 0 : index
    %c0_2 = arith.constant 0 : index
    %4 = vector.load %arg4[%c0_1, %c0_2] : memref<8x128xf32, #tpu.memory_space<vmem>>, vector<8x128xf32>
    %c0_3 = arith.constant 0 : index
    %c0_4 = arith.constant 0 : index
    %5 = vector.load %arg2[%c0_3, %c0_4] : memref<256x128xbf16, #tpu.memory_space<vmem>>, vector<256x128xbf16>
    %cst_5 = arith.constant dense<0.000000e+00> : vector<16x128xf32>
    %6 = tpu.matmul %3, %5, %cst_5 {dimension_numbers = #tpu.dot_dimension_numbers<[1], [0], [0], [1], [0, 0, 1, 1], [], []>} : vector<16x256xbf16>, vector<256x128xbf16>, vector<16x128xf32> -> vector<16x128xf32>
    %7 = vector.extract_strided_slice %4 {offsets = [0, 0], sizes = [1, 128], strides = [1, 1]} : vector<8x128xf32> to vector<1x128xf32>
    %8 = vector.broadcast %7 : vector<1x128xf32> to vector<16x128xf32>
    %9 = arith.addf %6, %8 : vector<16x128xf32>
    %c0_6 = arith.constant 0 : index
    %c0_7 = arith.constant 0 : index
    %10 = vector.load %arg3[%c0_6, %c0_7] : memref<128x128xf32, #tpu.memory_space<vmem>>, vector<128x128xf32>
    %cst_8 = arith.constant dense<0.000000e+00> : vector<16x128xf32>
    %11 = tpu.matmul %9, %10, %cst_8 {dimension_numbers = #tpu.dot_dimension_numbers<[1], [0], [0], [1], [0, 0, 1, 1], [], []>} : vector<16x128xf32>, vector<128x128xf32>, vector<16x128xf32> -> vector<16x128xf32>
    %12 = arith.mulf %9, %9 : vector<16x128xf32>
    %cst_9 = arith.constant dense<0.000000e+00> : vector<16x128xf32>
    %13 = tpu.matmul %12, %10, %cst_9 {dimension_numbers = #tpu.dot_dimension_numbers<[1], [0], [0], [1], [0, 0, 1, 1], [], []>} : vector<16x128xf32>, vector<128x128xf32>, vector<16x128xf32> -> vector<16x128xf32>
    %14 = arith.mulf %11, %11 : vector<16x128xf32>
    %15 = arith.subf %13, %14 : vector<16x128xf32>
    %16 = arith.subf %9, %11 : vector<16x128xf32>
    %cst_10 = arith.constant 9.99999974E-6 : f32
    %17 = vector.broadcast %cst_10 : f32 to vector<16x128xf32>
    %18 = arith.addf %15, %17 : vector<16x128xf32>
    %19 = math.rsqrt %18 : vector<16x128xf32>
    %20 = arith.mulf %16, %19 : vector<16x128xf32>
    %21 = vector.extract_strided_slice %4 {offsets = [1, 0], sizes = [1, 128], strides = [1, 1]} : vector<8x128xf32> to vector<1x128xf32>
    %22 = vector.broadcast %21 : vector<1x128xf32> to vector<16x128xf32>
    %23 = arith.mulf %20, %22 : vector<16x128xf32>
    %24 = vector.extract_strided_slice %4 {offsets = [2, 0], sizes = [1, 128], strides = [1, 1]} : vector<8x128xf32> to vector<1x128xf32>
    %25 = vector.broadcast %24 : vector<1x128xf32> to vector<16x128xf32>
    %26 = arith.addf %23, %25 : vector<16x128xf32>
    %c0_11 = arith.constant 0 : index
    %c0_12 = arith.constant 0 : index
    %27 = vector.load %arg5[%c0_11, %c0_12] : memref<16x128xf32, #tpu.memory_space<vmem>>, vector<16x128xf32>
    tpu.vector_store %arg5[%c0_11, %c0_12], %26 {strides = array<i32>} : memref<16x128xf32, #tpu.memory_space<vmem>>, vector<16x128xf32>,
    return
  }
  func.func @transform_0(%arg0: i32) -> (i32, i32) {
    %c0_i32 = arith.constant 0 : i32
    %c0_i32_0 = arith.constant 0 : i32
    return %arg0, %c0_i32 : i32, i32
  }
  func.func @transform_1(%arg0: i32) -> (i32, i32) {
    %c0_i32 = arith.constant 0 : i32
    %c0_i32_0 = arith.constant 0 : i32
    %c0_i32_1 = arith.constant 0 : i32
    return %c0_i32, %c0_i32_0 : i32, i32
  }
  func.func @transform_2(%arg0: i32) -> (i32, i32) {
    %c0_i32 = arith.constant 0 : i32
    %c0_i32_0 = arith.constant 0 : i32
    %c0_i32_1 = arith.constant 0 : i32
    return %c0_i32, %c0_i32_0 : i32, i32
  }
  func.func @transform_3(%arg0: i32) -> (i32, i32) {
    %c0_i32 = arith.constant 0 : i32
    %c0_i32_0 = arith.constant 0 : i32
    %c0_i32_1 = arith.constant 0 : i32
    return %c0_i32, %c0_i32_0 : i32, i32
  }
  func.func @transform_4(%arg0: i32) -> (i32, i32) {
    %c0_i32 = arith.constant 0 : i32
    %c0_i32_0 = arith.constant 0 : i32
    return %arg0, %c0_i32 : i32, i32
  }
}

module attributes {stable_mosaic.version = 11 : i64} {
  func.func @embed_norm_kernel(%arg0: i32, %arg1: memref<64x2816xbf16, #tpu.memory_space<vmem>>, %arg2: memref<2816x128xbf16, #tpu.memory_space<vmem>>, %arg3: memref<128x128xf32, #tpu.memory_space<vmem>>, %arg4: memref<8x128xf32, #tpu.memory_space<vmem>>, %arg5: memref<64x128xf32, #tpu.memory_space<vmem>>) attributes {dimension_semantics = [#tpu.dimension_semantics<parallel>], iteration_bounds = array<i64: 1>, scalar_prefetch = 0 : i64, scratch_operands = 0 : i64, tpu.core_type = #tpu.core_type<tc>, window_params = [{transform_indices = @transform_0, window_bounds = array<i64: 64, 2816>}, {pipeline_mode = #tpu.pipeline_mode<synchronous>, transform_indices = @transform_1, window_bounds = array<i64: 2816, 128>}, {pipeline_mode = #tpu.pipeline_mode<synchronous>, transform_indices = @transform_2, window_bounds = array<i64: 128, 128>}, {pipeline_mode = #tpu.pipeline_mode<synchronous>, transform_indices = @transform_3, window_bounds = array<i64: 8, 128>}, {transform_indices = @transform_4, window_bounds = array<i64: 64, 128>}]} {
    %c0 = arith.constant 0 : index
    %c0_0 = arith.constant 0 : index
    %0 = vector.load %arg1[%c0, %c0_0] : memref<64x2816xbf16, #tpu.memory_space<vmem>>, vector<64x2816xbf16>
    %1 = arith.cmpf one, %0, %0 : vector<64x2816xbf16>
    %cst = arith.constant 0.000000e+00 : bf16
    %2 = vector.broadcast %cst : bf16 to vector<64x2816xbf16>
    %3 = arith.select %1, %2, %0 : vector<64x2816xi1>, vector<64x2816xbf16>
    %c0_1 = arith.constant 0 : index
    %c0_2 = arith.constant 0 : index
    %4 = vector.load %arg4[%c0_1, %c0_2] : memref<8x128xf32, #tpu.memory_space<vmem>>, vector<8x128xf32>
    %c0_3 = arith.constant 0 : index
    %c0_4 = arith.constant 0 : index
    %5 = vector.load %arg2[%c0_3, %c0_4] : memref<2816x128xbf16, #tpu.memory_space<vmem>>, vector<2816x128xbf16>
    %cst_5 = arith.constant dense<0.000000e+00> : vector<64x128xf32>
    %6 = tpu.matmul %3, %5, %cst_5 {dimension_numbers = #tpu.dot_dimension_numbers<[1], [0], [0], [1], [0, 0, 1, 1], [], []>} : vector<64x2816xbf16>, vector<2816x128xbf16>, vector<64x128xf32> -> vector<64x128xf32>
    %7 = vector.extract_strided_slice %4 {offsets = [0, 0], sizes = [1, 128], strides = [1, 1]} : vector<8x128xf32> to vector<1x128xf32>
    %8 = vector.broadcast %7 : vector<1x128xf32> to vector<64x128xf32>
    %9 = arith.addf %6, %8 : vector<64x128xf32>
    %c0_6 = arith.constant 0 : index
    %c0_7 = arith.constant 0 : index
    %10 = vector.load %arg3[%c0_6, %c0_7] : memref<128x128xf32, #tpu.memory_space<vmem>>, vector<128x128xf32>
    %cst_8 = arith.constant dense<0.000000e+00> : vector<64x128xf32>
    %11 = tpu.matmul %9, %10, %cst_8 {dimension_numbers = #tpu.dot_dimension_numbers<[1], [0], [0], [1], [0, 0, 1, 1], [], []>} : vector<64x128xf32>, vector<128x128xf32>, vector<64x128xf32> -> vector<64x128xf32>
    %12 = arith.mulf %9, %9 : vector<64x128xf32>
    %cst_9 = arith.constant dense<0.000000e+00> : vector<64x128xf32>
    %13 = tpu.matmul %12, %10, %cst_9 {dimension_numbers = #tpu.dot_dimension_numbers<[1], [0], [0], [1], [0, 0, 1, 1], [], []>} : vector<64x128xf32>, vector<128x128xf32>, vector<64x128xf32> -> vector<64x128xf32>
    %14 = arith.mulf %11, %11 : vector<64x128xf32>
    %15 = arith.subf %13, %14 : vector<64x128xf32>
    %16 = arith.subf %9, %11 : vector<64x128xf32>
    %cst_10 = arith.constant 9.99999974E-6 : f32
    %17 = vector.broadcast %cst_10 : f32 to vector<64x128xf32>
    %18 = arith.addf %15, %17 : vector<64x128xf32>
    %19 = math.rsqrt %18 : vector<64x128xf32>
    %20 = arith.mulf %16, %19 : vector<64x128xf32>
    %21 = vector.extract_strided_slice %4 {offsets = [1, 0], sizes = [1, 128], strides = [1, 1]} : vector<8x128xf32> to vector<1x128xf32>
    %22 = vector.broadcast %21 : vector<1x128xf32> to vector<64x128xf32>
    %23 = arith.mulf %20, %22 : vector<64x128xf32>
    %24 = vector.extract_strided_slice %4 {offsets = [2, 0], sizes = [1, 128], strides = [1, 1]} : vector<8x128xf32> to vector<1x128xf32>
    %25 = vector.broadcast %24 : vector<1x128xf32> to vector<64x128xf32>
    %26 = arith.addf %23, %25 : vector<64x128xf32>
    %c0_11 = arith.constant 0 : index
    %c0_12 = arith.constant 0 : index
    %27 = vector.load %arg5[%c0_11, %c0_12] : memref<64x128xf32, #tpu.memory_space<vmem>>, vector<64x128xf32>
    tpu.vector_store %arg5[%c0_11, %c0_12], %26 {strides = array<i32>} : memref<64x128xf32, #tpu.memory_space<vmem>>, vector<64x128xf32>,
    return
  }
  func.func @transform_0(%arg0: i32) -> (i32, i32) {
    %c0_i32 = arith.constant 0 : i32
    %c0_i32_0 = arith.constant 0 : i32
    return %arg0, %c0_i32 : i32, i32
  }
  func.func @transform_1(%arg0: i32) -> (i32, i32) {
    %c0_i32 = arith.constant 0 : i32
    %c0_i32_0 = arith.constant 0 : i32
    %c0_i32_1 = arith.constant 0 : i32
    return %c0_i32, %c0_i32_0 : i32, i32
  }
  func.func @transform_2(%arg0: i32) -> (i32, i32) {
    %c0_i32 = arith.constant 0 : i32
    %c0_i32_0 = arith.constant 0 : i32
    %c0_i32_1 = arith.constant 0 : i32
    return %c0_i32, %c0_i32_0 : i32, i32
  }
  func.func @transform_3(%arg0: i32) -> (i32, i32) {
    %c0_i32 = arith.constant 0 : i32
    %c0_i32_0 = arith.constant 0 : i32
    %c0_i32_1 = arith.constant 0 : i32
    return %c0_i32, %c0_i32_0 : i32, i32
  }
  func.func @transform_4(%arg0: i32) -> (i32, i32) {
    %c0_i32 = arith.constant 0 : i32
    %c0_i32_0 = arith.constant 0 : i32
    return %arg0, %c0_i32 : i32, i32
  }
}

</mosaic_0001>

<llo_original>
// kernel: featurizer_forward.2
$region0: #{featurizer_forward.2}
  #allocation0 [shape = 'u32[]', space=smem, size = 0x4, offset = 0x4, fixed_abs, tag = 'smem constant byte address 0x4 - core index']
  #allocation1 [shape = 'u32[144,128]{1,0:T(1,128)}', space=vmem, size = 0x12000, scoped, tag = 'internal scratch']
  %s0 = inlined_call_operand.vmem [shape: bf16[16,256], index: 0, kind: input, shape index: {}]
  %s1 = inlined_call_operand.vmem [shape: bf16[256,128], index: 1, kind: input, shape index: {}]
  %s2 = inlined_call_operand.vmem [shape: f32[128,128], index: 2, kind: input, shape index: {}]
  %s3 = inlined_call_operand.vmem [shape: f32[8,128], index: 3, kind: input, shape index: {}]
  %s4 = inlined_call_operand.vmem [shape: f32[16,128], index: 4, kind: output, shape index: {}]
  %s5 = sld [smem:[#allocation0]]
  $region26: #{featurizer_forward.2} parent=0
    _
  %s7 = ssub.s32 1, %s5
  %s8 = scalar_select 0, %s7, %s5
  // Predicated region
  $region2: #{featurizer_forward.2} parent=0 // pred_check
    _
  $region3: #{featurizer_forward.2} parent=0 // pred_check_branch
    %10 = sbr.rel (0) target = $region5
  $region4: #{featurizer_forward.2} parent=0 // pred_region
    _
  $region5: #{featurizer_forward.2} parent=0 // pred_fallthru
    _
  // Predicated region
  $region6: #{featurizer_forward.2} parent=0 // pred_check
    _
  $region7: #{featurizer_forward.2} parent=0 // pred_check_branch
    %12 = sbr.rel (0) target = $region9
  $region8: #{featurizer_forward.2} parent=0 // pred_region
    _
  $region9: #{featurizer_forward.2} parent=0 // pred_fallthru
    _
  // Predicated region
  $region10: #{featurizer_forward.2} parent=0 // pred_check
    _
  $region11: #{featurizer_forward.2} parent=0 // pred_check_branch
    %14 = sbr.rel (0) target = $region13
  $region12: #{featurizer_forward.2} parent=0 // pred_region
    _
  $region13: #{featurizer_forward.2} parent=0 // pred_fallthru
    _
  // Predicated region
  $region14: #{featurizer_forward.2} parent=0 // pred_check
    _
  $region15: #{featurizer_forward.2} parent=0 // pred_check_branch
    %16 = sbr.rel (0) target = $region17
  $region16: #{featurizer_forward.2} parent=0 // pred_region
    _
  $region17: #{featurizer_forward.2} parent=0 // pred_fallthru
    _
  %v18 = vld [vmem:[%s0] sm:$0xff]
  %v19 = vld [vmem:[%s0 + $0x8] sm:$0xff]
  %vm20 = vcmp.ne.bf16.partialorder %v18, %v18
  %vm21 = vcmp.ne.bf16.partialorder %v19, %v19
  %v22 = vsel %vm20, 0, %v18
  %v23 = vsel %vm21, 0, %v19
  %v24 = vld [vmem:[%s3] sm:$0xff]
  %v25 = vld [vmem:[%s1] sm:$0xf]
  %v26 = vld [vmem:[%s1 + $0x4] sm:$0xf]
  %v27 = vld [vmem:[%s1 + $0x8] sm:$0xf]
  %v28 = vld [vmem:[%s1 + $0xc] sm:$0xf]
  %v29 = vld [vmem:[%s1 + $0x10] sm:$0xf]
  %v30 = vld [vmem:[%s1 + $0x14] sm:$0xf]
  %v31 = vld [vmem:[%s1 + $0x18] sm:$0xf]
  %v32 = vld [vmem:[%s1 + $0x1c] sm:$0xf]
  %v33 = vld [vmem:[%s1 + $0x20] sm:$0xf]
  %v34 = vld [vmem:[%s1 + $0x24] sm:$0xf]
  %v35 = vld [vmem:[%s1 + $0x28] sm:$0xf]
  %v36 = vld [vmem:[%s1 + $0x2c] sm:$0xf]
  %v37 = vld [vmem:[%s1 + $0x30] sm:$0xf]
  %v38 = vld [vmem:[%s1 + $0x34] sm:$0xf]
  %v39 = vld [vmem:[%s1 + $0x38] sm:$0xf]
  %v40 = vld [vmem:[%s1 + $0x3c] sm:$0xf]
  %v41 = vld [vmem:[%s1 + $0x40] sm:$0xf]
  %v42 = vld [vmem:[%s1 + $0x44] sm:$0xf]
  %v43 = vld [vmem:[%s1 + $0x48] sm:$0xf]
  %v44 = vld [vmem:[%s1 + $0x4c] sm:$0xf]
  %v45 = vld [vmem:[%s1 + $0x50] sm:$0xf]
  %v46 = vld [vmem:[%s1 + $0x54] sm:$0xf]
  %v47 = vld [vmem:[%s1 + $0x58] sm:$0xf]
  %v48 = vld [vmem:[%s1 + $0x5c] sm:$0xf]
  %v49 = vld [vmem:[%s1 + $0x60] sm:$0xf]
  %v50 = vld [vmem:[%s1 + $0x64] sm:$0xf]
  %v51 = vld [vmem:[%s1 + $0x68] sm:$0xf]
  %v52 = vld [vmem:[%s1 + $0x6c] sm:$0xf]
  %v53 = vld [vmem:[%s1 + $0x70] sm:$0xf]
  %v54 = vld [vmem:[%s1 + $0x74] sm:$0xf]
  %v55 = vld [vmem:[%s1 + $0x78] sm:$0xf]
  %v56 = vld [vmem:[%s1 + $0x7c] sm:$0xf]
  %v57 = vlaneseq
  %v58 = vshrl.u32 %v57, 7
  %v59 = vsub.s32 0, %v58
  %v60 = vrot.slane %v24, %v59
  %v63 = vunpack.c.l.b16 %v22
  %v64 = vunpack.c.h.b16 %v22
  %v65 = vunpack.c.l.b16 %v23
  %v66 = vunpack.c.h.b16 %v23
  %v67 = vpack.c.b16 %v65, %v63
  %v68 = vpack.c.b16 %v66, %v64
  %v103 = vunpack.c.l.b16 %v25
  %v104 = vunpack.c.l.b16 %v26
  %v105 = vunpack.c.l.b16 %v27
  %v106 = vunpack.c.l.b16 %v28
  %v107 = vunpack.c.l.b16 %v29
  %v108 = vunpack.c.l.b16 %v30
  %v109 = vunpack.c.l.b16 %v31
  %v110 = vunpack.c.l.b16 %v32
  %v111 = vunpack.c.l.b16 %v33
  %v112 = vunpack.c.l.b16 %v34
  %v113 = vunpack.c.l.b16 %v35
  %v114 = vunpack.c.l.b16 %v36
  %v115 = vunpack.c.l.b16 %v37
  %v116 = vunpack.c.l.b16 %v38
  %v117 = vunpack.c.l.b16 %v39
  %v118 = vunpack.c.l.b16 %v40
  %v119 = vunpack.c.l.b16 %v41
  %v120 = vunpack.c.l.b16 %v42
  %v121 = vunpack.c.l.b16 %v43
  %v122 = vunpack.c.l.b16 %v44
  %v123 = vunpack.c.l.b16 %v45
  %v124 = vunpack.c.l.b16 %v46
  %v125 = vunpack.c.l.b16 %v47
  %v126 = vunpack.c.l.b16 %v48
  %v127 = vunpack.c.l.b16 %v49
  %v128 = vunpack.c.l.b16 %v50
  %v129 = vunpack.c.l.b16 %v51
  %v130 = vunpack.c.l.b16 %v52
  %v131 = vunpack.c.l.b16 %v53
  %v132 = vunpack.c.l.b16 %v54
  %v133 = vunpack.c.l.b16 %v55
  %v134 = vunpack.c.l.b16 %v56
  %v135 = vpack.c.b16 %v104, %v103
  %v136 = vpack.c.b16 %v106, %v105
  %v137 = vpack.c.b16 %v108, %v107
  %v138 = vpack.c.b16 %v110, %v109
  %v139 = vpack.c.b16 %v112, %v111
  %v140 = vpack.c.b16 %v114, %v113
  %v141 = vpack.c.b16 %v116, %v115
  %v142 = vpack.c.b16 %v118, %v117
  %v143 = vpack.c.b16 %v120, %v119
  %v144 = vpack.c.b16 %v122, %v121
  %v145 = vpack.c.b16 %v124, %v123
  %v146 = vpack.c.b16 %v126, %v125
  %v147 = vpack.c.b16 %v128, %v127
  %v148 = vpack.c.b16 %v130, %v129
  %v149 = vpack.c.b16 %v132, %v131
  %v150 = vpack.c.b16 %v134, %v133
  %167 = vmatprep.subr.bf16.mxu0 0
  %168 = vmatpush1.bf16.msra.mxu0 %v135
  %169 = vmatprep.subr.bf16.mxu0 0
  %170 = vmatpush1.bf16.msra.mxu0 %v136
  %171 = vmatprep.subr.bf16.mxu0 0
  %172 = vmatpush1.bf16.msra.mxu0 %v137
  %173 = vmatprep.subr.bf16.mxu0 0
  %174 = vmatpush1.bf16.msra.mxu0 %v138
  %175 = vmatprep.subr.bf16.mxu0 0
  %176 = vmatpush1.bf16.msra.mxu0 %v139
  %177 = vmatprep.subr.bf16.mxu0 0
  %178 = vmatpush1.bf16.msra.mxu0 %v140
  %179 = vmatprep.subr.bf16.mxu0 0
  %180 = vmatpush1.bf16.msra.mxu0 %v141
  %181 = vmatprep.subr.bf16.mxu0 0
  %182 = vmatpush1.bf16.msra.mxu0 %v142
  %183 = vmatprep.subr.bf16.mxu0 0
  %184 = vmatpush1.bf16.msra.mxu0 %v143
  %185 = vmatprep.subr.bf16.mxu0 0
  %186 = vmatpush1.bf16.msra.mxu0 %v144
  %187 = vmatprep.subr.bf16.mxu0 0
  %188 = vmatpush1.bf16.msra.mxu0 %v145
  %189 = vmatprep.subr.bf16.mxu0 0
  %190 = vmatpush1.bf16.msra.mxu0 %v146
  %191 = vmatprep.subr.bf16.mxu0 0
  %192 = vmatpush1.bf16.msra.mxu0 %v147
  %193 = vmatprep.subr.bf16.mxu0 0
  %194 = vmatpush1.bf16.msra.mxu0 %v148
  %195 = vmatprep.subr.bf16.mxu0 0
  %196 = vmatpush1.bf16.msra.mxu0 %v149
  %197 = vmatprep.subr.bf16.mxu0 0
  %198 = vmatpush1.bf16.msra.mxu0 %v150
  %199 = vmatprep.mubr.bf16.mxu0 %v68
  %200 = vmatmul.mubr.bf16.gmra.mrb[0].mxu0 %v67
  %v201 = vpop.f32.mrb[0].mxu0
  %v202 = vadd.f32 %v60, %v201
  %v203 = vpop.f32.mrb[0].mxu0
  %v204 = vpop.f32.mrb[0].mxu0
  %v205 = vadd.f32 %v60, %v204
  %v206 = vpop.f32.mrb[0].mxu0
  %207 = vdwg.mxu0
  %v208 = vld [vmem:[%s2] sm:$0xff]
  %v209 = vld [vmem:[%s2 + $0x8] sm:$0xff]
  %v210 = vld [vmem:[%s2 + $0x10] sm:$0xff]
  %v211 = vld [vmem:[%s2 + $0x18] sm:$0xff]
  %v212 = vld [vmem:[%s2 + $0x20] sm:$0xff]
  %v213 = vld [vmem:[%s2 + $0x28] sm:$0xff]
  %v214 = vld [vmem:[%s2 + $0x30] sm:$0xff]
  %v215 = vld [vmem:[%s2 + $0x38] sm:$0xff]
  %v216 = vld [vmem:[%s2 + $0x40] sm:$0xff]
  %v217 = vld [vmem:[%s2 + $0x48] sm:$0xff]
  %v218 = vld [vmem:[%s2 + $0x50] sm:$0xff]
  %v219 = vld [vmem:[%s2 + $0x58] sm:$0xff]
  %v220 = vld [vmem:[%s2 + $0x60] sm:$0xff]
  %v221 = vld [vmem:[%s2 + $0x68] sm:$0xff]
  %v222 = vld [vmem:[%s2 + $0x70] sm:$0xff]
  %v223 = vld [vmem:[%s2 + $0x78] sm:$0xff]
  %224 = vmatprep.subr.mxu0 0.0
  %225 = vmatpush1.msra.mxu0 %v208
  %226 = vmatprep.subr.mxu0 0.0
  %227 = vmatpush1.msra.mxu0 %v209
  %228 = vmatprep.subr.mxu0 0.0
  %229 = vmatpush1.msra.mxu0 %v210
  %230 = vmatprep.subr.mxu0 0.0
  %231 = vmatpush1.msra.mxu0 %v211
  %232 = vmatprep.subr.mxu0 0.0
  %233 = vmatpush1.msra.mxu0 %v212
  %234 = vmatprep.subr.mxu0 0.0
  %235 = vmatpush1.msra.mxu0 %v213
  %236 = vmatprep.subr.mxu0 0.0
  %237 = vmatpush1.msra.mxu0 %v214
  %238 = vmatprep.subr.mxu0 0.0
  %239 = vmatpush1.msra.mxu0 %v215
  %240 = vmatprep.subr.mxu0 0.0
  %241 = vmatpush1.msra.mxu0 %v216
  %242 = vmatprep.subr.mxu0 0.0
  %243 = vmatpush1.msra.mxu0 %v217
  %244 = vmatprep.subr.mxu0 0.0
  %245 = vmatpush1.msra.mxu0 %v218
  %246 = vmatprep.subr.mxu0 0.0
  %247 = vmatpush1.msra.mxu0 %v219
  %248 = vmatprep.subr.mxu0 0.0
  %249 = vmatpush1.msra.mxu0 %v220
  %250 = vmatprep.subr.mxu0 0.0
  %251 = vmatpush1.msra.mxu0 %v221
  %252 = vmatprep.subr.mxu0 0.0
  %253 = vmatpush1.msra.mxu0 %v222
  %254 = vmatprep.subr.mxu0 0.0
  %255 = vmatpush1.msra.mxu0 %v223
  %256 = vmatprep.subr.mxu0 0.0
  %257 = vmatpush1.msra.mxu0 0.0
  %258 = vmatprep.subr.mxu0 0.0
  %259 = vmatpush1.msra.mxu0 0.0
  %260 = vmatprep.subr.mxu0 0.0
  %261 = vmatpush1.msra.mxu0 0.0
  %262 = vmatprep.subr.mxu0 0.0
  %263 = vmatpush1.msra.mxu0 0.0
  %264 = vmatprep.subr.mxu0 0.0
  %265 = vmatpush1.msra.mxu0 0.0
  %266 = vmatprep.subr.mxu0 0.0
  %267 = vmatpush1.msra.mxu0 0.0
  %268 = vmatprep.subr.mxu0 0.0
  %269 = vmatpush1.msra.mxu0 0.0
  %270 = vmatprep.subr.mxu0 0.0
  %271 = vmatpush1.msra.mxu0 0.0
  %272 = vmatprep.subr.mxu0 0.0
  %273 = vmatpush1.msra.mxu0 0.0
  %274 = vmatprep.subr.mxu0 0.0
  %275 = vmatpush1.msra.mxu0 0.0
  %276 = vmatprep.subr.mxu0 0.0
  %277 = vmatpush1.msra.mxu0 0.0
  %278 = vmatprep.subr.mxu0 0.0
  %279 = vmatpush1.msra.mxu0 0.0
  %280 = vmatprep.subr.mxu0 0.0
  %281 = vmatpush1.msra.mxu0 0.0
  %282 = vmatprep.subr.mxu0 0.0
  %283 = vmatpush1.msra.mxu0 0.0
  %284 = vmatprep.subr.mxu0 0.0
  %285 = vmatpush1.msra.mxu0 0.0
  %286 = vmatprep.subr.mxu0 0.0
  %287 = vmatpush1.msra.mxu0 0.0
  %288 = vmatprep.mubr.f32.mxu0 0.0
  %289 = vmatmul.mubr.f32.gmra.mrb[0].mxu0 %v202
  %v290 = vpop.f32.mrb[0].mxu0
  %v291 = vadd.f32 0.0, %v290
  %v292 = vpop.f32.mrb[0].mxu0
  %293 = vmatprep.mubr.f32.mxu0 0.0
  %294 = vmatmul.mubr.f32.gmra.mrb[0].mxu0 %v205
  %v295 = vpop.f32.mrb[0].mxu0
  %v296 = vadd.f32 0.0, %v295
  %v297 = vpop.f32.mrb[0].mxu0
  %298 = vdwg.mxu0
  %v299 = vmul.f32 %v202, %v202
  %v300 = vmul.f32 %v205, %v205
  %301 = vmatprep.subr.mxu0 0.0
  %302 = vmatpush1.msra.mxu0 %v208
  %303 = vmatprep.subr.mxu0 0.0
  %304 = vmatpush1.msra.mxu0 %v209
  %305 = vmatprep.subr.mxu0 0.0
  %306 = vmatpush1.msra.mxu0 %v210
  %307 = vmatprep.subr.mxu0 0.0
  %308 = vmatpush1.msra.mxu0 %v211
  %309 = vmatprep.subr.mxu0 0.0
  %310 = vmatpush1.msra.mxu0 %v212
  %311 = vmatprep.subr.mxu0 0.0
  %312 = vmatpush1.msra.mxu0 %v213
  %313 = vmatprep.subr.mxu0 0.0
  %314 = vmatpush1.msra.mxu0 %v214
  %315 = vmatprep.subr.mxu0 0.0
  %316 = vmatpush1.msra.mxu0 %v215
  %317 = vmatprep.subr.mxu0 0.0
  %318 = vmatpush1.msra.mxu0 %v216
  %319 = vmatprep.subr.mxu0 0.0
  %320 = vmatpush1.msra.mxu0 %v217
  %321 = vmatprep.subr.mxu0 0.0
  %322 = vmatpush1.msra.mxu0 %v218
  %323 = vmatprep.subr.mxu0 0.0
  %324 = vmatpush1.msra.mxu0 %v219
  %325 = vmatprep.subr.mxu0 0.0
  %326 = vmatpush1.msra.mxu0 %v220
  %327 = vmatprep.subr.mxu0 0.0
  %328 = vmatpush1.msra.mxu0 %v221
  %329 = vmatprep.subr.mxu0 0.0
  %330 = vmatpush1.msra.mxu0 %v222
  %331 = vmatprep.subr.mxu0 0.0
  %332 = vmatpush1.msra.mxu0 %v223
  %333 = vmatprep.subr.mxu0 0.0
  %334 = vmatpush1.msra.mxu0 0.0
  %335 = vmatprep.subr.mxu0 0.0
  %336 = vmatpush1.msra.mxu0 0.0
  %337 = vmatprep.subr.mxu0 0.0
  %338 = vmatpush1.msra.mxu0 0.0
  %339 = vmatprep.subr.mxu0 0.0
  %340 = vmatpush1.msra.mxu0 0.0
  %341 = vmatprep.subr.mxu0 0.0
  %342 = vmatpush1.msra.mxu0 0.0
  %343 = vmatprep.subr.mxu0 0.0
  %344 = vmatpush1.msra.mxu0 0.0
  %345 = vmatprep.subr.mxu0 0.0
  %346 = vmatpush1.msra.mxu0 0.0
  %347 = vmatprep.subr.mxu0 0.0
  %348 = vmatpush1.msra.mxu0 0.0
  %349 = vmatprep.subr.mxu0 0.0
  %350 = vmatpush1.msra.mxu0 0.0
  %351 = vmatprep.subr.mxu0 0.0
  %352 = vmatpush1.msra.mxu0 0.0
  %353 = vmatprep.subr.mxu0 0.0
  %354 = vmatpush1.msra.mxu0 0.0
  %355 = vmatprep.subr.mxu0 0.0
  %356 = vmatpush1.msra.mxu0 0.0
  %357 = vmatprep.subr.mxu0 0.0
  %358 = vmatpush1.msra.mxu0 0.0
  %359 = vmatprep.subr.mxu0 0.0
  %360 = vmatpush1.msra.mxu0 0.0
  %361 = vmatprep.subr.mxu0 0.0
  %362 = vmatpush1.msra.mxu0 0.0
  %363 = vmatprep.subr.mxu0 0.0
  %364 = vmatpush1.msra.mxu0 0.0
  %365 = vmatprep.mubr.f32.mxu0 0.0
  %366 = vmatmul.mubr.f32.gmra.mrb[0].mxu0 %v299
  %v367 = vpop.f32.mrb[0].mxu0
  %v368 = vadd.f32 0.0, %v367
  %v369 = vpop.f32.mrb[0].mxu0
  %370 = vmatprep.mubr.f32.mxu0 0.0
  %371 = vmatmul.mubr.f32.gmra.mrb[0].mxu0 %v300
  %v372 = vpop.f32.mrb[0].mxu0
  %v373 = vadd.f32 0.0, %v372
  %v374 = vpop.f32.mrb[0].mxu0
  %375 = vdwg.mxu0
  %v376 = vmul.f32 %v291, %v291
  %v377 = vmul.f32 %v296, %v296
  %v378 = vsub.f32 %v368, %v376
  %v379 = vsub.f32 %v373, %v377
  %v380 = vsub.f32 %v202, %v291
  %v381 = vsub.f32 %v205, %v296
  %v382 = vadd.f32 %v378, 1e-05
  %v383 = vadd.f32 %v379, 1e-05
  %v384 = vrsqrt.pop %v382
  %v385 = vrsqrt.pop %v383
  %v386 = vmul.f32 %v380, %v384
  %v387 = vmul.f32 %v381, %v385
  %v388 = vlaneseq
  %v389 = vshrl.u32 %v388, 7
  %v390 = vsub.s32 1, %v389
  %v391 = vrot.slane %v24, %v390
  %v392 = vmul.f32 %v386, %v391
  %v393 = vmul.f32 %v387, %v391
  %v394 = vlaneseq
  %v395 = vshrl.u32 %v394, 7
  %v396 = vsub.s32 2, %v395
  %v397 = vrot.slane %v24, %v396
  %v398 = vadd.f32 %v392, %v397
  %v399 = vadd.f32 %v393, %v397
  %400 = vst [vmem:[%s4] sm:$0xff] %v398
  %401 = vst [vmem:[%s4 + $0x8] sm:$0xff] %v399
  // Predicated region
  $region18: #{featurizer_forward.2} parent=0 // pred_check
    _
  $region19: #{featurizer_forward.2} parent=0 // pred_check_branch
    %403 = sbr.rel (0) target = $region21
  $region20: #{featurizer_forward.2} parent=0 // pred_region
    _
  $region21: #{featurizer_forward.2} parent=0 // pred_fallthru
    _
  // Predicated region
  $region22: #{featurizer_forward.2} parent=0 // pred_check
    _
  $region23: #{featurizer_forward.2} parent=0 // pred_check_branch
    %405 = sbr.rel (0) target = $region25
  $region24: #{featurizer_forward.2} parent=0 // pred_region
    _
  $region25: #{featurizer_forward.2} parent=0 // pred_fallthru
    _

// kernel: featurizer_forward.3
$region0: #{featurizer_forward.3}
  #allocation0 [shape = 'u32[]', space=smem, size = 0x4, offset = 0x4, fixed_abs, tag = 'smem constant byte address 0x4 - core index']
  #allocation1 [shape = 'u32[144,128]{1,0:T(1,128)}', space=vmem, size = 0x12000, scoped, tag = 'internal scratch']
  %s0 = inlined_call_operand.vmem [shape: bf16[64,2816], index: 0, kind: input, shape index: {}]
  %s1 = inlined_call_operand.vmem [shape: bf16[2816,128], index: 1, kind: input, shape index: {}]
  %s2 = inlined_call_operand.vmem [shape: f32[128,128], index: 2, kind: input, shape index: {}]
  %s3 = inlined_call_operand.vmem [shape: f32[8,128], index: 3, kind: input, shape index: {}]
  %s4 = inlined_call_operand.vmem [shape: f32[64,128], index: 4, kind: output, shape index: {}]
  %s5 = sld [smem:[#allocation0]]
  $region26: #{featurizer_forward.3} parent=0
    _
  %s7 = ssub.s32 1, %s5
  %s8 = scalar_select 0, %s7, %s5
  // Predicated region
  $region2: #{featurizer_forward.3} parent=0 // pred_check
    _
  $region3: #{featurizer_forward.3} parent=0 // pred_check_branch
    %10 = sbr.rel (0) target = $region5
  $region4: #{featurizer_forward.3} parent=0 // pred_region
    _
  $region5: #{featurizer_forward.3} parent=0 // pred_fallthru
    _
  // Predicated region
  $region6: #{featurizer_forward.3} parent=0 // pred_check
    _
  $region7: #{featurizer_forward.3} parent=0 // pred_check_branch
    %12 = sbr.rel (0) target = $region9
  $region8: #{featurizer_forward.3} parent=0 // pred_region
    _
  $region9: #{featurizer_forward.3} parent=0 // pred_fallthru
    _
  // Predicated region
  $region10: #{featurizer_forward.3} parent=0 // pred_check
    _
  $region11: #{featurizer_forward.3} parent=0 // pred_check_branch
    %14 = sbr.rel (0) target = $region13
  $region12: #{featurizer_forward.3} parent=0 // pred_region
    _
  $region13: #{featurizer_forward.3} parent=0 // pred_fallthru
    _
  // Predicated region
  $region14: #{featurizer_forward.3} parent=0 // pred_check
    _
  $region15: #{featurizer_forward.3} parent=0 // pred_check_branch
    %16 = sbr.rel (0) target = $region17
  $region16: #{featurizer_forward.3} parent=0 // pred_region
    _
  $region17: #{featurizer_forward.3} parent=0 // pred_fallthru
    _
  %v18 = vld [vmem:[%s0] sm:$0xff]
  %v19 = vld [vmem:[%s0 + $0x8] sm:$0xff]
  %v20 = vld [vmem:[%s0 + $0x10] sm:$0xff]
  %v21 = vld [vmem:[%s0 + $0x18] sm:$0xff]
  %v22 = vld [vmem:[%s0 + $0x20] sm:$0xff]
  %v23 = vld [vmem:[%s0 + $0x28] sm:$0xff]
  %v24 = vld [vmem:[%s0 + $0x30] sm:$0xff]
  %v25 = vld [vmem:[%s0 + $0x38] sm:$0xff]
  %v26 = vld [vmem:[%s0 + $0x40] sm:$0xff]
  %v27 = vld [vmem:[%s0 + $0x48] sm:$0xff]
  %v28 = vld [vmem:[%s0 + $0x50] sm:$0xff]
  %v29 = vld [vmem:[%s0 + $0x58] sm:$0xff]
  %v30 = vld [vmem:[%s0 + $0x60] sm:$0xff]
  %v31 = vld [vmem:[%s0 + $0x68] sm:$0xff]
  %v32 = vld [vmem:[%s0 + $0x70] sm:$0xff]
  %v33 = vld [vmem:[%s0 + $0x78] sm:$0xff]
  %v34 = vld [vmem:[%s0 + $0x80] sm:$0xff]
  %v35 = vld [vmem:[%s0 + $0x88] sm:$0xff]
  %v36 = vld [vmem:[%s0 + $0x90] sm:$0xff]
  %v37 = vld [vmem:[%s0 + $0x98] sm:$0xff]
  %v38 = vld [vmem:[%s0 + $0xa0] sm:$0xff]
  %v39 = vld [vmem:[%s0 + $0xa8] sm:$0xff]
  %v40 = vld [vmem:[%s0 + $0xb0] sm:$0xff]
  %v41 = vld [vmem:[%s0 + $0xb8] sm:$0xff]
  %v42 = vld [vmem:[%s0 + $0xc0] sm:$0xff]
  %v43 = vld [vmem:[%s0 + $0xc8] sm:$0xff]
  %v44 = vld [vmem:[%s0 + $0xd0] sm:$0xff]
  %v45 = vld [vmem:[%s0 + $0xd8] sm:$0xff]
  %v46 = vld [vmem:[%s0 + $0xe0] sm:$0xff]
  %v47 = vld [vmem:[%s0 + $0xe8] sm:$0xff]
  %v48 = vld [vmem:[%s0 + $0xf0] sm:$0xff]
  %v49 = vld [vmem:[%s0 + $0xf8] sm:$0xff]
  %v50 = vld [vmem:[%s0 + $0x100] sm:$0xff]
  %v51 = vld [vmem:[%s0 + $0x108] sm:$0xff]
  %v52 = vld [vmem:[%s0 + $0x110] sm:$0xff]
  %v53 = vld [vmem:[%s0 + $0x118] sm:$0xff]
  %v54 = vld [vmem:[%s0 + $0x120] sm:$0xff]
  %v55 = vld [vmem:[%s0 + $0x128] sm:$0xff]
  %v56 = vld [vmem:[%s0 + $0x130] sm:$0xff]
  %v57 = vld [vmem:[%s0 + $0x138] sm:$0xff]
  %v58 = vld [vmem:[%s0 + $0x140] sm:$0xff]
  %v59 = vld [vmem:[%s0 + $0x148] sm:$0xff]
  %v60 = vld [vmem:[%s0 + $0x150] sm:$0xff]
  %v61 = vld [vmem:[%s0 + $0x158] sm:$0xff]
  %v62 = vld [vmem:[%s0 + $0x160] sm:$0xff]
  %v63 = vld [vmem:[%s0 + $0x168] sm:$0xff]
  %v64 = vld [vmem:[%s0 + $0x170] sm:$0xff]
  %v65 = vld [vmem:[%s0 + $0x178] sm:$0xff]
  %v66 = vld [vmem:[%s0 + $0x180] sm:$0xff]
  %v67 = vld [vmem:[%s0 + $0x188] sm:$0xff]
  %v68 = vld [vmem:[%s0 + $0x190] sm:$0xff]
  %v69 = vld [vmem:[%s0 + $0x198] sm:$0xff]
  %v70 = vld [vmem:[%s0 + $0x1a0] sm:$0xff]
  %v71 = vld [vmem:[%s0 + $0x1a8] sm:$0xff]
  %v72 = vld [vmem:[%s0 + $0x1b0] sm:$0xff]
  %v73 = vld [vmem:[%s0 + $0x1b8] sm:$0xff]
  %v74 = vld [vmem:[%s0 + $0x1c0] sm:$0xff]
  %v75 = vld [vmem:[%s0 + $0x1c8] sm:$0xff]
  %v76 = vld [vmem:[%s0 + $0x1d0] sm:$0xff]
  %v77 = vld [vmem:[%s0 + $0x1d8] sm:$0xff]
  %v78 = vld [vmem:[%s0 + $0x1e0] sm:$0xff]
  %v79 = vld [vmem:[%s0 + $0x1e8] sm:$0xff]
  %v80 = vld [vmem:[%s0 + $0x1f0] sm:$0xff]
  %v81 = vld [vmem:[%s0 + $0x1f8] sm:$0xff]
  %v82 = vld [vmem:[%s0 + $0x200] sm:$0xff]
  %v83 = vld [vmem:[%s0 + $0x208] sm:$0xff]
  %v84 = vld [vmem:[%s0 + $0x210] sm:$0xff]
  %v85 = vld [vmem:[%s0 + $0x218] sm:$0xff]
  %v86 = vld [vmem:[%s0 + $0x220] sm:$0xff]
  %v87 = vld [vmem:[%s0 + $0x228] sm:$0xff]
  %v88 = vld [vmem:[%s0 + $0x230] sm:$0xff]
  %v89 = vld [vmem:[%s0 + $0x238] sm:$0xff]
  %v90 = vld [vmem:[%s0 + $0x240] sm:$0xff]
  %v91 = vld [vmem:[%s0 + $0x248] sm:$0xff]
  %v92 = vld [vmem:[%s0 + $0x250] sm:$0xff]
  %v93 = vld [vmem:[%s0 + $0x258] sm:$0xff]
  %v94 = vld [vmem:[%s0 + $0x260] sm:$0xff]
  %v95 = vld [vmem:[%s0 + $0x268] sm:$0xff]
  %v96 = vld [vmem:[%s0 + $0x270] sm:$0xff]
  %v97 = vld [vmem:[%s0 + $0x278] sm:$0xff]
  %v98 = vld [vmem:[%s0 + $0x280] sm:$0xff]
  %v99 = vld [vmem:[%s0 + $0x288] sm:$0xff]
  %v100 = vld [vmem:[%s0 + $0x290] sm:$0xff]
  %v101 = vld [vmem:[%s0 + $0x298] sm:$0xff]
  %v102 = vld [vmem:[%s0 + $0x2a0] sm:$0xff]
  %v103 = vld [vmem:[%s0 + $0x2a8] sm:$0xff]
  %v104 = vld [vmem:[%s0 + $0x2b0] sm:$0xff]
  %v105 = vld [vmem:[%s0 + $0x2b8] sm:$0xff]
  %vm106 = vcmp.ne.bf16.partialorder %v18, %v18
  %vm107 = vcmp.ne.bf16.partialorder %v19, %v19
  %vm108 = vcmp.ne.bf16.partialorder %v20, %v20
  %vm109 = vcmp.ne.bf16.partialorder %v21, %v21
  %vm110 = vcmp.ne.bf16.partialorder %v22, %v22
  %vm111 = vcmp.ne.bf16.partialorder %v23, %v23
  %vm112 = vcmp.ne.bf16.partialorder %v24, %v24
  %vm113 = vcmp.ne.bf16.partialorder %v25, %v25
  %vm114 = vcmp.ne.bf16.partialorder %v26, %v26
  %vm115 = vcmp.ne.bf16.partialorder %v27, %v27
  %vm116 = vcmp.ne.bf16.partialorder %v28, %v28
  %vm117 = vcmp.ne.bf16.partialorder %v29, %v29
  %vm118 = vcmp.ne.bf16.partialorder %v30, %v30
  %vm119 = vcmp.ne.bf16.partialorder %v31, %v31
  %vm120 = vcmp.ne.bf16.partialorder %v32, %v32
  %vm121 = vcmp.ne.bf16.partialorder %v33, %v33
  %vm122 = vcmp.ne.bf16.partialorder %v34, %v34
  %vm123 = vcmp.ne.bf16.partialorder %v35, %v35
  %vm124 = vcmp.ne.bf16.partialorder %v36, %v36
  %vm125 = vcmp.ne.bf16.partialorder %v37, %v37
  %vm126 = vcmp.ne.bf16.partialorder %v38, %v38
  %vm127 = vcmp.ne.bf16.partialorder %v39, %v39
  %vm128 = vcmp.ne.bf16.partialorder %v40, %v40
  %vm129 = vcmp.ne.bf16.partialorder %v41, %v41
  %vm130 = vcmp.ne.bf16.partialorder %v42, %v42
  %vm131 = vcmp.ne.bf16.partialorder %v43, %v43
  %vm132 = vcmp.ne.bf16.partialorder %v44, %v44
  %vm133 = vcmp.ne.bf16.partialorder %v45, %v45
  %vm134 = vcmp.ne.bf16.partialorder %v46, %v46
  %vm135 = vcmp.ne.bf16.partialorder %v47, %v47
  %vm136 = vcmp.ne.bf16.partialorder %v48, %v48
  %vm137 = vcmp.ne.bf16.partialorder %v49, %v49
  %vm138 = vcmp.ne.bf16.partialorder %v50, %v50
  %vm139 = vcmp.ne.bf16.partialorder %v51, %v51
  %vm140 = vcmp.ne.bf16.partialorder %v52, %v52
  %vm141 = vcmp.ne.bf16.partialorder %v53, %v53
  %vm142 = vcmp.ne.bf16.partialorder %v54, %v54
  %vm143 = vcmp.ne.bf16.partialorder %v55, %v55
  %vm144 = vcmp.ne.bf16.partialorder %v56, %v56
  %vm145 = vcmp.ne.bf16.partialorder %v57, %v57
  %vm146 = vcmp.ne.bf16.partialorder %v58, %v58
  %vm147 = vcmp.ne.bf16.partialorder %v59, %v59
  %vm148 = vcmp.ne.bf16.partialorder %v60, %v60
  %vm149 = vcmp.ne.bf16.partialorder %v61, %v61
  %vm150 = vcmp.ne.bf16.partialorder %v62, %v62
  %vm151 = vcmp.ne.bf16.partialorder %v63, %v63
  %vm152 = vcmp.ne.bf16.partialorder %v64, %v64
  %vm153 = vcmp.ne.bf16.partialorder %v65, %v65
  %vm154 = vcmp.ne.bf16.partialorder %v66, %v66
  %vm155 = vcmp.ne.bf16.partialorder %v67, %v67
  %vm156 = vcmp.ne.bf16.partialorder %v68, %v68
  %vm157 = vcmp.ne.bf16.partialorder %v69, %v69
  %vm158 = vcmp.ne.bf16.partialorder %v70, %v70
  %vm159 = vcmp.ne.bf16.partialorder %v71, %v71
  %vm160 = vcmp.ne.bf16.partialorder %v72, %v72
  %vm161 = vcmp.ne.bf16.partialorder %v73, %v73
  %vm162 = vcmp.ne.bf16.partialorder %v74, %v74
  %vm163 = vcmp.ne.bf16.partialorder %v75, %v75
  %vm164 = vcmp.ne.bf16.partialorder %v76, %v76
  %vm165 = vcmp.ne.bf16.partialorder %v77, %v77
  %vm166 = vcmp.ne.bf16.partialorder %v78, %v78
  %vm167 = vcmp.ne.bf16.partialorder %v79, %v79
  %vm168 = vcmp.ne.bf16.partialorder %v80, %v80
  %vm169 = vcmp.ne.bf16.partialorder %v81, %v81
  %vm170 = vcmp.ne.bf16.partialorder %v82, %v82
  %vm171 = vcmp.ne.bf16.partialorder %v83, %v83
  %vm172 = vcmp.ne.bf16.partialorder %v84, %v84
  %vm173 = vcmp.ne.bf16.partialorder %v85, %v85
  %vm174 = vcmp.ne.bf16.partialorder %v86, %v86
  %vm175 = vcmp.ne.bf16.partialorder %v87, %v87
  %vm176 = vcmp.ne.bf16.partialorder %v88, %v88
  %vm177 = vcmp.ne.bf16.partialorder %v89, %v89
  %vm178 = vcmp.ne.bf16.partialorder %v90, %v90
  %vm179 = vcmp.ne.bf16.partialorder %v91, %v91
  %vm180 = vcmp.ne.bf16.partialorder %v92, %v92
  %vm181 = vcmp.ne.bf16.partialorder %v93, %v93
  %vm182 = vcmp.ne.bf16.partialorder %v94, %v94
  %vm183 = vcmp.ne.bf16.partialorder %v95, %v95
  %vm184 = vcmp.ne.bf16.partialorder %v96, %v96
  %vm185 = vcmp.ne.bf16.partialorder %v97, %v97
  %vm186 = vcmp.ne.bf16.partialorder %v98, %v98
  %vm187 = vcmp.ne.bf16.partialorder %v99, %v99
  %vm188 = vcmp.ne.bf16.partialorder %v100, %v100
  %vm189 = vcmp.ne.bf16.partialorder %v101, %v101
  %vm190 = vcmp.ne.bf16.partialorder %v102, %v102
  %vm191 = vcmp.ne.bf16.partialorder %v103, %v103
  %vm192 = vcmp.ne.bf16.partialorder %v104, %v104
  %vm193 = vcmp.ne.bf16.partialorder %v105, %v105
  %v194 = vsel %vm106, 0, %v18
  %v195 = vsel %vm107, 0, %v19
  %v196 = vsel %vm108, 0, %v20
  %v197 = vsel %vm109, 0, %v21
  %v198 = vsel %vm110, 0, %v22
  %v199 = vsel %vm111, 0, %v23
  %v200 = vsel %vm112, 0, %v24
  %v201 = vsel %vm113, 0, %v25
  %v202 = vsel %vm114, 0, %v26
  %v203 = vsel %vm115, 0, %v27
  %v204 = vsel %vm116, 0, %v28
  %v205 = vsel %vm117, 0, %v29
  %v206 = vsel %vm118, 0, %v30
  %v207 = vsel %vm119, 0, %v31
  %v208 = vsel %vm120, 0, %v32
  %v209 = vsel %vm121, 0, %v33
  %v210 = vsel %vm122, 0, %v34
  %v211 = vsel %vm123, 0, %v35
  %v212 = vsel %vm124, 0, %v36
  %v213 = vsel %vm125, 0, %v37
  %v214 = vsel %vm126, 0, %v38
  %v215 = vsel %vm127, 0, %v39
  %v216 = vsel %vm128, 0, %v40
  %v217 = vsel %vm129, 0, %v41
  %v218 = vsel %vm130, 0, %v42
  %v219 = vsel %vm131, 0, %v43
  %v220 = vsel %vm132, 0, %v44
  %v221 = vsel %vm133, 0, %v45
  %v222 = vsel %vm134, 0, %v46
  %v223 = vsel %vm135, 0, %v47
  %v224 = vsel %vm136, 0, %v48
  %v225 = vsel %vm137, 0, %v49
  %v226 = vsel %vm138, 0, %v50
  %v227 = vsel %vm139, 0, %v51
  %v228 = vsel %vm140, 0, %v52
  %v229 = vsel %vm141, 0, %v53
  %v230 = vsel %vm142, 0, %v54
  %v231 = vsel %vm143, 0, %v55
  %v232 = vsel %vm144, 0, %v56
  %v233 = vsel %vm145, 0, %v57
  %v234 = vsel %vm146, 0, %v58
  %v235 = vsel %vm147, 0, %v59
  %v236 = vsel %vm148, 0, %v60
  %v237 = vsel %vm149, 0, %v61
  %v238 = vsel %vm150, 0, %v62
  %v239 = vsel %vm151, 0, %v63
  %v240 = vsel %vm152, 0, %v64
  %v241 = vsel %vm153, 0, %v65
  %v242 = vsel %vm154, 0, %v66
  %v243 = vsel %vm155, 0, %v67
  %v244 = vsel %vm156, 0, %v68
  %v245 = vsel %vm157, 0, %v69
  %v246 = vsel %vm158, 0, %v70
  %v247 = vsel %vm159, 0, %v71
  %v248 = vsel %vm160, 0, %v72
  %v249 = vsel %vm161, 0, %v73
  %v250 = vsel %vm162, 0, %v74
  %v251 = vsel %vm163, 0, %v75
  %v252 = vsel %vm164, 0, %v76
  %v253 = vsel %vm165, 0, %v77
  %v254 = vsel %vm166, 0, %v78
  %v255 = vsel %vm167, 0, %v79
  %v256 = vsel %vm168, 0, %v80
  %v257 = vsel %vm169, 0, %v81
  %v258 = vsel %vm170, 0, %v82
  %v259 = vsel %vm171, 0, %v83
  %v260 = vsel %vm172, 0, %v84
  %v261 = vsel %vm173, 0, %v85
  %v262 = vsel %vm174, 0, %v86
  %v263 = vsel %vm175, 0, %v87
  %v264 = vsel %vm176, 0, %v88
  %v265 = vsel %vm177, 0, %v89
  %v266 = vsel %vm178, 0, %v90
  %v267 = vsel %vm179, 0, %v91
  %v268 = vsel %vm180, 0, %v92
  %v269 = vsel %vm181, 0, %v93
  %v270 = vsel %vm182, 0, %v94
  %v271 = vsel %vm183, 0, %v95
  %v272 = vsel %vm184, 0, %v96
  %v273 = vsel %vm185, 0, %v97
  %v274 = vsel %vm186, 0, %v98
  %v275 = vsel %vm187, 0, %v99
  %v276 = vsel %vm188, 0, %v100
  %v277 = vsel %vm189, 0, %v101
  %v278 = vsel %vm190, 0, %v102
  %v279 = vsel %vm191, 0, %v103
  %v280 = vsel %vm192, 0, %v104
  %v281 = vsel %vm193, 0, %v105
  %v282 = vld [vmem:[%s3] sm:$0xff]
  %v283 = vld [vmem:[%s1] sm:$0xf]
  %v284 = vld [vmem:[%s1 + $0x4] sm:$0xf]
  %v285 = vld [vmem:[%s1 + $0x8] sm:$0xf]
  %v286 = vld [vmem:[%s1 + $0xc] sm:$0xf]
  %v287 = vld [vmem:[%s1 + $0x10] sm:$0xf]
  %v288 = vld [vmem:[%s1 + $0x14] sm:$0xf]
  %v289 = vld [vmem:[%s1 + $0x18] sm:$0xf]
  %v290 = vld [vmem:[%s1 + $0x1c] sm:$0xf]
  %v291 = vld [vmem:[%s1 + $0x20] sm:$0xf]
  %v292 = vld [vmem:[%s1 + $0x24] sm:$0xf]
  %v293 = vld [vmem:[%s1 + $0x28] sm:$0xf]
  %v294 = vld [vmem:[%s1 + $0x2c] sm:$0xf]
  %v295 = vld [vmem:[%s1 + $0x30] sm:$0xf]
  %v296 = vld [vmem:[%s1 + $0x34] sm:$0xf]
  %v297 = vld [vmem:[%s1 + $0x38] sm:$0xf]
  %v298 = vld [vmem:[%s1 + $0x3c] sm:$0xf]
  %v299 = vld [vmem:[%s1 + $0x40] sm:$0xf]
  %v300 = vld [vmem:[%s1 + $0x44] sm:$0xf]
  %v301 = vld [vmem:[%s1 + $0x48] sm:$0xf]
  %v302 = vld [vmem:[%s1 + $0x4c] sm:$0xf]
  %v303 = vld [vmem:[%s1 + $0x50] sm:$0xf]
  %v304 = vld [vmem:[%s1 + $0x54] sm:$0xf]
  %v305 = vld [vmem:[%s1 + $0x58] sm:$0xf]
  %v306 = vld [vmem:[%s1 + $0x5c] sm:$0xf]
  %v307 = vld [vmem:[%s1 + $0x60] sm:$0xf]
  %v308 = vld [vmem:[%s1 + $0x64] sm:$0xf]
  %v309 = vld [vmem:[%s1 + $0x68] sm:$0xf]
  %v310 = vld [vmem:[%s1 + $0x6c] sm:$0xf]
  %v311 = vld [vmem:[%s1 + $0x70] sm:$0xf]
  %v312 = vld [vmem:[%s1 + $0x74] sm:$0xf]
  %v313 = vld [vmem:[%s1 + $0x78] sm:$0xf]
  %v314 = vld [vmem:[%s1 + $0x7c] sm:$0xf]
  %v315 = vld [vmem:[%s1 + $0x80] sm:$0xf]
  %v316 = vld [vmem:[%s1 + $0x84] sm:$0xf]
  %v317 = vld [vmem:[%s1 + $0x88] sm:$0xf]
  %v318 = vld [vmem:[%s1 + $0x8c] sm:$0xf]
  %v319 = vld [vmem:[%s1 + $0x90] sm:$0xf]
  %v320 = vld [vmem:[%s1 + $0x94] sm:$0xf]
  %v321 = vld [vmem:[%s1 + $0x98] sm:$0xf]
  %v322 = vld [vmem:[%s1 + $0x9c] sm:$0xf]
  %v323 = vld [vmem:[%s1 + $0xa0] sm:$0xf]
  %v324 = vld [vmem:[%s1 + $0xa4] sm:$0xf]
  %v325 = vld [vmem:[%s1 + $0xa8] sm:$0xf]
  %v326 = vld [vmem:[%s1 + $0xac] sm:$0xf]
  %v327 = vld [vmem:[%s1 + $0xb0] sm:$0xf]
  %v328 = vld [vmem:[%s1 + $0xb4] sm:$0xf]
  %v329 = vld [vmem:[%s1 + $0xb8] sm:$0xf]
  %v330 = vld [vmem:[%s1 + $0xbc] sm:$0xf]
  %v331 = vld [vmem:[%s1 + $0xc0] sm:$0xf]
  %v332 = vld [vmem:[%s1 + $0xc4] sm:$0xf]
  %v333 = vld [vmem:[%s1 + $0xc8] sm:$0xf]
  %v334 = vld [vmem:[%s1 + $0xcc] sm:$0xf]
  %v335 = vld [vmem:[%s1 + $0xd0] sm:$0xf]
  %v336 = vld [vmem:[%s1 + $0xd4] sm:$0xf]
  %v337 = vld [vmem:[%s1 + $0xd8] sm:$0xf]
  %v338 = vld [vmem:[%s1 + $0xdc] sm:$0xf]
  %v339 = vld [vmem:[%s1 + $0xe0] sm:$0xf]
  %v340 = vld [vmem:[%s1 + $0xe4] sm:$0xf]
  %v341 = vld [vmem:[%s1 + $0xe8] sm:$0xf]
  %v342 = vld [vmem:[%s1 + $0xec] sm:$0xf]
  %v343 = vld [vmem:[%s1 + $0xf0] sm:$0xf]
  %v344 = vld [vmem:[%s1 + $0xf4] sm:$0xf]
  %v345 = vld [vmem:[%s1 + $0xf8] sm:$0xf]
  %v346 = vld [vmem:[%s1 + $0xfc] sm:$0xf]
  %v347 = vld [vmem:[%s1 + $0x100] sm:$0xf]
  %v348 = vld [vmem:[%s1 + $0x104] sm:$0xf]
  %v349 = vld [vmem:[%s1 + $0x108] sm:$0xf]
  %v350 = vld [vmem:[%s1 + $0x10c] sm:$0xf]
  %v351 = vld [vmem:[%s1 + $0x110] sm:$0xf]
  %v352 = vld [vmem:[%s1 + $0x114] sm:$0xf]
  %v353 = vld [vmem:[%s1 + $0x118] sm:$0xf]
  %v354 = vld [vmem:[%s1 + $0x11c] sm:$0xf]
  %v355 = vld [vmem:[%s1 + $0x120] sm:$0xf]
  %v356 = vld [vmem:[%s1 + $0x124] sm:$0xf]
  %v357 = vld [vmem:[%s1 + $0x128] sm:$0xf]
  %v358 = vld [vmem:[%s1 + $0x12c] sm:$0xf]
  %v359 = vld [vmem:[%s1 + $0x130] sm:$0xf]
  %v360 = vld [vmem:[%s1 + $0x134] sm:$0xf]
  %v361 = vld [vmem:[%s1 + $0x138] sm:$0xf]
  %v362 = vld [vmem:[%s1 + $0x13c] sm:$0xf]
  %v363 = vld [vmem:[%s1 + $0x140] sm:$0xf]
  %v364 = vld [vmem:[%s1 + $0x144] sm:$0xf]
  %v365 = vld [vmem:[%s1 + $0x148] sm:$0xf]
  %v366 = vld [vmem:[%s1 + $0x14c] sm:$0xf]
  %v367 = vld [vmem:[%s1 + $0x150] sm:$0xf]
  %v368 = vld [vmem:[%s1 + $0x154] sm:$0xf]
  %v369 = vld [vmem:[%s1 + $0x158] sm:$0xf]
  %v370 = vld [vmem:[%s1 + $0x15c] sm:$0xf]
  %v371 = vld [vmem:[%s1 + $0x160] sm:$0xf]
  %v372 = vld [vmem:[%s1 + $0x164] sm:$0xf]
  %v373 = vld [vmem:[%s1 + $0x168] sm:$0xf]
  %v374 = vld [vmem:[%s1 + $0x16c] sm:$0xf]
  %v375 = vld [vmem:[%s1 + $0x170] sm:$0xf]
  %v376 = vld [vmem:[%s1 + $0x174] sm:$0xf]
  %v377 = vld [vmem:[%s1 + $0x178] sm:$0xf]
  %v378 = vld [vmem:[%s1 + $0x17c] sm:$0xf]
  %v379 = vld [vmem:[%s1 + $0x180] sm:$0xf]
  %v380 = vld [vmem:[%s1 + $0x184] sm:$0xf]
  %v381 = vld [vmem:[%s1 + $0x188] sm:$0xf]
  %v382 = vld [vmem:[%s1 + $0x18c] sm:$0xf]
  %v383 = vld [vmem:[%s1 + $0x190] sm:$0xf]
  %v384 = vld [vmem:[%s1 + $0x194] sm:$0xf]
  %v385 = vld [vmem:[%s1 + $0x198] sm:$0xf]
  %v386 = vld [vmem:[%s1 + $0x19c] sm:$0xf]
  %v387 = vld [vmem:[%s1 + $0x1a0] sm:$0xf]
  %v388 = vld [vmem:[%s1 + $0x1a4] sm:$0xf]
  %v389 = vld [vmem:[%s1 + $0x1a8] sm:$0xf]
  %v390 = vld [vmem:[%s1 + $0x1ac] sm:$0xf]
  %v391 = vld [vmem:[%s1 + $0x1b0] sm:$0xf]
  %v392 = vld [vmem:[%s1 + $0x1b4] sm:$0xf]
  %v393 = vld [vmem:[%s1 + $0x1b8] sm:$0xf]
  %v394 = vld [vmem:[%s1 + $0x1bc] sm:$0xf]
  %v395 = vld [vmem:[%s1 + $0x1c0] sm:$0xf]
  %v396 = vld [vmem:[%s1 + $0x1c4] sm:$0xf]
  %v397 = vld [vmem:[%s1 + $0x1c8] sm:$0xf]
  %v398 = vld [vmem:[%s1 + $0x1cc] sm:$0xf]
  %v399 = vld [vmem:[%s1 + $0x1d0] sm:$0xf]
  %v400 = vld [vmem:[%s1 + $0x1d4] sm:$0xf]
  %v401 = vld [vmem:[%s1 + $0x1d8] sm:$0xf]
  %v402 = vld [vmem:[%s1 + $0x1dc] sm:$0xf]
  %v403 = vld [vmem:[%s1 + $0x1e0] sm:$0xf]
  %v404 = vld [vmem:[%s1 + $0x1e4] sm:$0xf]
  %v405 = vld [vmem:[%s1 + $0x1e8] sm:$0xf]
  %v406 = vld [vmem:[%s1 + $0x1ec] sm:$0xf]
  %v407 = vld [vmem:[%s1 + $0x1f0] sm:$0xf]
  %v408 = vld [vmem:[%s1 + $0x1f4] sm:$0xf]
  %v409 = vld [vmem:[%s1 + $0x1f8] sm:$0xf]
  %v410 = vld [vmem:[%s1 + $0x1fc] sm:$0xf]
  %v411 = vld [vmem:[%s1 + $0x200] sm:$0xf]
  %v412 = vld [vmem:[%s1 + $0x204] sm:$0xf]
  %v413 = vld [vmem:[%s1 + $0x208] sm:$0xf]
  %v414 = vld [vmem:[%s1 + $0x20c] sm:$0xf]
  %v415 = vld [vmem:[%s1 + $0x210] sm:$0xf]
  %v416 = vld [vmem:[%s1 + $0x214] sm:$0xf]
  %v417 = vld [vmem:[%s1 + $0x218] sm:$0xf]
  %v418 = vld [vmem:[%s1 + $0x21c] sm:$0xf]
  %v419 = vld [vmem:[%s1 + $0x220] sm:$0xf]
  %v420 = vld [vmem:[%s1 + $0x224] sm:$0xf]
  %v421 = vld [vmem:[%s1 + $0x228] sm:$0xf]
  %v422 = vld [vmem:[%s1 + $0x22c] sm:$0xf]
  %v423 = vld [vmem:[%s1 + $0x230] sm:$0xf]
  %v424 = vld [vmem:[%s1 + $0x234] sm:$0xf]
  %v425 = vld [vmem:[%s1 + $0x238] sm:$0xf]
  %v426 = vld [vmem:[%s1 + $0x23c] sm:$0xf]
  %v427 = vld [vmem:[%s1 + $0x240] sm:$0xf]
  %v428 = vld [vmem:[%s1 + $0x244] sm:$0xf]
  %v429 = vld [vmem:[%s1 + $0x248] sm:$0xf]
  %v430 = vld [vmem:[%s1 + $0x24c] sm:$0xf]
  %v431 = vld [vmem:[%s1 + $0x250] sm:$0xf]
  %v432 = vld [vmem:[%s1 + $0x254] sm:$0xf]
  %v433 = vld [vmem:[%s1 + $0x258] sm:$0xf]
  %v434 = vld [vmem:[%s1 + $0x25c] sm:$0xf]
  %v435 = vld [vmem:[%s1 + $0x260] sm:$0xf]
  %v436 = vld [vmem:[%s1 + $0x264] sm:$0xf]
  %v437 = vld [vmem:[%s1 + $0x268] sm:$0xf]
  %v438 = vld [vmem:[%s1 + $0x26c] sm:$0xf]
  %v439 = vld [vmem:[%s1 + $0x270] sm:$0xf]
  %v440 = vld [vmem:[%s1 + $0x274] sm:$0xf]
  %v441 = vld [vmem:[%s1 + $0x278] sm:$0xf]
  %v442 = vld [vmem:[%s1 + $0x27c] sm:$0xf]
  %v443 = vld [vmem:[%s1 + $0x280] sm:$0xf]
  %v444 = vld [vmem:[%s1 + $0x284] sm:$0xf]
  %v445 = vld [vmem:[%s1 + $0x288] sm:$0xf]
  %v446 = vld [vmem:[%s1 + $0x28c] sm:$0xf]
  %v447 = vld [vmem:[%s1 + $0x290] sm:$0xf]
  %v448 = vld [vmem:[%s1 + $0x294] sm:$0xf]
  %v449 = vld [vmem:[%s1 + $0x298] sm:$0xf]
  %v450 = vld [vmem:[%s1 + $0x29c] sm:$0xf]
  %v451 = vld [vmem:[%s1 + $0x2a0] sm:$0xf]
  %v452 = vld [vmem:[%s1 + $0x2a4] sm:$0xf]
  %v453 = vld [vmem:[%s1 + $0x2a8] sm:$0xf]
  %v454 = vld [vmem:[%s1 + $0x2ac] sm:$0xf]
  %v455 = vld [vmem:[%s1 + $0x2b0] sm:$0xf]
  %v456 = vld [vmem:[%s1 + $0x2b4] sm:$0xf]
  %v457 = vld [vmem:[%s1 + $0x2b8] sm:$0xf]
  %v458 = vld [vmem:[%s1 + $0x2bc] sm:$0xf]
  %v459 = vld [vmem:[%s1 + $0x2c0] sm:$0xf]
  %v460 = vld [vmem:[%s1 + $0x2c4] sm:$0xf]
  %v461 = vld [vmem:[%s1 + $0x2c8] sm:$0xf]
  %v462 = vld [vmem:[%s1 + $0x2cc] sm:$0xf]
  %v463 = vld [vmem:[%s1 + $0x2d0] sm:$0xf]
  %v464 = vld [vmem:[%s1 + $0x2d4] sm:$0xf]
  %v465 = vld [vmem:[%s1 + $0x2d8] sm:$0xf]
  %v466 = vld [vmem:[%s1 + $0x2dc] sm:$0xf]
  %v467 = vld [vmem:[%s1 + $0x2e0] sm:$0xf]
  %v468 = vld [vmem:[%s1 + $0x2e4] sm:$0xf]
  %v469 = vld [vmem:[%s1 + $0x2e8] sm:$0xf]
  %v470 = vld [vmem:[%s1 + $0x2ec] sm:$0xf]
  %v471 = vld [vmem:[%s1 + $0x2f0] sm:$0xf]
  %v472 = vld [vmem:[%s1 + $0x2f4] sm:$0xf]
  %v473 = vld [vmem:[%s1 + $0x2f8] sm:$0xf]
  %v474 = vld [vmem:[%s1 + $0x2fc] sm:$0xf]
  %v475 = vld [vmem:[%s1 + $0x300] sm:$0xf]
  %v476 = vld [vmem:[%s1 + $0x304] sm:$0xf]
  %v477 = vld [vmem:[%s1 + $0x308] sm:$0xf]
  %v478 = vld [vmem:[%s1 + $0x30c] sm:$0xf]
  %v479 = vld [vmem:[%s1 + $0x310] sm:$0xf]
  %v480 = vld [vmem:[%s1 + $0x314] sm:$0xf]
  %v481 = vld [vmem:[%s1 + $0x318] sm:$0xf]
  %v482 = vld [vmem:[%s1 + $0x31c] sm:$0xf]
  %v483 = vld [vmem:[%s1 + $0x320] sm:$0xf]
  %v484 = vld [vmem:[%s1 + $0x324] sm:$0xf]
  %v485 = vld [vmem:[%s1 + $0x328] sm:$0xf]
  %v486 = vld [vmem:[%s1 + $0x32c] sm:$0xf]
  %v487 = vld [vmem:[%s1 + $0x330] sm:$0xf]
  %v488 = vld [vmem:[%s1 + $0x334] sm:$0xf]
  %v489 = vld [vmem:[%s1 + $0x338] sm:$0xf]
  %v490 = vld [vmem:[%s1 + $0x33c] sm:$0xf]
  %v491 = vld [vmem:[%s1 + $0x340] sm:$0xf]
  %v492 = vld [vmem:[%s1 + $0x344] sm:$0xf]
  %v493 = vld [vmem:[%s1 + $0x348] sm:$0xf]
  %v494 = vld [vmem:[%s1 + $0x34c] sm:$0xf]
  %v495 = vld [vmem:[%s1 + $0x350] sm:$0xf]
  %v496 = vld [vmem:[%s1 + $0x354] sm:$0xf]
  %v497 = vld [vmem:[%s1 + $0x358] sm:$0xf]
  %v498 = vld [vmem:[%s1 + $0x35c] sm:$0xf]
  %v499 = vld [vmem:[%s1 + $0x360] sm:$0xf]
  %v500 = vld [vmem:[%s1 + $0x364] sm:$0xf]
  %v501 = vld [vmem:[%s1 + $0x368] sm:$0xf]
  %v502 = vld [vmem:[%s1 + $0x36c] sm:$0xf]
  %v503 = vld [vmem:[%s1 + $0x370] sm:$0xf]
  %v504 = vld [vmem:[%s1 + $0x374] sm:$0xf]
  %v505 = vld [vmem:[%s1 + $0x378] sm:$0xf]
  %v506 = vld [vmem:[%s1 + $0x37c] sm:$0xf]
  %v507 = vld [vmem:[%s1 + $0x380] sm:$0xf]
  %v508 = vld [vmem:[%s1 + $0x384] sm:$0xf]
  %v509 = vld [vmem:[%s1 + $0x388] sm:$0xf]
  %v510 = vld [vmem:[%s1 + $0x38c] sm:$0xf]
  %v511 = vld [vmem:[%s1 + $0x390] sm:$0xf]
  %v512 = vld [vmem:[%s1 + $0x394] sm:$0xf]
  %v513 = vld [vmem:[%s1 + $0x398] sm:$0xf]
  %v514 = vld [vmem:[%s1 + $0x39c] sm:$0xf]
  %v515 = vld [vmem:[%s1 + $0x3a0] sm:$0xf]
  %v516 = vld [vmem:[%s1 + $0x3a4] sm:$0xf]
  %v517 = vld [vmem:[%s1 + $0x3a8] sm:$0xf]
  %v518 = vld [vmem:[%s1 + $0x3ac] sm:$0xf]
  %v519 = vld [vmem:[%s1 + $0x3b0] sm:$0xf]
  %v520 = vld [vmem:[%s1 + $0x3b4] sm:$0xf]
  %v521 = vld [vmem:[%s1 + $0x3b8] sm:$0xf]
  %v522 = vld [vmem:[%s1 + $0x3bc] sm:$0xf]
  %v523 = vld [vmem:[%s1 + $0x3c0] sm:$0xf]
  %v524 = vld [vmem:[%s1 + $0x3c4] sm:$0xf]
  %v525 = vld [vmem:[%s1 + $0x3c8] sm:$0xf]
  %v526 = vld [vmem:[%s1 + $0x3cc] sm:$0xf]
  %v527 = vld [vmem:[%s1 + $0x3d0] sm:$0xf]
  %v528 = vld [vmem:[%s1 + $0x3d4] sm:$0xf]
  %v529 = vld [vmem:[%s1 + $0x3d8] sm:$0xf]
  %v530 = vld [vmem:[%s1 + $0x3dc] sm:$0xf]
  %v531 = vld [vmem:[%s1 + $0x3e0] sm:$0xf]
  %v532 = vld [vmem:[%s1 + $0x3e4] sm:$0xf]
  %v533 = vld [vmem:[%s1 + $0x3e8] sm:$0xf]
  %v534 = vld [vmem:[%s1 + $0x3ec] sm:$0xf]
  %v535 = vld [vmem:[%s1 + $0x3f0] sm:$0xf]
  %v536 = vld [vmem:[%s1 + $0x3f4] sm:$0xf]
  %v537 = vld [vmem:[%s1 + $0x3f8] sm:$0xf]
  %v538 = vld [vmem:[%s1 + $0x3fc] sm:$0xf]
  %v539 = vld [vmem:[%s1 + $0x400] sm:$0xf]
  %v540 = vld [vmem:[%s1 + $0x404] sm:$0xf]
  %v541 = vld [vmem:[%s1 + $0x408] sm:$0xf]
  %v542 = vld [vmem:[%s1 + $0x40c] sm:$0xf]
  %v543 = vld [vmem:[%s1 + $0x410] sm:$0xf]
  %v544 = vld [vmem:[%s1 + $0x414] sm:$0xf]
  %v545 = vld [vmem:[%s1 + $0x418] sm:$0xf]
  %v546 = vld [vmem:[%s1 + $0x41c] sm:$0xf]
  %v547 = vld [vmem:[%s1 + $0x420] sm:$0xf]
  %v548 = vld [vmem:[%s1 + $0x424] sm:$0xf]
  %v549 = vld [vmem:[%s1 + $0x428] sm:$0xf]
  %v550 = vld [vmem:[%s1 + $0x42c] sm:$0xf]
  %v551 = vld [vmem:[%s1 + $0x430] sm:$0xf]
  %v552 = vld [vmem:[%s1 + $0x434] sm:$0xf]
  %v553 = vld [vmem:[%s1 + $0x438] sm:$0xf]
  %v554 = vld [vmem:[%s1 + $0x43c] sm:$0xf]
  %v555 = vld [vmem:[%s1 + $0x440] sm:$0xf]
  %v556 = vld [vmem:[%s1 + $0x444] sm:$0xf]
  %v557 = vld [vmem:[%s1 + $0x448] sm:$0xf]
  %v558 = vld [vmem:[%s1 + $0x44c] sm:$0xf]
  %v559 = vld [vmem:[%s1 + $0x450] sm:$0xf]
  %v560 = vld [vmem:[%s1 + $0x454] sm:$0xf]
  %v561 = vld [vmem:[%s1 + $0x458] sm:$0xf]
  %v562 = vld [vmem:[%s1 + $0x45c] sm:$0xf]
  %v563 = vld [vmem:[%s1 + $0x460] sm:$0xf]
  %v564 = vld [vmem:[%s1 + $0x464] sm:$0xf]
  %v565 = vld [vmem:[%s1 + $0x468] sm:$0xf]
  %v566 = vld [vmem:[%s1 + $0x46c] sm:$0xf]
  %v567 = vld [vmem:[%s1 + $0x470] sm:$0xf]
  %v568 = vld [vmem:[%s1 + $0x474] sm:$0xf]
  %v569 = vld [vmem:[%s1 + $0x478] sm:$0xf]
  %v570 = vld [vmem:[%s1 + $0x47c] sm:$0xf]
  %v571 = vld [vmem:[%s1 + $0x480] sm:$0xf]
  %v572 = vld [vmem:[%s1 + $0x484] sm:$0xf]
  %v573 = vld [vmem:[%s1 + $0x488] sm:$0xf]
  %v574 = vld [vmem:[%s1 + $0x48c] sm:$0xf]
  %v575 = vld [vmem:[%s1 + $0x490] sm:$0xf]
  %v576 = vld [vmem:[%s1 + $0x494] sm:$0xf]
  %v577 = vld [vmem:[%s1 + $0x498] sm:$0xf]
  %v578 = vld [vmem:[%s1 + $0x49c] sm:$0xf]
  %v579 = vld [vmem:[%s1 + $0x4a0] sm:$0xf]
  %v580 = vld [vmem:[%s1 + $0x4a4] sm:$0xf]
  %v581 = vld [vmem:[%s1 + $0x4a8] sm:$0xf]
  %v582 = vld [vmem:[%s1 + $0x4ac] sm:$0xf]
  %v583 = vld [vmem:[%s1 + $0x4b0] sm:$0xf]
  %v584 = vld [vmem:[%s1 + $0x4b4] sm:$0xf]
  %v585 = vld [vmem:[%s1 + $0x4b8] sm:$0xf]
  %v586 = vld [vmem:[%s1 + $0x4bc] sm:$0xf]
  %v587 = vld [vmem:[%s1 + $0x4c0] sm:$0xf]
  %v588 = vld [vmem:[%s1 + $0x4c4] sm:$0xf]
  %v589 = vld [vmem:[%s1 + $0x4c8] sm:$0xf]
  %v590 = vld [vmem:[%s1 + $0x4cc] sm:$0xf]
  %v591 = vld [vmem:[%s1 + $0x4d0] sm:$0xf]
  %v592 = vld [vmem:[%s1 + $0x4d4] sm:$0xf]
  %v593 = vld [vmem:[%s1 + $0x4d8] sm:$0xf]
  %v594 = vld [vmem:[%s1 + $0x4dc] sm:$0xf]
  %v595 = vld [vmem:[%s1 + $0x4e0] sm:$0xf]
  %v596 = vld [vmem:[%s1 + $0x4e4] sm:$0xf]
  %v597 = vld [vmem:[%s1 + $0x4e8] sm:$0xf]
  %v598 = vld [vmem:[%s1 + $0x4ec] sm:$0xf]
  %v599 = vld [vmem:[%s1 + $0x4f0] sm:$0xf]
  %v600 = vld [vmem:[%s1 + $0x4f4] sm:$0xf]
  %v601 = vld [vmem:[%s1 + $0x4f8] sm:$0xf]
  %v602 = vld [vmem:[%s1 + $0x4fc] sm:$0xf]
  %v603 = vld [vmem:[%s1 + $0x500] sm:$0xf]
  %v604 = vld [vmem:[%s1 + $0x504] sm:$0xf]
  %v605 = vld [vmem:[%s1 + $0x508] sm:$0xf]
  %v606 = vld [vmem:[%s1 + $0x50c] sm:$0xf]
  %v607 = vld [vmem:[%s1 + $0x510] sm:$0xf]
  %v608 = vld [vmem:[%s1 + $0x514] sm:$0xf]
  %v609 = vld [vmem:[%s1 + $0x518] sm:$0xf]
  %v610 = vld [vmem:[%s1 + $0x51c] sm:$0xf]
  %v611 = vld [vmem:[%s1 + $0x520] sm:$0xf]
  %v612 = vld [vmem:[%s1 + $0x524] sm:$0xf]
  %v613 = vld [vmem:[%s1 + $0x528] sm:$0xf]
  %v614 = vld [vmem:[%s1 + $0x52c] sm:$0xf]
  %v615 = vld [vmem:[%s1 + $0x530] sm:$0xf]
  %v616 = vld [vmem:[%s1 + $0x534] sm:$0xf]
  %v617 = vld [vmem:[%s1 + $0x538] sm:$0xf]
  %v618 = vld [vmem:[%s1 + $0x53c] sm:$0xf]
  %v619 = vld [vmem:[%s1 + $0x540] sm:$0xf]
  %v620 = vld [vmem:[%s1 + $0x544] sm:$0xf]
  %v621 = vld [vmem:[%s1 + $0x548] sm:$0xf]
  %v622 = vld [vmem:[%s1 + $0x54c] sm:$0xf]
  %v623 = vld [vmem:[%s1 + $0x550] sm:$0xf]
  %v624 = vld [vmem:[%s1 + $0x554] sm:$0xf]
  %v625 = vld [vmem:[%s1 + $0x558] sm:$0xf]
  %v626 = vld [vmem:[%s1 + $0x55c] sm:$0xf]
  %v627 = vld [vmem:[%s1 + $0x560] sm:$0xf]
  %v628 = vld [vmem:[%s1 + $0x564] sm:$0xf]
  %v629 = vld [vmem:[%s1 + $0x568] sm:$0xf]
  %v630 = vld [vmem:[%s1 + $0x56c] sm:$0xf]
  %v631 = vld [vmem:[%s1 + $0x570] sm:$0xf]
  %v632 = vld [vmem:[%s1 + $0x574] sm:$0xf]
  %v633 = vld [vmem:[%s1 + $0x578] sm:$0xf]
  %v634 = vld [vmem:[%s1 + $0x57c] sm:$0xf]
  %v635 = vlaneseq
  %v636 = vshrl.u32 %v635, 7
  %v637 = vsub.s32 0, %v636
  %v638 = vrot.slane %v282, %v637
  %v727 = vunpack.c.l.b16 %v194
  %v728 = vunpack.c.h.b16 %v194
  %v729 = vunpack.c.l.b16 %v195
  %v730 = vunpack.c.h.b16 %v195
  %v731 = vunpack.c.l.b16 %v196
  %v732 = vunpack.c.h.b16 %v196
  %v733 = vunpack.c.l.b16 %v197
  %v734 = vunpack.c.h.b16 %v197
  %v735 = vunpack.c.l.b16 %v198
  %v736 = vunpack.c.h.b16 %v198
  %v737 = vunpack.c.l.b16 %v199
  %v738 = vunpack.c.h.b16 %v199
  %v739 = vunpack.c.l.b16 %v200
  %v740 = vunpack.c.h.b16 %v200
  %v741 = vunpack.c.l.b16 %v201
  %v742 = vunpack.c.h.b16 %v201
  %v743 = vunpack.c.l.b16 %v202
  %v744 = vunpack.c.h.b16 %v202
  %v745 = vunpack.c.l.b16 %v203
  %v746 = vunpack.c.h.b16 %v203
  %v747 = vunpack.c.l.b16 %v204
  %v748 = vunpack.c.h.b16 %v204
  %v749 = vunpack.c.l.b16 %v205
  %v750 = vunpack.c.h.b16 %v205
  %v751 = vunpack.c.l.b16 %v206
  %v752 = vunpack.c.h.b16 %v206
  %v753 = vunpack.c.l.b16 %v207
  %v754 = vunpack.c.h.b16 %v207
  %v755 = vunpack.c.l.b16 %v208
  %v756 = vunpack.c.h.b16 %v208
  %v757 = vunpack.c.l.b16 %v209
  %v758 = vunpack.c.h.b16 %v209
  %v759 = vunpack.c.l.b16 %v210
  %v760 = vunpack.c.h.b16 %v210
  %v761 = vunpack.c.l.b16 %v211
  %v762 = vunpack.c.h.b16 %v211
  %v763 = vunpack.c.l.b16 %v212
  %v764 = vunpack.c.h.b16 %v212
  %v765 = vunpack.c.l.b16 %v213
  %v766 = vunpack.c.h.b16 %v213
  %v767 = vunpack.c.l.b16 %v214
  %v768 = vunpack.c.h.b16 %v214
  %v769 = vunpack.c.l.b16 %v215
  %v770 = vunpack.c.h.b16 %v215
  %v771 = vunpack.c.l.b16 %v216
  %v772 = vunpack.c.h.b16 %v216
  %v773 = vunpack.c.l.b16 %v217
  %v774 = vunpack.c.h.b16 %v217
  %v775 = vunpack.c.l.b16 %v218
  %v776 = vunpack.c.h.b16 %v218
  %v777 = vunpack.c.l.b16 %v219
  %v778 = vunpack.c.h.b16 %v219
  %v779 = vunpack.c.l.b16 %v220
  %v780 = vunpack.c.h.b16 %v220
  %v781 = vunpack.c.l.b16 %v221
  %v782 = vunpack.c.h.b16 %v221
  %v783 = vunpack.c.l.b16 %v222
  %v784 = vunpack.c.h.b16 %v222
  %v785 = vunpack.c.l.b16 %v223
  %v786 = vunpack.c.h.b16 %v223
  %v787 = vunpack.c.l.b16 %v224
  %v788 = vunpack.c.h.b16 %v224
  %v789 = vunpack.c.l.b16 %v225
  %v790 = vunpack.c.h.b16 %v225
  %v791 = vunpack.c.l.b16 %v226
  %v792 = vunpack.c.h.b16 %v226
  %v793 = vunpack.c.l.b16 %v227
  %v794 = vunpack.c.h.b16 %v227
  %v795 = vunpack.c.l.b16 %v228
  %v796 = vunpack.c.h.b16 %v228
  %v797 = vunpack.c.l.b16 %v229
  %v798 = vunpack.c.h.b16 %v229
  %v799 = vunpack.c.l.b16 %v230
  %v800 = vunpack.c.h.b16 %v230
  %v801 = vunpack.c.l.b16 %v231
  %v802 = vunpack.c.h.b16 %v231
  %v803 = vunpack.c.l.b16 %v232
  %v804 = vunpack.c.h.b16 %v232
  %v805 = vunpack.c.l.b16 %v233
  %v806 = vunpack.c.h.b16 %v233
  %v807 = vunpack.c.l.b16 %v234
  %v808 = vunpack.c.h.b16 %v234
  %v809 = vunpack.c.l.b16 %v235
  %v810 = vunpack.c.h.b16 %v235
  %v811 = vunpack.c.l.b16 %v236
  %v812 = vunpack.c.h.b16 %v236
  %v813 = vunpack.c.l.b16 %v237
  %v814 = vunpack.c.h.b16 %v237
  %v815 = vunpack.c.l.b16 %v238
  %v816 = vunpack.c.h.b16 %v238
  %v817 = vunpack.c.l.b16 %v239
  %v818 = vunpack.c.h.b16 %v239
  %v819 = vunpack.c.l.b16 %v240
  %v820 = vunpack.c.h.b16 %v240
  %v821 = vunpack.c.l.b16 %v241
  %v822 = vunpack.c.h.b16 %v241
  %v823 = vunpack.c.l.b16 %v242
  %v824 = vunpack.c.h.b16 %v242
  %v825 = vunpack.c.l.b16 %v243
  %v826 = vunpack.c.h.b16 %v243
  %v827 = vunpack.c.l.b16 %v244
  %v828 = vunpack.c.h.b16 %v244
  %v829 = vunpack.c.l.b16 %v245
  %v830 = vunpack.c.h.b16 %v245
  %v831 = vunpack.c.l.b16 %v246
  %v832 = vunpack.c.h.b16 %v246
  %v833 = vunpack.c.l.b16 %v247
  %v834 = vunpack.c.h.b16 %v247
  %v835 = vunpack.c.l.b16 %v248
  %v836 = vunpack.c.h.b16 %v248
  %v837 = vunpack.c.l.b16 %v249
  %v838 = vunpack.c.h.b16 %v249
  %v839 = vunpack.c.l.b16 %v250
  %v840 = vunpack.c.h.b16 %v250
  %v841 = vunpack.c.l.b16 %v251
  %v842 = vunpack.c.h.b16 %v251
  %v843 = vunpack.c.l.b16 %v252
  %v844 = vunpack.c.h.b16 %v252
  %v845 = vunpack.c.l.b16 %v253
  %v846 = vunpack.c.h.b16 %v253
  %v847 = vunpack.c.l.b16 %v254
  %v848 = vunpack.c.h.b16 %v254
  %v849 = vunpack.c.l.b16 %v255
  %v850 = vunpack.c.h.b16 %v255
  %v851 = vunpack.c.l.b16 %v256
  %v852 = vunpack.c.h.b16 %v256
  %v853 = vunpack.c.l.b16 %v257
  %v854 = vunpack.c.h.b16 %v257
  %v855 = vunpack.c.l.b16 %v258
  %v856 = vunpack.c.h.b16 %v258
  %v857 = vunpack.c.l.b16 %v259
  %v858 = vunpack.c.h.b16 %v259
  %v859 = vunpack.c.l.b16 %v260
  %v860 = vunpack.c.h.b16 %v260
  %v861 = vunpack.c.l.b16 %v261
  %v862 = vunpack.c.h.b16 %v261
  %v863 = vunpack.c.l.b16 %v262
  %v864 = vunpack.c.h.b16 %v262
  %v865 = vunpack.c.l.b16 %v263
  %v866 = vunpack.c.h.b16 %v263
  %v867 = vunpack.c.l.b16 %v264
  %v868 = vunpack.c.h.b16 %v264
  %v869 = vunpack.c.l.b16 %v265
  %v870 = vunpack.c.h.b16 %v265
  %v871 = vunpack.c.l.b16 %v266
  %v872 = vunpack.c.h.b16 %v266
  %v873 = vunpack.c.l.b16 %v267
  %v874 = vunpack.c.h.b16 %v267
  %v875 = vunpack.c.l.b16 %v268
  %v876 = vunpack.c.h.b16 %v268
  %v877 = vunpack.c.l.b16 %v269
  %v878 = vunpack.c.h.b16 %v269
  %v879 = vunpack.c.l.b16 %v270
  %v880 = vunpack.c.h.b16 %v270
  %v881 = vunpack.c.l.b16 %v271
  %v882 = vunpack.c.h.b16 %v271
  %v883 = vunpack.c.l.b16 %v272
  %v884 = vunpack.c.h.b16 %v272
  %v885 = vunpack.c.l.b16 %v273
  %v886 = vunpack.c.h.b16 %v273
  %v887 = vunpack.c.l.b16 %v274
  %v888 = vunpack.c.h.b16 %v274
  %v889 = vunpack.c.l.b16 %v275
  %v890 = vunpack.c.h.b16 %v275
  %v891 = vunpack.c.l.b16 %v276
  %v892 = vunpack.c.h.b16 %v276
  %v893 = vunpack.c.l.b16 %v277
  %v894 = vunpack.c.h.b16 %v277
  %v895 = vunpack.c.l.b16 %v278
  %v896 = vunpack.c.h.b16 %v278
  %v897 = vunpack.c.l.b16 %v279
  %v898 = vunpack.c.h.b16 %v279
  %v899 = vunpack.c.l.b16 %v280
  %v900 = vunpack.c.h.b16 %v280
  %v901 = vunpack.c.l.b16 %v281
  %v902 = vunpack.c.h.b16 %v281
  %v903 = vpack.c.b16 %v749, %v727
  %v904 = vpack.c.b16 %v750, %v728
  %v905 = vpack.c.b16 %v751, %v729
  %v906 = vpack.c.b16 %v752, %v730
  %v907 = vpack.c.b16 %v753, %v731
  %v908 = vpack.c.b16 %v754, %v732
  %v909 = vpack.c.b16 %v755, %v733
  %v910 = vpack.c.b16 %v756, %v734
  %v911 = vpack.c.b16 %v757, %v735
  %v912 = vpack.c.b16 %v758, %v736
  %v913 = vpack.c.b16 %v759, %v737
  %v914 = vpack.c.b16 %v760, %v738
  %v915 = vpack.c.b16 %v761, %v739
  %v916 = vpack.c.b16 %v762, %v740
  %v917 = vpack.c.b16 %v763, %v741
  %v918 = vpack.c.b16 %v764, %v742
  %v919 = vpack.c.b16 %v765, %v743
  %v920 = vpack.c.b16 %v766, %v744
  %v921 = vpack.c.b16 %v767, %v745
  %v922 = vpack.c.b16 %v768, %v746
  %v923 = vpack.c.b16 %v769, %v747
  %v924 = vpack.c.b16 %v770, %v748
  %v925 = vpack.c.b16 %v793, %v771
  %v926 = vpack.c.b16 %v794, %v772
  %v927 = vpack.c.b16 %v795, %v773
  %v928 = vpack.c.b16 %v796, %v774
  %v929 = vpack.c.b16 %v797, %v775
  %v930 = vpack.c.b16 %v798, %v776
  %v931 = vpack.c.b16 %v799, %v777
  %v932 = vpack.c.b16 %v800, %v778
  %v933 = vpack.c.b16 %v801, %v779
  %v934 = vpack.c.b16 %v802, %v780
  %v935 = vpack.c.b16 %v803, %v781
  %v936 = vpack.c.b16 %v804, %v782
  %v937 = vpack.c.b16 %v805, %v783
  %v938 = vpack.c.b16 %v806, %v784
  %v939 = vpack.c.b16 %v807, %v785
  %v940 = vpack.c.b16 %v808, %v786
  %v941 = vpack.c.b16 %v809, %v787
  %v942 = vpack.c.b16 %v810, %v788
  %v943 = vpack.c.b16 %v811, %v789
  %v944 = vpack.c.b16 %v812, %v790
  %v945 = vpack.c.b16 %v813, %v791
  %v946 = vpack.c.b16 %v814, %v792
  %v947 = vpack.c.b16 %v837, %v815
  %v948 = vpack.c.b16 %v838, %v816
  %v949 = vpack.c.b16 %v839, %v817
  %v950 = vpack.c.b16 %v840, %v818
  %v951 = vpack.c.b16 %v841, %v819
  %v952 = vpack.c.b16 %v842, %v820
  %v953 = vpack.c.b16 %v843, %v821
  %v954 = vpack.c.b16 %v844, %v822
  %v955 = vpack.c.b16 %v845, %v823
  %v956 = vpack.c.b16 %v846, %v824
  %v957 = vpack.c.b16 %v847, %v825
  %v958 = vpack.c.b16 %v848, %v826
  %v959 = vpack.c.b16 %v849, %v827
  %v960 = vpack.c.b16 %v850, %v828
  %v961 = vpack.c.b16 %v851, %v829
  %v962 = vpack.c.b16 %v852, %v830
  %v963 = vpack.c.b16 %v853, %v831
  %v964 = vpack.c.b16 %v854, %v832
  %v965 = vpack.c.b16 %v855, %v833
  %v966 = vpack.c.b16 %v856, %v834
  %v967 = vpack.c.b16 %v857, %v835
  %v968 = vpack.c.b16 %v858, %v836
  %v969 = vpack.c.b16 %v881, %v859
  %v970 = vpack.c.b16 %v882, %v860
  %v971 = vpack.c.b16 %v883, %v861
  %v972 = vpack.c.b16 %v884, %v862
  %v973 = vpack.c.b16 %v885, %v863
  %v974 = vpack.c.b16 %v886, %v864
  %v975 = vpack.c.b16 %v887, %v865
  %v976 = vpack.c.b16 %v888, %v866
  %v977 = vpack.c.b16 %v889, %v867
  %v978 = vpack.c.b16 %v890, %v868
  %v979 = vpack.c.b16 %v891, %v869
  %v980 = vpack.c.b16 %v892, %v870
  %v981 = vpack.c.b16 %v893, %v871
  %v982 = vpack.c.b16 %v894, %v872
  %v983 = vpack.c.b16 %v895, %v873
  %v984 = vpack.c.b16 %v896, %v874
  %v985 = vpack.c.b16 %v897, %v875
  %v986 = vpack.c.b16 %v898, %v876
  %v987 = vpack.c.b16 %v899, %v877
  %v988 = vpack.c.b16 %v900, %v878
  %v989 = vpack.c.b16 %v901, %v879
  %v990 = vpack.c.b16 %v902, %v880
  %v1431 = vunpack.c.l.b16 %v283
  %v1432 = vunpack.c.l.b16 %v284
  %v1433 = vunpack.c.l.b16 %v285
  %v1434 = vunpack.c.l.b16 %v286
  %v1435 = vunpack.c.l.b16 %v287
  %v1436 = vunpack.c.l.b16 %v288
  %v1437 = vunpack.c.l.b16 %v289
  %v1438 = vunpack.c.l.b16 %v290
  %v1439 = vunpack.c.l.b16 %v291
  %v1440 = vunpack.c.l.b16 %v292
  %v1441 = vunpack.c.l.b16 %v293
  %v1442 = vunpack.c.l.b16 %v294
  %v1443 = vunpack.c.l.b16 %v295
  %v1444 = vunpack.c.l.b16 %v296
  %v1445 = vunpack.c.l.b16 %v297
  %v1446 = vunpack.c.l.b16 %v298
  %v1447 = vunpack.c.l.b16 %v299
  %v1448 = vunpack.c.l.b16 %v300
  %v1449 = vunpack.c.l.b16 %v301
  %v1450 = vunpack.c.l.b16 %v302
  %v1451 = vunpack.c.l.b16 %v303
  %v1452 = vunpack.c.l.b16 %v304
  %v1453 = vunpack.c.l.b16 %v305
  %v1454 = vunpack.c.l.b16 %v306
  %v1455 = vunpack.c.l.b16 %v307
  %v1456 = vunpack.c.l.b16 %v308
  %v1457 = vunpack.c.l.b16 %v309
  %v1458 = vunpack.c.l.b16 %v310
  %v1459 = vunpack.c.l.b16 %v311
  %v1460 = vunpack.c.l.b16 %v312
  %v1461 = vunpack.c.l.b16 %v313
  %v1462 = vunpack.c.l.b16 %v314
  %v1463 = vunpack.c.l.b16 %v315
  %v1464 = vunpack.c.l.b16 %v316
  %v1465 = vunpack.c.l.b16 %v317
  %v1466 = vunpack.c.l.b16 %v318
  %v1467 = vunpack.c.l.b16 %v319
  %v1468 = vunpack.c.l.b16 %v320
  %v1469 = vunpack.c.l.b16 %v321
  %v1470 = vunpack.c.l.b16 %v322
  %v1471 = vunpack.c.l.b16 %v323
  %v1472 = vunpack.c.l.b16 %v324
  %v1473 = vunpack.c.l.b16 %v325
  %v1474 = vunpack.c.l.b16 %v326
  %v1475 = vunpack.c.l.b16 %v327
  %v1476 = vunpack.c.l.b16 %v328
  %v1477 = vunpack.c.l.b16 %v329
  %v1478 = vunpack.c.l.b16 %v330
  %v1479 = vunpack.c.l.b16 %v331
  %v1480 = vunpack.c.l.b16 %v332
  %v1481 = vunpack.c.l.b16 %v333
  %v1482 = vunpack.c.l.b16 %v334
  %v1483 = vunpack.c.l.b16 %v335
  %v1484 = vunpack.c.l.b16 %v336
  %v1485 = vunpack.c.l.b16 %v337
  %v1486 = vunpack.c.l.b16 %v338
  %v1487 = vunpack.c.l.b16 %v339
  %v1488 = vunpack.c.l.b16 %v340
  %v1489 = vunpack.c.l.b16 %v341
  %v1490 = vunpack.c.l.b16 %v342
  %v1491 = vunpack.c.l.b16 %v343
  %v1492 = vunpack.c.l.b16 %v344
  %v1493 = vunpack.c.l.b16 %v345
  %v1494 = vunpack.c.l.b16 %v346
  %v1495 = vunpack.c.l.b16 %v347
  %v1496 = vunpack.c.l.b16 %v348
  %v1497 = vunpack.c.l.b16 %v349
  %v1498 = vunpack.c.l.b16 %v350
  %v1499 = vunpack.c.l.b16 %v351
  %v1500 = vunpack.c.l.b16 %v352
  %v1501 = vunpack.c.l.b16 %v353
  %v1502 = vunpack.c.l.b16 %v354
  %v1503 = vunpack.c.l.b16 %v355
  %v1504 = vunpack.c.l.b16 %v356
  %v1505 = vunpack.c.l.b16 %v357
  %v1506 = vunpack.c.l.b16 %v358
  %v1507 = vunpack.c.l.b16 %v359
  %v1508 = vunpack.c.l.b16 %v360
  %v1509 = vunpack.c.l.b16 %v361
  %v1510 = vunpack.c.l.b16 %v362
  %v1511 = vunpack.c.l.b16 %v363
  %v1512 = vunpack.c.l.b16 %v364
  %v1513 = vunpack.c.l.b16 %v365
  %v1514 = vunpack.c.l.b16 %v366
  %v1515 = vunpack.c.l.b16 %v367
  %v1516 = vunpack.c.l.b16 %v368
  %v1517 = vunpack.c.l.b16 %v369
  %v1518 = vunpack.c.l.b16 %v370
  %v1519 = vunpack.c.l.b16 %v371
  %v1520 = vunpack.c.l.b16 %v372
  %v1521 = vunpack.c.l.b16 %v373
  %v1522 = vunpack.c.l.b16 %v374
  %v1523 = vunpack.c.l.b16 %v375
  %v1524 = vunpack.c.l.b16 %v376
  %v1525 = vunpack.c.l.b16 %v377
  %v1526 = vunpack.c.l.b16 %v378
  %v1527 = vunpack.c.l.b16 %v379
  %v1528 = vunpack.c.l.b16 %v380
  %v1529 = vunpack.c.l.b16 %v381
  %v1530 = vunpack.c.l.b16 %v382
  %v1531 = vunpack.c.l.b16 %v383
  %v1532 = vunpack.c.l.b16 %v384
  %v1533 = vunpack.c.l.b16 %v385
  %v1534 = vunpack.c.l.b16 %v386
  %v1535 = vunpack.c.l.b16 %v387
  %v1536 = vunpack.c.l.b16 %v388
  %v1537 = vunpack.c.l.b16 %v389
  %v1538 = vunpack.c.l.b16 %v390
  %v1539 = vunpack.c.l.b16 %v391
  %v1540 = vunpack.c.l.b16 %v392
  %v1541 = vunpack.c.l.b16 %v393
  %v1542 = vunpack.c.l.b16 %v394
  %v1543 = vunpack.c.l.b16 %v395
  %v1544 = vunpack.c.l.b16 %v396
  %v1545 = vunpack.c.l.b16 %v397
  %v1546 = vunpack.c.l.b16 %v398
  %v1547 = vunpack.c.l.b16 %v399
  %v1548 = vunpack.c.l.b16 %v400
  %v1549 = vunpack.c.l.b16 %v401
  %v1550 = vunpack.c.l.b16 %v402
  %v1551 = vunpack.c.l.b16 %v403
  %v1552 = vunpack.c.l.b16 %v404
  %v1553 = vunpack.c.l.b16 %v405
  %v1554 = vunpack.c.l.b16 %v406
  %v1555 = vunpack.c.l.b16 %v407
  %v1556 = vunpack.c.l.b16 %v408
  %v1557 = vunpack.c.l.b16 %v409
  %v1558 = vunpack.c.l.b16 %v410
  %v1559 = vunpack.c.l.b16 %v411
  %v1560 = vunpack.c.l.b16 %v412
  %v1561 = vunpack.c.l.b16 %v413
  %v1562 = vunpack.c.l.b16 %v414
  %v1563 = vunpack.c.l.b16 %v415
  %v1564 = vunpack.c.l.b16 %v416
  %v1565 = vunpack.c.l.b16 %v417
  %v1566 = vunpack.c.l.b16 %v418
  %v1567 = vunpack.c.l.b16 %v419
  %v1568 = vunpack.c.l.b16 %v420
  %v1569 = vunpack.c.l.b16 %v421
  %v1570 = vunpack.c.l.b16 %v422
  %v1571 = vunpack.c.l.b16 %v423
  %v1572 = vunpack.c.l.b16 %v424
  %v1573 = vunpack.c.l.b16 %v425
  %v1574 = vunpack.c.l.b16 %v426
  %v1575 = vunpack.c.l.b16 %v427
  %v1576 = vunpack.c.l.b16 %v428
  %v1577 = vunpack.c.l.b16 %v429
  %v1578 = vunpack.c.l.b16 %v430
  %v1579 = vunpack.c.l.b16 %v431
  %v1580 = vunpack.c.l.b16 %v432
  %v1581 = vunpack.c.l.b16 %v433
  %v1582 = vunpack.c.l.b16 %v434
  %v1583 = vunpack.c.l.b16 %v435
  %v1584 = vunpack.c.l.b16 %v436
  %v1585 = vunpack.c.l.b16 %v437
  %v1586 = vunpack.c.l.b16 %v438
  %v1587 = vunpack.c.l.b16 %v439
  %v1588 = vunpack.c.l.b16 %v440
  %v1589 = vunpack.c.l.b16 %v441
  %v1590 = vunpack.c.l.b16 %v442
  %v1591 = vunpack.c.l.b16 %v443
  %v1592 = vunpack.c.l.b16 %v444
  %v1593 = vunpack.c.l.b16 %v445
  %v1594 = vunpack.c.l.b16 %v446
  %v1595 = vunpack.c.l.b16 %v447
  %v1596 = vunpack.c.l.b16 %v448
  %v1597 = vunpack.c.l.b16 %v449
  %v1598 = vunpack.c.l.b16 %v450
  %v1599 = vunpack.c.l.b16 %v451
  %v1600 = vunpack.c.l.b16 %v452
  %v1601 = vunpack.c.l.b16 %v453
  %v1602 = vunpack.c.l.b16 %v454
  %v1603 = vunpack.c.l.b16 %v455
  %v1604 = vunpack.c.l.b16 %v456
  %v1605 = vunpack.c.l.b16 %v457
  %v1606 = vunpack.c.l.b16 %v458
  %v1607 = vunpack.c.l.b16 %v459
  %v1608 = vunpack.c.l.b16 %v460
  %v1609 = vunpack.c.l.b16 %v461
  %v1610 = vunpack.c.l.b16 %v462
  %v1611 = vunpack.c.l.b16 %v463
  %v1612 = vunpack.c.l.b16 %v464
  %v1613 = vunpack.c.l.b16 %v465
  %v1614 = vunpack.c.l.b16 %v466
  %v1615 = vunpack.c.l.b16 %v467
  %v1616 = vunpack.c.l.b16 %v468
  %v1617 = vunpack.c.l.b16 %v469
  %v1618 = vunpack.c.l.b16 %v470
  %v1619 = vunpack.c.l.b16 %v471
  %v1620 = vunpack.c.l.b16 %v472
  %v1621 = vunpack.c.l.b16 %v473
  %v1622 = vunpack.c.l.b16 %v474
  %v1623 = vunpack.c.l.b16 %v475
  %v1624 = vunpack.c.l.b16 %v476
  %v1625 = vunpack.c.l.b16 %v477
  %v1626 = vunpack.c.l.b16 %v478
  %v1627 = vunpack.c.l.b16 %v479
  %v1628 = vunpack.c.l.b16 %v480
  %v1629 = vunpack.c.l.b16 %v481
  %v1630 = vunpack.c.l.b16 %v482
  %v1631 = vunpack.c.l.b16 %v483
  %v1632 = vunpack.c.l.b16 %v484
  %v1633 = vunpack.c.l.b16 %v485
  %v1634 = vunpack.c.l.b16 %v486
  %v1635 = vunpack.c.l.b16 %v487
  %v1636 = vunpack.c.l.b16 %v488
  %v1637 = vunpack.c.l.b16 %v489
  %v1638 = vunpack.c.l.b16 %v490
  %v1639 = vunpack.c.l.b16 %v491
  %v1640 = vunpack.c.l.b16 %v492
  %v1641 = vunpack.c.l.b16 %v493
  %v1642 = vunpack.c.l.b16 %v494
  %v1643 = vunpack.c.l.b16 %v495
  %v1644 = vunpack.c.l.b16 %v496
  %v1645 = vunpack.c.l.b16 %v497
  %v1646 = vunpack.c.l.b16 %v498
  %v1647 = vunpack.c.l.b16 %v499
  %v1648 = vunpack.c.l.b16 %v500
  %v1649 = vunpack.c.l.b16 %v501
  %v1650 = vunpack.c.l.b16 %v502
  %v1651 = vunpack.c.l.b16 %v503
  %v1652 = vunpack.c.l.b16 %v504
  %v1653 = vunpack.c.l.b16 %v505
  %v1654 = vunpack.c.l.b16 %v506
  %v1655 = vunpack.c.l.b16 %v507
  %v1656 = vunpack.c.l.b16 %v508
  %v1657 = vunpack.c.l.b16 %v509
  %v1658 = vunpack.c.l.b16 %v510
  %v1659 = vunpack.c.l.b16 %v511
  %v1660 = vunpack.c.l.b16 %v512
  %v1661 = vunpack.c.l.b16 %v513
  %v1662 = vunpack.c.l.b16 %v514
  %v1663 = vunpack.c.l.b16 %v515
  %v1664 = vunpack.c.l.b16 %v516
  %v1665 = vunpack.c.l.b16 %v517
  %v1666 = vunpack.c.l.b16 %v518
  %v1667 = vunpack.c.l.b16 %v519
  %v1668 = vunpack.c.l.b16 %v520
  %v1669 = vunpack.c.l.b16 %v521
  %v1670 = vunpack.c.l.b16 %v522
  %v1671 = vunpack.c.l.b16 %v523
  %v1672 = vunpack.c.l.b16 %v524
  %v1673 = vunpack.c.l.b16 %v525
  %v1674 = vunpack.c.l.b16 %v526
  %v1675 = vunpack.c.l.b16 %v527
  %v1676 = vunpack.c.l.b16 %v528
  %v1677 = vunpack.c.l.b16 %v529
  %v1678 = vunpack.c.l.b16 %v530
  %v1679 = vunpack.c.l.b16 %v531
  %v1680 = vunpack.c.l.b16 %v532
  %v1681 = vunpack.c.l.b16 %v533
  %v1682 = vunpack.c.l.b16 %v534
  %v1683 = vunpack.c.l.b16 %v535
  %v1684 = vunpack.c.l.b16 %v536
  %v1685 = vunpack.c.l.b16 %v537
  %v1686 = vunpack.c.l.b16 %v538
  %v1687 = vunpack.c.l.b16 %v539
  %v1688 = vunpack.c.l.b16 %v540
  %v1689 = vunpack.c.l.b16 %v541
  %v1690 = vunpack.c.l.b16 %v542
  %v1691 = vunpack.c.l.b16 %v543
  %v1692 = vunpack.c.l.b16 %v544
  %v1693 = vunpack.c.l.b16 %v545
  %v1694 = vunpack.c.l.b16 %v546
  %v1695 = vunpack.c.l.b16 %v547
  %v1696 = vunpack.c.l.b16 %v548
  %v1697 = vunpack.c.l.b16 %v549
  %v1698 = vunpack.c.l.b16 %v550
  %v1699 = vunpack.c.l.b16 %v551
  %v1700 = vunpack.c.l.b16 %v552
  %v1701 = vunpack.c.l.b16 %v553
  %v1702 = vunpack.c.l.b16 %v554
  %v1703 = vunpack.c.l.b16 %v555
  %v1704 = vunpack.c.l.b16 %v556
  %v1705 = vunpack.c.l.b16 %v557
  %v1706 = vunpack.c.l.b16 %v558
  %v1707 = vunpack.c.l.b16 %v559
  %v1708 = vunpack.c.l.b16 %v560
  %v1709 = vunpack.c.l.b16 %v561
  %v1710 = vunpack.c.l.b16 %v562
  %v1711 = vunpack.c.l.b16 %v563
  %v1712 = vunpack.c.l.b16 %v564
  %v1713 = vunpack.c.l.b16 %v565
  %v1714 = vunpack.c.l.b16 %v566
  %v1715 = vunpack.c.l.b16 %v567
  %v1716 = vunpack.c.l.b16 %v568
  %v1717 = vunpack.c.l.b16 %v569
  %v1718 = vunpack.c.l.b16 %v570
  %v1719 = vunpack.c.l.b16 %v571
  %v1720 = vunpack.c.l.b16 %v572
  %v1721 = vunpack.c.l.b16 %v573
  %v1722 = vunpack.c.l.b16 %v574
  %v1723 = vunpack.c.l.b16 %v575
  %v1724 = vunpack.c.l.b16 %v576
  %v1725 = vunpack.c.l.b16 %v577
  %v1726 = vunpack.c.l.b16 %v578
  %v1727 = vunpack.c.l.b16 %v579
  %v1728 = vunpack.c.l.b16 %v580
  %v1729 = vunpack.c.l.b16 %v581
  %v1730 = vunpack.c.l.b16 %v582
  %v1731 = vunpack.c.l.b16 %v583
  %v1732 = vunpack.c.l.b16 %v584
  %v1733 = vunpack.c.l.b16 %v585
  %v1734 = vunpack.c.l.b16 %v586
  %v1735 = vunpack.c.l.b16 %v587
  %v1736 = vunpack.c.l.b16 %v588
  %v1737 = vunpack.c.l.b16 %v589
  %v1738 = vunpack.c.l.b16 %v590
  %v1739 = vunpack.c.l.b16 %v591
  %v1740 = vunpack.c.l.b16 %v592
  %v1741 = vunpack.c.l.b16 %v593
  %v1742 = vunpack.c.l.b16 %v594
  %v1743 = vunpack.c.l.b16 %v595
  %v1744 = vunpack.c.l.b16 %v596
  %v1745 = vunpack.c.l.b16 %v597
  %v1746 = vunpack.c.l.b16 %v598
  %v1747 = vunpack.c.l.b16 %v599
  %v1748 = vunpack.c.l.b16 %v600
  %v1749 = vunpack.c.l.b16 %v601
  %v1750 = vunpack.c.l.b16 %v602
  %v1751 = vunpack.c.l.b16 %v603
  %v1752 = vunpack.c.l.b16 %v604
  %v1753 = vunpack.c.l.b16 %v605
  %v1754 = vunpack.c.l.b16 %v606
  %v1755 = vunpack.c.l.b16 %v607
  %v1756 = vunpack.c.l.b16 %v608
  %v1757 = vunpack.c.l.b16 %v609
  %v1758 = vunpack.c.l.b16 %v610
  %v1759 = vunpack.c.l.b16 %v611
  %v1760 = vunpack.c.l.b16 %v612
  %v1761 = vunpack.c.l.b16 %v613
  %v1762 = vunpack.c.l.b16 %v614
  %v1763 = vunpack.c.l.b16 %v615
  %v1764 = vunpack.c.l.b16 %v616
  %v1765 = vunpack.c.l.b16 %v617
  %v1766 = vunpack.c.l.b16 %v618
  %v1767 = vunpack.c.l.b16 %v619
  %v1768 = vunpack.c.l.b16 %v620
  %v1769 = vunpack.c.l.b16 %v621
  %v1770 = vunpack.c.l.b16 %v622
  %v1771 = vunpack.c.l.b16 %v623
  %v1772 = vunpack.c.l.b16 %v624
  %v1773 = vunpack.c.l.b16 %v625
  %v1774 = vunpack.c.l.b16 %v626
  %v1775 = vunpack.c.l.b16 %v627
  %v1776 = vunpack.c.l.b16 %v628
  %v1777 = vunpack.c.l.b16 %v629
  %v1778 = vunpack.c.l.b16 %v630
  %v1779 = vunpack.c.l.b16 %v631
  %v1780 = vunpack.c.l.b16 %v632
  %v1781 = vunpack.c.l.b16 %v633
  %v1782 = vunpack.c.l.b16 %v634
  %v1783 = vpack.c.b16 %v1432, %v1431
  %v1784 = vpack.c.b16 %v1434, %v1433
  %v1785 = vpack.c.b16 %v1436, %v1435
  %v1786 = vpack.c.b16 %v1438, %v1437
  %v1787 = vpack.c.b16 %v1440, %v1439
  %v1788 = vpack.c.b16 %v1442, %v1441
  %v1789 = vpack.c.b16 %v1444, %v1443
  %v1790 = vpack.c.b16 %v1446, %v1445
  %v1791 = vpack.c.b16 %v1448, %v1447
  %v1792 = vpack.c.b16 %v1450, %v1449
  %v1793 = vpack.c.b16 %v1452, %v1451
  %v1794 = vpack.c.b16 %v1454, %v1453
  %v1795 = vpack.c.b16 %v1456, %v1455
  %v1796 = vpack.c.b16 %v1458, %v1457
  %v1797 = vpack.c.b16 %v1460, %v1459
  %v1798 = vpack.c.b16 %v1462, %v1461
  %v1799 = vpack.c.b16 %v1464, %v1463
  %v1800 = vpack.c.b16 %v1466, %v1465
  %v1801 = vpack.c.b16 %v1468, %v1467
  %v1802 = vpack.c.b16 %v1470, %v1469
  %v1803 = vpack.c.b16 %v1472, %v1471
  %v1804 = vpack.c.b16 %v1474, %v1473
  %v1805 = vpack.c.b16 %v1476, %v1475
  %v1806 = vpack.c.b16 %v1478, %v1477
  %v1807 = vpack.c.b16 %v1480, %v1479
  %v1808 = vpack.c.b16 %v1482, %v1481
  %v1809 = vpack.c.b16 %v1484, %v1483
  %v1810 = vpack.c.b16 %v1486, %v1485
  %v1811 = vpack.c.b16 %v1488, %v1487
  %v1812 = vpack.c.b16 %v1490, %v1489
  %v1813 = vpack.c.b16 %v1492, %v1491
  %v1814 = vpack.c.b16 %v1494, %v1493
  %v1815 = vpack.c.b16 %v1496, %v1495
  %v1816 = vpack.c.b16 %v1498, %v1497
  %v1817 = vpack.c.b16 %v1500, %v1499
  %v1818 = vpack.c.b16 %v1502, %v1501
  %v1819 = vpack.c.b16 %v1504, %v1503
  %v1820 = vpack.c.b16 %v1506, %v1505
  %v1821 = vpack.c.b16 %v1508, %v1507
  %v1822 = vpack.c.b16 %v1510, %v1509
  %v1823 = vpack.c.b16 %v1512, %v1511
  %v1824 = vpack.c.b16 %v1514, %v1513
  %v1825 = vpack.c.b16 %v1516, %v1515
  %v1826 = vpack.c.b16 %v1518, %v1517
  %v1827 = vpack.c.b16 %v1520, %v1519
  %v1828 = vpack.c.b16 %v1522, %v1521
  %v1829 = vpack.c.b16 %v1524, %v1523
  %v1830 = vpack.c.b16 %v1526, %v1525
  %v1831 = vpack.c.b16 %v1528, %v1527
  %v1832 = vpack.c.b16 %v1530, %v1529
  %v1833 = vpack.c.b16 %v1532, %v1531
  %v1834 = vpack.c.b16 %v1534, %v1533
  %v1835 = vpack.c.b16 %v1536, %v1535
  %v1836 = vpack.c.b16 %v1538, %v1537
  %v1837 = vpack.c.b16 %v1540, %v1539
  %v1838 = vpack.c.b16 %v1542, %v1541
  %v1839 = vpack.c.b16 %v1544, %v1543
  %v1840 = vpack.c.b16 %v1546, %v1545
  %v1841 = vpack.c.b16 %v1548, %v1547
  %v1842 = vpack.c.b16 %v1550, %v1549
  %v1843 = vpack.c.b16 %v1552, %v1551
  %v1844 = vpack.c.b16 %v1554, %v1553
  %v1845 = vpack.c.b16 %v1556, %v1555
  %v1846 = vpack.c.b16 %v1558, %v1557
  %v1847 = vpack.c.b16 %v1560, %v1559
  %v1848 = vpack.c.b16 %v1562, %v1561
  %v1849 = vpack.c.b16 %v1564, %v1563
  %v1850 = vpack.c.b16 %v1566, %v1565
  %v1851 = vpack.c.b16 %v1568, %v1567
  %v1852 = vpack.c.b16 %v1570, %v1569
  %v1853 = vpack.c.b16 %v1572, %v1571
  %v1854 = vpack.c.b16 %v1574, %v1573
  %v1855 = vpack.c.b16 %v1576, %v1575
  %v1856 = vpack.c.b16 %v1578, %v1577
  %v1857 = vpack.c.b16 %v1580, %v1579
  %v1858 = vpack.c.b16 %v1582, %v1581
  %v1859 = vpack.c.b16 %v1584, %v1583
  %v1860 = vpack.c.b16 %v1586, %v1585
  %v1861 = vpack.c.b16 %v1588, %v1587
  %v1862 = vpack.c.b16 %v1590, %v1589
  %v1863 = vpack.c.b16 %v1592, %v1591
  %v1864 = vpack.c.b16 %v1594, %v1593
  %v1865 = vpack.c.b16 %v1596, %v1595
  %v1866 = vpack.c.b16 %v1598, %v1597
  %v1867 = vpack.c.b16 %v1600, %v1599
  %v1868 = vpack.c.b16 %v1602, %v1601
  %v1869 = vpack.c.b16 %v1604, %v1603
  %v1870 = vpack.c.b16 %v1606, %v1605
  %v1871 = vpack.c.b16 %v1608, %v1607
  %v1872 = vpack.c.b16 %v1610, %v1609
  %v1873 = vpack.c.b16 %v1612, %v1611
  %v1874 = vpack.c.b16 %v1614, %v1613
  %v1875 = vpack.c.b16 %v1616, %v1615
  %v1876 = vpack.c.b16 %v1618, %v1617
  %v1877 = vpack.c.b16 %v1620, %v1619
  %v1878 = vpack.c.b16 %v1622, %v1621
  %v1879 = vpack.c.b16 %v1624, %v1623
  %v1880 = vpack.c.b16 %v1626, %v1625
  %v1881 = vpack.c.b16 %v1628, %v1627
  %v1882 = vpack.c.b16 %v1630, %v1629
  %v1883 = vpack.c.b16 %v1632, %v1631
  %v1884 = vpack.c.b16 %v1634, %v1633
  %v1885 = vpack.c.b16 %v1636, %v1635
  %v1886 = vpack.c.b16 %v1638, %v1637
  %v1887 = vpack.c.b16 %v1640, %v1639
  %v1888 = vpack.c.b16 %v1642, %v1641
  %v1889 = vpack.c.b16 %v1644, %v1643
  %v1890 = vpack.c.b16 %v1646, %v1645
  %v1891 = vpack.c.b16 %v1648, %v1647
  %v1892 = vpack.c.b16 %v1650, %v1649
  %v1893 = vpack.c.b16 %v1652, %v1651
  %v1894 = vpack.c.b16 %v1654, %v1653
  %v1895 = vpack.c.b16 %v1656, %v1655
  %v1896 = vpack.c.b16 %v1658, %v1657
  %v1897 = vpack.c.b16 %v1660, %v1659
  %v1898 = vpack.c.b16 %v1662, %v1661
  %v1899 = vpack.c.b16 %v1664, %v1663
  %v1900 = vpack.c.b16 %v1666, %v1665
  %v1901 = vpack.c.b16 %v1668, %v1667
  %v1902 = vpack.c.b16 %v1670, %v1669
  %v1903 = vpack.c.b16 %v1672, %v1671
  %v1904 = vpack.c.b16 %v1674, %v1673
  %v1905 = vpack.c.b16 %v1676, %v1675
  %v1906 = vpack.c.b16 %v1678, %v1677
  %v1907 = vpack.c.b16 %v1680, %v1679
  %v1908 = vpack.c.b16 %v1682, %v1681
  %v1909 = vpack.c.b16 %v1684, %v1683
  %v1910 = vpack.c.b16 %v1686, %v1685
  %v1911 = vpack.c.b16 %v1688, %v1687
  %v1912 = vpack.c.b16 %v1690, %v1689
  %v1913 = vpack.c.b16 %v1692, %v1691
  %v1914 = vpack.c.b16 %v1694, %v1693
  %v1915 = vpack.c.b16 %v1696, %v1695
  %v1916 = vpack.c.b16 %v1698, %v1697
  %v1917 = vpack.c.b16 %v1700, %v1699
  %v1918 = vpack.c.b16 %v1702, %v1701
  %v1919 = vpack.c.b16 %v1704, %v1703
  %v1920 = vpack.c.b16 %v1706, %v1705
  %v1921 = vpack.c.b16 %v1708, %v1707
  %v1922 = vpack.c.b16 %v1710, %v1709
  %v1923 = vpack.c.b16 %v1712, %v1711
  %v1924 = vpack.c.b16 %v1714, %v1713
  %v1925 = vpack.c.b16 %v1716, %v1715
  %v1926 = vpack.c.b16 %v1718, %v1717
  %v1927 = vpack.c.b16 %v1720, %v1719
  %v1928 = vpack.c.b16 %v1722, %v1721
  %v1929 = vpack.c.b16 %v1724, %v1723
  %v1930 = vpack.c.b16 %v1726, %v1725
  %v1931 = vpack.c.b16 %v1728, %v1727
  %v1932 = vpack.c.b16 %v1730, %v1729
  %v1933 = vpack.c.b16 %v1732, %v1731
  %v1934 = vpack.c.b16 %v1734, %v1733
  %v1935 = vpack.c.b16 %v1736, %v1735
  %v1936 = vpack.c.b16 %v1738, %v1737
  %v1937 = vpack.c.b16 %v1740, %v1739
  %v1938 = vpack.c.b16 %v1742, %v1741
  %v1939 = vpack.c.b16 %v1744, %v1743
  %v1940 = vpack.c.b16 %v1746, %v1745
  %v1941 = vpack.c.b16 %v1748, %v1747
  %v1942 = vpack.c.b16 %v1750, %v1749
  %v1943 = vpack.c.b16 %v1752, %v1751
  %v1944 = vpack.c.b16 %v1754, %v1753
  %v1945 = vpack.c.b16 %v1756, %v1755
  %v1946 = vpack.c.b16 %v1758, %v1757
  %v1947 = vpack.c.b16 %v1760, %v1759
  %v1948 = vpack.c.b16 %v1762, %v1761
  %v1949 = vpack.c.b16 %v1764, %v1763
  %v1950 = vpack.c.b16 %v1766, %v1765
  %v1951 = vpack.c.b16 %v1768, %v1767
  %v1952 = vpack.c.b16 %v1770, %v1769
  %v1953 = vpack.c.b16 %v1772, %v1771
  %v1954 = vpack.c.b16 %v1774, %v1773
  %v1955 = vpack.c.b16 %v1776, %v1775
  %v1956 = vpack.c.b16 %v1778, %v1777
  %v1957 = vpack.c.b16 %v1780, %v1779
  %v1958 = vpack.c.b16 %v1782, %v1781
  %2135 = vmatprep.subr.bf16.mxu0 0
  %2136 = vmatpush1.bf16.msra.mxu0 %v1783
  %2137 = vmatprep.subr.bf16.mxu0 0
  %2138 = vmatpush1.bf16.msra.mxu0 %v1784
  %2139 = vmatprep.subr.bf16.mxu0 0
  %2140 = vmatpush1.bf16.msra.mxu0 %v1785
  %2141 = vmatprep.subr.bf16.mxu0 0
  %2142 = vmatpush1.bf16.msra.mxu0 %v1786
  %2143 = vmatprep.subr.bf16.mxu0 0
  %2144 = vmatpush1.bf16.msra.mxu0 %v1787
  %2145 = vmatprep.subr.bf16.mxu0 0
  %2146 = vmatpush1.bf16.msra.mxu0 %v1788
  %2147 = vmatprep.subr.bf16.mxu0 0
  %2148 = vmatpush1.bf16.msra.mxu0 %v1789
  %2149 = vmatprep.subr.bf16.mxu0 0
  %2150 = vmatpush1.bf16.msra.mxu0 %v1790
  %2151 = vmatprep.subr.bf16.mxu0 0
  %2152 = vmatpush1.bf16.msra.mxu0 %v1791
  %2153 = vmatprep.subr.bf16.mxu0 0
  %2154 = vmatpush1.bf16.msra.mxu0 %v1792
  %2155 = vmatprep.subr.bf16.mxu0 0
  %2156 = vmatpush1.bf16.msra.mxu0 %v1793
  %2157 = vmatprep.subr.bf16.mxu0 0
  %2158 = vmatpush1.bf16.msra.mxu0 %v1794
  %2159 = vmatprep.subr.bf16.mxu0 0
  %2160 = vmatpush1.bf16.msra.mxu0 %v1795
  %2161 = vmatprep.subr.bf16.mxu0 0
  %2162 = vmatpush1.bf16.msra.mxu0 %v1796
  %2163 = vmatprep.subr.bf16.mxu0 0
  %2164 = vmatpush1.bf16.msra.mxu0 %v1797
  %2165 = vmatprep.subr.bf16.mxu0 0
  %2166 = vmatpush1.bf16.msra.mxu0 %v1798
  %2167 = vmatprep.mubr.bf16.mxu0 %v904
  %2168 = vmatmul.mubr.bf16.gmra.mrb[0].mxu0 %v903
  %v2169 = vpop.f32.mrb[0].mxu0
  %v2170 = vadd.f32 %v638, %v2169
  %v2171 = vpop.f32.mrb[0].mxu0
  %v2172 = vpop.f32.mrb[0].mxu0
  %v2173 = vadd.f32 %v638, %v2172
  %v2174 = vpop.f32.mrb[0].mxu0
  %2175 = vmatprep.mubr.bf16.mxu0 %v926
  %2176 = vmatmul.mubr.bf16.gmra.mrb[0].mxu0 %v925
  %v2177 = vpop.f32.mrb[0].mxu0
  %v2178 = vadd.f32 %v638, %v2177
  %v2179 = vpop.f32.mrb[0].mxu0
  %v2180 = vpop.f32.mrb[0].mxu0
  %v2181 = vadd.f32 %v638, %v2180
  %v2182 = vpop.f32.mrb[0].mxu0
  %2183 = vmatprep.mubr.bf16.mxu0 %v948
  %2184 = vmatmul.mubr.bf16.gmra.mrb[0].mxu0 %v947
  %v2185 = vpop.f32.mrb[0].mxu0
  %v2186 = vadd.f32 %v638, %v2185
  %v2187 = vpop.f32.mrb[0].mxu0
  %v2188 = vpop.f32.mrb[0].mxu0
  %v2189 = vadd.f32 %v638, %v2188
  %v2190 = vpop.f32.mrb[0].mxu0
  %2191 = vmatprep.mubr.bf16.mxu0 %v970
  %2192 = vmatmul.mubr.bf16.gmra.mrb[0].mxu0 %v969
  %v2193 = vpop.f32.mrb[0].mxu0
  %v2194 = vadd.f32 %v638, %v2193
  %v2195 = vpop.f32.mrb[0].mxu0
  %v2196 = vpop.f32.mrb[0].mxu0
  %v2197 = vadd.f32 %v638, %v2196
  %v2198 = vpop.f32.mrb[0].mxu0
  %2199 = vdwg.mxu0
  %2200 = vmatprep.subr.bf16.mxu0 0
  %2201 = vmatpush1.bf16.msra.mxu0 %v1799
  %2202 = vmatprep.subr.bf16.mxu0 0
  %2203 = vmatpush1.bf16.msra.mxu0 %v1800
  %2204 = vmatprep.subr.bf16.mxu0 0
  %2205 = vmatpush1.bf16.msra.mxu0 %v1801
  %2206 = vmatprep.subr.bf16.mxu0 0
  %2207 = vmatpush1.bf16.msra.mxu0 %v1802
  %2208 = vmatprep.subr.bf16.mxu0 0
  %2209 = vmatpush1.bf16.msra.mxu0 %v1803
  %2210 = vmatprep.subr.bf16.mxu0 0
  %2211 = vmatpush1.bf16.msra.mxu0 %v1804
  %2212 = vmatprep.subr.bf16.mxu0 0
  %2213 = vmatpush1.bf16.msra.mxu0 %v1805
  %2214 = vmatprep.subr.bf16.mxu0 0
  %2215 = vmatpush1.bf16.msra.mxu0 %v1806
  %2216 = vmatprep.subr.bf16.mxu0 0
  %2217 = vmatpush1.bf16.msra.mxu0 %v1807
  %2218 = vmatprep.subr.bf16.mxu0 0
  %2219 = vmatpush1.bf16.msra.mxu0 %v1808
  %2220 = vmatprep.subr.bf16.mxu0 0
  %2221 = vmatpush1.bf16.msra.mxu0 %v1809
  %2222 = vmatprep.subr.bf16.mxu0 0
  %2223 = vmatpush1.bf16.msra.mxu0 %v1810
  %2224 = vmatprep.subr.bf16.mxu0 0
  %2225 = vmatpush1.bf16.msra.mxu0 %v1811
  %2226 = vmatprep.subr.bf16.mxu0 0
  %2227 = vmatpush1.bf16.msra.mxu0 %v1812
  %2228 = vmatprep.subr.bf16.mxu0 0
  %2229 = vmatpush1.bf16.msra.mxu0 %v1813
  %2230 = vmatprep.subr.bf16.mxu0 0
  %2231 = vmatpush1.bf16.msra.mxu0 %v1814
  %2232 = vmatprep.mubr.bf16.mxu0 %v906
  %2233 = vmatmul.mubr.bf16.gmra.mrb[0].mxu0 %v905
  %v2234 = vpop.f32.mrb[0].mxu0
  %v2235 = vadd.f32 %v2170, %v2234
  %v2236 = vpop.f32.mrb[0].mxu0
  %v2237 = vpop.f32.mrb[0].mxu0
  %v2238 = vadd.f32 %v2173, %v2237
  %v2239 = vpop.f32.mrb[0].mxu0
  %2240 = vmatprep.mubr.bf16.mxu0 %v928
  %2241 = vmatmul.mubr.bf16.gmra.mrb[0].mxu0 %v927
  %v2242 = vpop.f32.mrb[0].mxu0
  %v2243 = vadd.f32 %v2178, %v2242
  %v2244 = vpop.f32.mrb[0].mxu0
  %v2245 = vpop.f32.mrb[0].mxu0
  %v2246 = vadd.f32 %v2181, %v2245
  %v2247 = vpop.f32.mrb[0].mxu0
  %2248 = vmatprep.mubr.bf16.mxu0 %v950
  %2249 = vmatmul.mubr.bf16.gmra.mrb[0].mxu0 %v949
  %v2250 = vpop.f32.mrb[0].mxu0
  %v2251 = vadd.f32 %v2186, %v2250
  %v2252 = vpop.f32.mrb[0].mxu0
  %v2253 = vpop.f32.mrb[0].mxu0
  %v2254 = vadd.f32 %v2189, %v2253
  %v2255 = vpop.f32.mrb[0].mxu0
  %2256 = vmatprep.mubr.bf16.mxu0 %v972
  %2257 = vmatmul.mubr.bf16.gmra.mrb[0].mxu0 %v971
  %v2258 = vpop.f32.mrb[0].mxu0
  %v2259 = vadd.f32 %v2194, %v2258
  %v2260 = vpop.f32.mrb[0].mxu0
  %v2261 = vpop.f32.mrb[0].mxu0
  %v2262 = vadd.f32 %v2197, %v2261
  %v2263 = vpop.f32.mrb[0].mxu0
  %2264 = vdwg.mxu0
  %2265 = vmatprep.subr.bf16.mxu0 0
  %2266 = vmatpush1.bf16.msra.mxu0 %v1815
  %2267 = vmatprep.subr.bf16.mxu0 0
  %2268 = vmatpush1.bf16.msra.mxu0 %v1816
  %2269 = vmatprep.subr.bf16.mxu0 0
  %2270 = vmatpush1.bf16.msra.mxu0 %v1817
  %2271 = vmatprep.subr.bf16.mxu0 0
  %2272 = vmatpush1.bf16.msra.mxu0 %v1818
  %2273 = vmatprep.subr.bf16.mxu0 0
  %2274 = vmatpush1.bf16.msra.mxu0 %v1819
  %2275 = vmatprep.subr.bf16.mxu0 0
  %2276 = vmatpush1.bf16.msra.mxu0 %v1820
  %2277 = vmatprep.subr.bf16.mxu0 0
  %2278 = vmatpush1.bf16.msra.mxu0 %v1821
  %2279 = vmatprep.subr.bf16.mxu0 0
  %2280 = vmatpush1.bf16.msra.mxu0 %v1822
  %2281 = vmatprep.subr.bf16.mxu0 0
  %2282 = vmatpush1.bf16.msra.mxu0 %v1823
  %2283 = vmatprep.subr.bf16.mxu0 0
  %2284 = vmatpush1.bf16.msra.mxu0 %v1824
  %2285 = vmatprep.subr.bf16.mxu0 0
  %2286 = vmatpush1.bf16.msra.mxu0 %v1825
  %2287 = vmatprep.subr.bf16.mxu0 0
  %2288 = vmatpush1.bf16.msra.mxu0 %v1826
  %2289 = vmatprep.subr.bf16.mxu0 0
  %2290 = vmatpush1.bf16.msra.mxu0 %v1827
  %2291 = vmatprep.subr.bf16.mxu0 0
  %2292 = vmatpush1.bf16.msra.mxu0 %v1828
  %2293 = vmatprep.subr.bf16.mxu0 0
  %2294 = vmatpush1.bf16.msra.mxu0 %v1829
  %2295 = vmatprep.subr.bf16.mxu0 0
  %2296 = vmatpush1.bf16.msra.mxu0 %v1830
  %2297 = vmatprep.mubr.bf16.mxu0 %v908
  %2298 = vmatmul.mubr.bf16.gmra.mrb[0].mxu0 %v907
  %v2299 = vpop.f32.mrb[0].mxu0
  %v2300 = vadd.f32 %v2235, %v2299
  %v2301 = vpop.f32.mrb[0].mxu0
  %v2302 = vpop.f32.mrb[0].mxu0
  %v2303 = vadd.f32 %v2238, %v2302
  %v2304 = vpop.f32.mrb[0].mxu0
  %2305 = vmatprep.mubr.bf16.mxu0 %v930
  %2306 = vmatmul.mubr.bf16.gmra.mrb[0].mxu0 %v929
  %v2307 = vpop.f32.mrb[0].mxu0
  %v2308 = vadd.f32 %v2243, %v2307
  %v2309 = vpop.f32.mrb[0].mxu0
  %v2310 = vpop.f32.mrb[0].mxu0
  %v2311 = vadd.f32 %v2246, %v2310
  %v2312 = vpop.f32.mrb[0].mxu0
  %2313 = vmatprep.mubr.bf16.mxu0 %v952
  %2314 = vmatmul.mubr.bf16.gmra.mrb[0].mxu0 %v951
  %v2315 = vpop.f32.mrb[0].mxu0
  %v2316 = vadd.f32 %v2251, %v2315
  %v2317 = vpop.f32.mrb[0].mxu0
  %v2318 = vpop.f32.mrb[0].mxu0
  %v2319 = vadd.f32 %v2254, %v2318
  %v2320 = vpop.f32.mrb[0].mxu0
  %2321 = vmatprep.mubr.bf16.mxu0 %v974
  %2322 = vmatmul.mubr.bf16.gmra.mrb[0].mxu0 %v973
  %v2323 = vpop.f32.mrb[0].mxu0
  %v2324 = vadd.f32 %v2259, %v2323
  %v2325 = vpop.f32.mrb[0].mxu0
  %v2326 = vpop.f32.mrb[0].mxu0
  %v2327 = vadd.f32 %v2262, %v2326
  %v2328 = vpop.f32.mrb[0].mxu0
  %2329 = vdwg.mxu0
  %2330 = vmatprep.subr.bf16.mxu0 0
  %2331 = vmatpush1.bf16.msra.mxu0 %v1831
  %2332 = vmatprep.subr.bf16.mxu0 0
  %2333 = vmatpush1.bf16.msra.mxu0 %v1832
  %2334 = vmatprep.subr.bf16.mxu0 0
  %2335 = vmatpush1.bf16.msra.mxu0 %v1833
  %2336 = vmatprep.subr.bf16.mxu0 0
  %2337 = vmatpush1.bf16.msra.mxu0 %v1834
  %2338 = vmatprep.subr.bf16.mxu0 0
  %2339 = vmatpush1.bf16.msra.mxu0 %v1835
  %2340 = vmatprep.subr.bf16.mxu0 0
  %2341 = vmatpush1.bf16.msra.mxu0 %v1836
  %2342 = vmatprep.subr.bf16.mxu0 0
  %2343 = vmatpush1.bf16.msra.mxu0 %v1837
  %2344 = vmatprep.subr.bf16.mxu0 0
  %2345 = vmatpush1.bf16.msra.mxu0 %v1838
  %2346 = vmatprep.subr.bf16.mxu0 0
  %2347 = vmatpush1.bf16.msra.mxu0 %v1839
  %2348 = vmatprep.subr.bf16.mxu0 0
  %2349 = vmatpush1.bf16.msra.mxu0 %v1840
  %2350 = vmatprep.subr.bf16.mxu0 0
  %2351 = vmatpush1.bf16.msra.mxu0 %v1841
  %2352 = vmatprep.subr.bf16.mxu0 0
  %2353 = vmatpush1.bf16.msra.mxu0 %v1842
  %2354 = vmatprep.subr.bf16.mxu0 0
  %2355 = vmatpush1.bf16.msra.mxu0 %v1843
  %2356 = vmatprep.subr.bf16.mxu0 0
  %2357 = vmatpush1.bf16.msra.mxu0 %v1844
  %2358 = vmatprep.subr.bf16.mxu0 0
  %2359 = vmatpush1.bf16.msra.mxu0 %v1845
  %2360 = vmatprep.subr.bf16.mxu0 0
  %2361 = vmatpush1.bf16.msra.mxu0 %v1846
  %2362 = vmatprep.mubr.bf16.mxu0 %v910
  %2363 = vmatmul.mubr.bf16.gmra.mrb[0].mxu0 %v909
  %v2364 = vpop.f32.mrb[0].mxu0
  %v2365 = vadd.f32 %v2300, %v2364
  %v2366 = vpop.f32.mrb[0].mxu0
  %v2367 = vpop.f32.mrb[0].mxu0
  %v2368 = vadd.f32 %v2303, %v2367
  %v2369 = vpop.f32.mrb[0].mxu0
  %2370 = vmatprep.mubr.bf16.mxu0 %v932
  %2371 = vmatmul.mubr.bf16.gmra.mrb[0].mxu0 %v931
  %v2372 = vpop.f32.mrb[0].mxu0
  %v2373 = vadd.f32 %v2308, %v2372
  %v2374 = vpop.f32.mrb[0].mxu0
  %v2375 = vpop.f32.mrb[0].mxu0
  %v2376 = vadd.f32 %v2311, %v2375
  %v2377 = vpop.f32.mrb[0].mxu0
  %2378 = vmatprep.mubr.bf16.mxu0 %v954
  %2379 = vmatmul.mubr.bf16.gmra.mrb[0].mxu0 %v953
  %v2380 = vpop.f32.mrb[0].mxu0
  %v2381 = vadd.f32 %v2316, %v2380
  %v2382 = vpop.f32.mrb[0].mxu0
  %v2383 = vpop.f32.mrb[0].mxu0
  %v2384 = vadd.f32 %v2319, %v2383
  %v2385 = vpop.f32.mrb[0].mxu0
  %2386 = vmatprep.mubr.bf16.mxu0 %v976
  %2387 = vmatmul.mubr.bf16.gmra.mrb[0].mxu0 %v975
  %v2388 = vpop.f32.mrb[0].mxu0
  %v2389 = vadd.f32 %v2324, %v2388
  %v2390 = vpop.f32.mrb[0].mxu0
  %v2391 = vpop.f32.mrb[0].mxu0
  %v2392 = vadd.f32 %v2327, %v2391
  %v2393 = vpop.f32.mrb[0].mxu0
  %2394 = vdwg.mxu0
  %2395 = vmatprep.subr.bf16.mxu0 0
  %2396 = vmatpush1.bf16.msra.mxu0 %v1847
  %2397 = vmatprep.subr.bf16.mxu0 0
  %2398 = vmatpush1.bf16.msra.mxu0 %v1848
  %2399 = vmatprep.subr.bf16.mxu0 0
  %2400 = vmatpush1.bf16.msra.mxu0 %v1849
  %2401 = vmatprep.subr.bf16.mxu0 0
  %2402 = vmatpush1.bf16.msra.mxu0 %v1850
  %2403 = vmatprep.subr.bf16.mxu0 0
  %2404 = vmatpush1.bf16.msra.mxu0 %v1851
  %2405 = vmatprep.subr.bf16.mxu0 0
  %2406 = vmatpush1.bf16.msra.mxu0 %v1852
  %2407 = vmatprep.subr.bf16.mxu0 0
  %2408 = vmatpush1.bf16.msra.mxu0 %v1853
  %2409 = vmatprep.subr.bf16.mxu0 0
  %2410 = vmatpush1.bf16.msra.mxu0 %v1854
  %2411 = vmatprep.subr.bf16.mxu0 0
  %2412 = vmatpush1.bf16.msra.mxu0 %v1855
  %2413 = vmatprep.subr.bf16.mxu0 0
  %2414 = vmatpush1.bf16.msra.mxu0 %v1856
  %2415 = vmatprep.subr.bf16.mxu0 0
  %2416 = vmatpush1.bf16.msra.mxu0 %v1857
  %2417 = vmatprep.subr.bf16.mxu0 0
  %2418 = vmatpush1.bf16.msra.mxu0 %v1858
  %2419 = vmatprep.subr.bf16.mxu0 0
  %2420 = vmatpush1.bf16.msra.mxu0 %v1859
  %2421 = vmatprep.subr.bf16.mxu0 0
  %2422 = vmatpush1.bf16.msra.mxu0 %v1860
  %2423 = vmatprep.subr.bf16.mxu0 0
  %2424 = vmatpush1.bf16.msra.mxu0 %v1861
  %2425 = vmatprep.subr.bf16.mxu0 0
  %2426 = vmatpush1.bf16.msra.mxu0 %v1862
  %2427 = vmatprep.mubr.bf16.mxu0 %v912
  %2428 = vmatmul.mubr.bf16.gmra.mrb[0].mxu0 %v911
  %v2429 = vpop.f32.mrb[0].mxu0
  %v2430 = vadd.f32 %v2365, %v2429
  %v2431 = vpop.f32.mrb[0].mxu0
  %v2432 = vpop.f32.mrb[0].mxu0
  %v2433 = vadd.f32 %v2368, %v2432
  %v2434 = vpop.f32.mrb[0].mxu0
  %2435 = vmatprep.mubr.bf16.mxu0 %v934
  %2436 = vmatmul.mubr.bf16.gmra.mrb[0].mxu0 %v933
  %v2437 = vpop.f32.mrb[0].mxu0
  %v2438 = vadd.f32 %v2373, %v2437
  %v2439 = vpop.f32.mrb[0].mxu0
  %v2440 = vpop.f32.mrb[0].mxu0
  %v2441 = vadd.f32 %v2376, %v2440
  %v2442 = vpop.f32.mrb[0].mxu0
  %2443 = vmatprep.mubr.bf16.mxu0 %v956
  %2444 = vmatmul.mubr.bf16.gmra.mrb[0].mxu0 %v955
  %v2445 = vpop.f32.mrb[0].mxu0
  %v2446 = vadd.f32 %v2381, %v2445
  %v2447 = vpop.f32.mrb[0].mxu0
  %v2448 = vpop.f32.mrb[0].mxu0
  %v2449 = vadd.f32 %v2384, %v2448
  %v2450 = vpop.f32.mrb[0].mxu0
  %2451 = vmatprep.mubr.bf16.mxu0 %v978
  %2452 = vmatmul.mubr.bf16.gmra.mrb[0].mxu0 %v977
  %v2453 = vpop.f32.mrb[0].mxu0
  %v2454 = vadd.f32 %v2389, %v2453
  %v2455 = vpop.f32.mrb[0].mxu0
  %v2456 = vpop.f32.mrb[0].mxu0
  %v2457 = vadd.f32 %v2392, %v2456
  %v2458 = vpop.f32.mrb[0].mxu0
  %2459 = vdwg.mxu0
  %2460 = vmatprep.subr.bf16.mxu0 0
  %2461 = vmatpush1.bf16.msra.mxu0 %v1863
  %2462 = vmatprep.subr.bf16.mxu0 0
  %2463 = vmatpush1.bf16.msra.mxu0 %v1864
  %2464 = vmatprep.subr.bf16.mxu0 0
  %2465 = vmatpush1.bf16.msra.mxu0 %v1865
  %2466 = vmatprep.subr.bf16.mxu0 0
  %2467 = vmatpush1.bf16.msra.mxu0 %v1866
  %2468 = vmatprep.subr.bf16.mxu0 0
  %2469 = vmatpush1.bf16.msra.mxu0 %v1867
  %2470 = vmatprep.subr.bf16.mxu0 0
  %2471 = vmatpush1.bf16.msra.mxu0 %v1868
  %2472 = vmatprep.subr.bf16.mxu0 0
  %2473 = vmatpush1.bf16.msra.mxu0 %v1869
  %2474 = vmatprep.subr.bf16.mxu0 0
  %2475 = vmatpush1.bf16.msra.mxu0 %v1870
  %2476 = vmatprep.subr.bf16.mxu0 0
  %2477 = vmatpush1.bf16.msra.mxu0 %v1871
  %2478 = vmatprep.subr.bf16.mxu0 0
  %2479 = vmatpush1.bf16.msra.mxu0 %v1872
  %2480 = vmatprep.subr.bf16.mxu0 0
  %2481 = vmatpush1.bf16.msra.mxu0 %v1873
  %2482 = vmatprep.subr.bf16.mxu0 0
  %2483 = vmatpush1.bf16.msra.mxu0 %v1874
  %2484 = vmatprep.subr.bf16.mxu0 0
  %2485 = vmatpush1.bf16.msra.mxu0 %v1875
  %2486 = vmatprep.subr.bf16.mxu0 0
  %2487 = vmatpush1.bf16.msra.mxu0 %v1876
  %2488 = vmatprep.subr.bf16.mxu0 0
  %2489 = vmatpush1.bf16.msra.mxu0 %v1877
  %2490 = vmatprep.subr.bf16.mxu0 0
  %2491 = vmatpush1.bf16.msra.mxu0 %v1878
  %2492 = vmatprep.mubr.bf16.mxu0 %v914
  %2493 = vmatmul.mubr.bf16.gmra.mrb[0].mxu0 %v913
  %v2494 = vpop.f32.mrb[0].mxu0
  %v2495 = vadd.f32 %v2430, %v2494
  %v2496 = vpop.f32.mrb[0].mxu0
  %v2497 = vpop.f32.mrb[0].mxu0
  %v2498 = vadd.f32 %v2433, %v2497
  %v2499 = vpop.f32.mrb[0].mxu0
  %2500 = vmatprep.mubr.bf16.mxu0 %v936
  %2501 = vmatmul.mubr.bf16.gmra.mrb[0].mxu0 %v935
  %v2502 = vpop.f32.mrb[0].mxu0
  %v2503 = vadd.f32 %v2438, %v2502
  %v2504 = vpop.f32.mrb[0].mxu0
  %v2505 = vpop.f32.mrb[0].mxu0
  %v2506 = vadd.f32 %v2441, %v2505
  %v2507 = vpop.f32.mrb[0].mxu0
  %2508 = vmatprep.mubr.bf16.mxu0 %v958
  %2509 = vmatmul.mubr.bf16.gmra.mrb[0].mxu0 %v957
  %v2510 = vpop.f32.mrb[0].mxu0
  %v2511 = vadd.f32 %v2446, %v2510
  %v2512 = vpop.f32.mrb[0].mxu0
  %v2513 = vpop.f32.mrb[0].mxu0
  %v2514 = vadd.f32 %v2449, %v2513
  %v2515 = vpop.f32.mrb[0].mxu0
  %2516 = vmatprep.mubr.bf16.mxu0 %v980
  %2517 = vmatmul.mubr.bf16.gmra.mrb[0].mxu0 %v979
  %v2518 = vpop.f32.mrb[0].mxu0
  %v2519 = vadd.f32 %v2454, %v2518
  %v2520 = vpop.f32.mrb[0].mxu0
  %v2521 = vpop.f32.mrb[0].mxu0
  %v2522 = vadd.f32 %v2457, %v2521
  %v2523 = vpop.f32.mrb[0].mxu0
  %2524 = vdwg.mxu0
  %2525 = vmatprep.subr.bf16.mxu0 0
  %2526 = vmatpush1.bf16.msra.mxu0 %v1879
  %2527 = vmatprep.subr.bf16.mxu0 0
  %2528 = vmatpush1.bf16.msra.mxu0 %v1880
  %2529 = vmatprep.subr.bf16.mxu0 0
  %2530 = vmatpush1.bf16.msra.mxu0 %v1881
  %2531 = vmatprep.subr.bf16.mxu0 0
  %2532 = vmatpush1.bf16.msra.mxu0 %v1882
  %2533 = vmatprep.subr.bf16.mxu0 0
  %2534 = vmatpush1.bf16.msra.mxu0 %v1883
  %2535 = vmatprep.subr.bf16.mxu0 0
  %2536 = vmatpush1.bf16.msra.mxu0 %v1884
  %2537 = vmatprep.subr.bf16.mxu0 0
  %2538 = vmatpush1.bf16.msra.mxu0 %v1885
  %2539 = vmatprep.subr.bf16.mxu0 0
  %2540 = vmatpush1.bf16.msra.mxu0 %v1886
  %2541 = vmatprep.subr.bf16.mxu0 0
  %2542 = vmatpush1.bf16.msra.mxu0 %v1887
  %2543 = vmatprep.subr.bf16.mxu0 0
  %2544 = vmatpush1.bf16.msra.mxu0 %v1888
  %2545 = vmatprep.subr.bf16.mxu0 0
  %2546 = vmatpush1.bf16.msra.mxu0 %v1889
  %2547 = vmatprep.subr.bf16.mxu0 0
  %2548 = vmatpush1.bf16.msra.mxu0 %v1890
  %2549 = vmatprep.subr.bf16.mxu0 0
  %2550 = vmatpush1.bf16.msra.mxu0 %v1891
  %2551 = vmatprep.subr.bf16.mxu0 0
  %2552 = vmatpush1.bf16.msra.mxu0 %v1892
  %2553 = vmatprep.subr.bf16.mxu0 0
  %2554 = vmatpush1.bf16.msra.mxu0 %v1893
  %2555 = vmatprep.subr.bf16.mxu0 0
  %2556 = vmatpush1.bf16.msra.mxu0 %v1894
  %2557 = vmatprep.mubr.bf16.mxu0 %v916
  %2558 = vmatmul.mubr.bf16.gmra.mrb[0].mxu0 %v915
  %v2559 = vpop.f32.mrb[0].mxu0
  %v2560 = vadd.f32 %v2495, %v2559
  %v2561 = vpop.f32.mrb[0].mxu0
  %v2562 = vpop.f32.mrb[0].mxu0
  %v2563 = vadd.f32 %v2498, %v2562
  %v2564 = vpop.f32.mrb[0].mxu0
  %2565 = vmatprep.mubr.bf16.mxu0 %v938
  %2566 = vmatmul.mubr.bf16.gmra.mrb[0].mxu0 %v937
  %v2567 = vpop.f32.mrb[0].mxu0
  %v2568 = vadd.f32 %v2503, %v2567
  %v2569 = vpop.f32.mrb[0].mxu0
  %v2570 = vpop.f32.mrb[0].mxu0
  %v2571 = vadd.f32 %v2506, %v2570
  %v2572 = vpop.f32.mrb[0].mxu0
  %2573 = vmatprep.mubr.bf16.mxu0 %v960
  %2574 = vmatmul.mubr.bf16.gmra.mrb[0].mxu0 %v959
  %v2575 = vpop.f32.mrb[0].mxu0
  %v2576 = vadd.f32 %v2511, %v2575
  %v2577 = vpop.f32.mrb[0].mxu0
  %v2578 = vpop.f32.mrb[0].mxu0
  %v2579 = vadd.f32 %v2514, %v2578
  %v2580 = vpop.f32.mrb[0].mxu0
  %2581 = vmatprep.mubr.bf16.mxu0 %v982
  %2582 = vmatmul.mubr.bf16.gmra.mrb[0].mxu0 %v981
  %v2583 = vpop.f32.mrb[0].mxu0
  %v2584 = vadd.f32 %v2519, %v2583
  %v2585 = vpop.f32.mrb[0].mxu0
  %v2586 = vpop.f32.mrb[0].mxu0
  %v2587 = vadd.f32 %v2522, %v2586
  %v2588 = vpop.f32.mrb[0].mxu0
  %2589 = vdwg.mxu0
  %2590 = vmatprep.subr.bf16.mxu0 0
  %2591 = vmatpush1.bf16.msra.mxu0 %v1895
  %2592 = vmatprep.subr.bf16.mxu0 0
  %2593 = vmatpush1.bf16.msra.mxu0 %v1896
  %2594 = vmatprep.subr.bf16.mxu0 0
  %2595 = vmatpush1.bf16.msra.mxu0 %v1897
  %2596 = vmatprep.subr.bf16.mxu0 0
  %2597 = vmatpush1.bf16.msra.mxu0 %v1898
  %2598 = vmatprep.subr.bf16.mxu0 0
  %2599 = vmatpush1.bf16.msra.mxu0 %v1899
  %2600 = vmatprep.subr.bf16.mxu0 0
  %2601 = vmatpush1.bf16.msra.mxu0 %v1900
  %2602 = vmatprep.subr.bf16.mxu0 0
  %2603 = vmatpush1.bf16.msra.mxu0 %v1901
  %2604 = vmatprep.subr.bf16.mxu0 0
  %2605 = vmatpush1.bf16.msra.mxu0 %v1902
  %2606 = vmatprep.subr.bf16.mxu0 0
  %2607 = vmatpush1.bf16.msra.mxu0 %v1903
  %2608 = vmatprep.subr.bf16.mxu0 0
  %2609 = vmatpush1.bf16.msra.mxu0 %v1904
  %2610 = vmatprep.subr.bf16.mxu0 0
  %2611 = vmatpush1.bf16.msra.mxu0 %v1905
  %2612 = vmatprep.subr.bf16.mxu0 0
  %2613 = vmatpush1.bf16.msra.mxu0 %v1906
  %2614 = vmatprep.subr.bf16.mxu0 0
  %2615 = vmatpush1.bf16.msra.mxu0 %v1907
  %2616 = vmatprep.subr.bf16.mxu0 0
  %2617 = vmatpush1.bf16.msra.mxu0 %v1908
  %2618 = vmatprep.subr.bf16.mxu0 0
  %2619 = vmatpush1.bf16.msra.mxu0 %v1909
  %2620 = vmatprep.subr.bf16.mxu0 0
  %2621 = vmatpush1.bf16.msra.mxu0 %v1910
  %2622 = vmatprep.mubr.bf16.mxu0 %v918
  %2623 = vmatmul.mubr.bf16.gmra.mrb[0].mxu0 %v917
  %v2624 = vpop.f32.mrb[0].mxu0
  %v2625 = vadd.f32 %v2560, %v2624
  %v2626 = vpop.f32.mrb[0].mxu0
  %v2627 = vpop.f32.mrb[0].mxu0
  %v2628 = vadd.f32 %v2563, %v2627
  %v2629 = vpop.f32.mrb[0].mxu0
  %2630 = vmatprep.mubr.bf16.mxu0 %v940
  %2631 = vmatmul.mubr.bf16.gmra.mrb[0].mxu0 %v939
  %v2632 = vpop.f32.mrb[0].mxu0
  %v2633 = vadd.f32 %v2568, %v2632
  %v2634 = vpop.f32.mrb[0].mxu0
  %v2635 = vpop.f32.mrb[0].mxu0
  %v2636 = vadd.f32 %v2571, %v2635
  %v2637 = vpop.f32.mrb[0].mxu0
  %2638 = vmatprep.mubr.bf16.mxu0 %v962
  %2639 = vmatmul.mubr.bf16.gmra.mrb[0].mxu0 %v961
  %v2640 = vpop.f32.mrb[0].mxu0
  %v2641 = vadd.f32 %v2576, %v2640
  %v2642 = vpop.f32.mrb[0].mxu0
  %v2643 = vpop.f32.mrb[0].mxu0
  %v2644 = vadd.f32 %v2579, %v2643
  %v2645 = vpop.f32.mrb[0].mxu0
  %2646 = vmatprep.mubr.bf16.mxu0 %v984
  %2647 = vmatmul.mubr.bf16.gmra.mrb[0].mxu0 %v983
  %v2648 = vpop.f32.mrb[0].mxu0
  %v2649 = vadd.f32 %v2584, %v2648
  %v2650 = vpop.f32.mrb[0].mxu0
  %v2651 = vpop.f32.mrb[0].mxu0
  %v2652 = vadd.f32 %v2587, %v2651
  %v2653 = vpop.f32.mrb[0].mxu0
  %2654 = vdwg.mxu0
  %2655 = vmatprep.subr.bf16.mxu0 0
  %2656 = vmatpush1.bf16.msra.mxu0 %v1911
  %2657 = vmatprep.subr.bf16.mxu0 0
  %2658 = vmatpush1.bf16.msra.mxu0 %v1912
  %2659 = vmatprep.subr.bf16.mxu0 0
  %2660 = vmatpush1.bf16.msra.mxu0 %v1913
  %2661 = vmatprep.subr.bf16.mxu0 0
  %2662 = vmatpush1.bf16.msra.mxu0 %v1914
  %2663 = vmatprep.subr.bf16.mxu0 0
  %2664 = vmatpush1.bf16.msra.mxu0 %v1915
  %2665 = vmatprep.subr.bf16.mxu0 0
  %2666 = vmatpush1.bf16.msra.mxu0 %v1916
  %2667 = vmatprep.subr.bf16.mxu0 0
  %2668 = vmatpush1.bf16.msra.mxu0 %v1917
  %2669 = vmatprep.subr.bf16.mxu0 0
  %2670 = vmatpush1.bf16.msra.mxu0 %v1918
  %2671 = vmatprep.subr.bf16.mxu0 0
  %2672 = vmatpush1.bf16.msra.mxu0 %v1919
  %2673 = vmatprep.subr.bf16.mxu0 0
  %2674 = vmatpush1.bf16.msra.mxu0 %v1920
  %2675 = vmatprep.subr.bf16.mxu0 0
  %2676 = vmatpush1.bf16.msra.mxu0 %v1921
  %2677 = vmatprep.subr.bf16.mxu0 0
  %2678 = vmatpush1.bf16.msra.mxu0 %v1922
  %2679 = vmatprep.subr.bf16.mxu0 0
  %2680 = vmatpush1.bf16.msra.mxu0 %v1923
  %2681 = vmatprep.subr.bf16.mxu0 0
  %2682 = vmatpush1.bf16.msra.mxu0 %v1924
  %2683 = vmatprep.subr.bf16.mxu0 0
  %2684 = vmatpush1.bf16.msra.mxu0 %v1925
  %2685 = vmatprep.subr.bf16.mxu0 0
  %2686 = vmatpush1.bf16.msra.mxu0 %v1926
  %2687 = vmatprep.mubr.bf16.mxu0 %v920
  %2688 = vmatmul.mubr.bf16.gmra.mrb[0].mxu0 %v919
  %v2689 = vpop.f32.mrb[0].mxu0
  %v2690 = vadd.f32 %v2625, %v2689
  %v2691 = vpop.f32.mrb[0].mxu0
  %v2692 = vpop.f32.mrb[0].mxu0
  %v2693 = vadd.f32 %v2628, %v2692
  %v2694 = vpop.f32.mrb[0].mxu0
  %2695 = vmatprep.mubr.bf16.mxu0 %v942
  %2696 = vmatmul.mubr.bf16.gmra.mrb[0].mxu0 %v941
  %v2697 = vpop.f32.mrb[0].mxu0
  %v2698 = vadd.f32 %v2633, %v2697
  %v2699 = vpop.f32.mrb[0].mxu0
  %v2700 = vpop.f32.mrb[0].mxu0
  %v2701 = vadd.f32 %v2636, %v2700
  %v2702 = vpop.f32.mrb[0].mxu0
  %2703 = vmatprep.mubr.bf16.mxu0 %v964
  %2704 = vmatmul.mubr.bf16.gmra.mrb[0].mxu0 %v963
  %v2705 = vpop.f32.mrb[0].mxu0
  %v2706 = vadd.f32 %v2641, %v2705
  %v2707 = vpop.f32.mrb[0].mxu0
  %v2708 = vpop.f32.mrb[0].mxu0
  %v2709 = vadd.f32 %v2644, %v2708
  %v2710 = vpop.f32.mrb[0].mxu0
  %2711 = vmatprep.mubr.bf16.mxu0 %v986
  %2712 = vmatmul.mubr.bf16.gmra.mrb[0].mxu0 %v985
  %v2713 = vpop.f32.mrb[0].mxu0
  %v2714 = vadd.f32 %v2649, %v2713
  %v2715 = vpop.f32.mrb[0].mxu0
  %v2716 = vpop.f32.mrb[0].mxu0
  %v2717 = vadd.f32 %v2652, %v2716
  %v2718 = vpop.f32.mrb[0].mxu0
  %2719 = vdwg.mxu0
  %2720 = vmatprep.subr.bf16.mxu0 0
  %2721 = vmatpush1.bf16.msra.mxu0 %v1927
  %2722 = vmatprep.subr.bf16.mxu0 0
  %2723 = vmatpush1.bf16.msra.mxu0 %v1928
  %2724 = vmatprep.subr.bf16.mxu0 0
  %2725 = vmatpush1.bf16.msra.mxu0 %v1929
  %2726 = vmatprep.subr.bf16.mxu0 0
  %2727 = vmatpush1.bf16.msra.mxu0 %v1930
  %2728 = vmatprep.subr.bf16.mxu0 0
  %2729 = vmatpush1.bf16.msra.mxu0 %v1931
  %2730 = vmatprep.subr.bf16.mxu0 0
  %2731 = vmatpush1.bf16.msra.mxu0 %v1932
  %2732 = vmatprep.subr.bf16.mxu0 0
  %2733 = vmatpush1.bf16.msra.mxu0 %v1933
  %2734 = vmatprep.subr.bf16.mxu0 0
  %2735 = vmatpush1.bf16.msra.mxu0 %v1934
  %2736 = vmatprep.subr.bf16.mxu0 0
  %2737 = vmatpush1.bf16.msra.mxu0 %v1935
  %2738 = vmatprep.subr.bf16.mxu0 0
  %2739 = vmatpush1.bf16.msra.mxu0 %v1936
  %2740 = vmatprep.subr.bf16.mxu0 0
  %2741 = vmatpush1.bf16.msra.mxu0 %v1937
  %2742 = vmatprep.subr.bf16.mxu0 0
  %2743 = vmatpush1.bf16.msra.mxu0 %v1938
  %2744 = vmatprep.subr.bf16.mxu0 0
  %2745 = vmatpush1.bf16.msra.mxu0 %v1939
  %2746 = vmatprep.subr.bf16.mxu0 0
  %2747 = vmatpush1.bf16.msra.mxu0 %v1940
  %2748 = vmatprep.subr.bf16.mxu0 0
  %2749 = vmatpush1.bf16.msra.mxu0 %v1941
  %2750 = vmatprep.subr.bf16.mxu0 0
  %2751 = vmatpush1.bf16.msra.mxu0 %v1942
  %2752 = vmatprep.mubr.bf16.mxu0 %v922
  %2753 = vmatmul.mubr.bf16.gmra.mrb[0].mxu0 %v921
  %v2754 = vpop.f32.mrb[0].mxu0
  %v2755 = vadd.f32 %v2690, %v2754
  %v2756 = vpop.f32.mrb[0].mxu0
  %v2757 = vpop.f32.mrb[0].mxu0
  %v2758 = vadd.f32 %v2693, %v2757
  %v2759 = vpop.f32.mrb[0].mxu0
  %2760 = vmatprep.mubr.bf16.mxu0 %v944
  %2761 = vmatmul.mubr.bf16.gmra.mrb[0].mxu0 %v943
  %v2762 = vpop.f32.mrb[0].mxu0
  %v2763 = vadd.f32 %v2698, %v2762
  %v2764 = vpop.f32.mrb[0].mxu0
  %v2765 = vpop.f32.mrb[0].mxu0
  %v2766 = vadd.f32 %v2701, %v2765
  %v2767 = vpop.f32.mrb[0].mxu0
  %2768 = vmatprep.mubr.bf16.mxu0 %v966
  %2769 = vmatmul.mubr.bf16.gmra.mrb[0].mxu0 %v965
  %v2770 = vpop.f32.mrb[0].mxu0
  %v2771 = vadd.f32 %v2706, %v2770
  %v2772 = vpop.f32.mrb[0].mxu0
  %v2773 = vpop.f32.mrb[0].mxu0
  %v2774 = vadd.f32 %v2709, %v2773
  %v2775 = vpop.f32.mrb[0].mxu0
  %2776 = vmatprep.mubr.bf16.mxu0 %v988
  %2777 = vmatmul.mubr.bf16.gmra.mrb[0].mxu0 %v987
  %v2778 = vpop.f32.mrb[0].mxu0
  %v2779 = vadd.f32 %v2714, %v2778
  %v2780 = vpop.f32.mrb[0].mxu0
  %v2781 = vpop.f32.mrb[0].mxu0
  %v2782 = vadd.f32 %v2717, %v2781
  %v2783 = vpop.f32.mrb[0].mxu0
  %2784 = vdwg.mxu0
  %2785 = vmatprep.subr.bf16.mxu0 0
  %2786 = vmatpush1.bf16.msra.mxu0 %v1943
  %2787 = vmatprep.subr.bf16.mxu0 0
  %2788 = vmatpush1.bf16.msra.mxu0 %v1944
  %2789 = vmatprep.subr.bf16.mxu0 0
  %2790 = vmatpush1.bf16.msra.mxu0 %v1945
  %2791 = vmatprep.subr.bf16.mxu0 0
  %2792 = vmatpush1.bf16.msra.mxu0 %v1946
  %2793 = vmatprep.subr.bf16.mxu0 0
  %2794 = vmatpush1.bf16.msra.mxu0 %v1947
  %2795 = vmatprep.subr.bf16.mxu0 0
  %2796 = vmatpush1.bf16.msra.mxu0 %v1948
  %2797 = vmatprep.subr.bf16.mxu0 0
  %2798 = vmatpush1.bf16.msra.mxu0 %v1949
  %2799 = vmatprep.subr.bf16.mxu0 0
  %2800 = vmatpush1.bf16.msra.mxu0 %v1950
  %2801 = vmatprep.subr.bf16.mxu0 0
  %2802 = vmatpush1.bf16.msra.mxu0 %v1951
  %2803 = vmatprep.subr.bf16.mxu0 0
  %2804 = vmatpush1.bf16.msra.mxu0 %v1952
  %2805 = vmatprep.subr.bf16.mxu0 0
  %2806 = vmatpush1.bf16.msra.mxu0 %v1953
  %2807 = vmatprep.subr.bf16.mxu0 0
  %2808 = vmatpush1.bf16.msra.mxu0 %v1954
  %2809 = vmatprep.subr.bf16.mxu0 0
  %2810 = vmatpush1.bf16.msra.mxu0 %v1955
  %2811 = vmatprep.subr.bf16.mxu0 0
  %2812 = vmatpush1.bf16.msra.mxu0 %v1956
  %2813 = vmatprep.subr.bf16.mxu0 0
  %2814 = vmatpush1.bf16.msra.mxu0 %v1957
  %2815 = vmatprep.subr.bf16.mxu0 0
  %2816 = vmatpush1.bf16.msra.mxu0 %v1958
  %2817 = vmatprep.mubr.bf16.mxu0 %v924
  %2818 = vmatmul.mubr.bf16.gmra.mrb[0].mxu0 %v923
  %v2819 = vpop.f32.mrb[0].mxu0
  %v2820 = vadd.f32 %v2755, %v2819
  %v2821 = vpop.f32.mrb[0].mxu0
  %v2822 = vpop.f32.mrb[0].mxu0
  %v2823 = vadd.f32 %v2758, %v2822
  %v2824 = vpop.f32.mrb[0].mxu0
  %2825 = vmatprep.mubr.bf16.mxu0 %v946
  %2826 = vmatmul.mubr.bf16.gmra.mrb[0].mxu0 %v945
  %v2827 = vpop.f32.mrb[0].mxu0
  %v2828 = vadd.f32 %v2763, %v2827
  %v2829 = vpop.f32.mrb[0].mxu0
  %v2830 = vpop.f32.mrb[0].mxu0
  %v2831 = vadd.f32 %v2766, %v2830
  %v2832 = vpop.f32.mrb[0].mxu0
  %2833 = vmatprep.mubr.bf16.mxu0 %v968
  %2834 = vmatmul.mubr.bf16.gmra.mrb[0].mxu0 %v967
  %v2835 = vpop.f32.mrb[0].mxu0
  %v2836 = vadd.f32 %v2771, %v2835
  %v2837 = vpop.f32.mrb[0].mxu0
  %v2838 = vpop.f32.mrb[0].mxu0
  %v2839 = vadd.f32 %v2774, %v2838
  %v2840 = vpop.f32.mrb[0].mxu0
  %2841 = vmatprep.mubr.bf16.mxu0 %v990
  %2842 = vmatmul.mubr.bf16.gmra.mrb[0].mxu0 %v989
  %v2843 = vpop.f32.mrb[0].mxu0
  %v2844 = vadd.f32 %v2779, %v2843
  %v2845 = vpop.f32.mrb[0].mxu0
  %v2846 = vpop.f32.mrb[0].mxu0
  %v2847 = vadd.f32 %v2782, %v2846
  %v2848 = vpop.f32.mrb[0].mxu0
  %2849 = vdwg.mxu0
  %v2850 = vld [vmem:[%s2] sm:$0xff]
  %v2851 = vld [vmem:[%s2 + $0x8] sm:$0xff]
  %v2852 = vld [vmem:[%s2 + $0x10] sm:$0xff]
  %v2853 = vld [vmem:[%s2 + $0x18] sm:$0xff]
  %v2854 = vld [vmem:[%s2 + $0x20] sm:$0xff]
  %v2855 = vld [vmem:[%s2 + $0x28] sm:$0xff]
  %v2856 = vld [vmem:[%s2 + $0x30] sm:$0xff]
  %v2857 = vld [vmem:[%s2 + $0x38] sm:$0xff]
  %v2858 = vld [vmem:[%s2 + $0x40] sm:$0xff]
  %v2859 = vld [vmem:[%s2 + $0x48] sm:$0xff]
  %v2860 = vld [vmem:[%s2 + $0x50] sm:$0xff]
  %v2861 = vld [vmem:[%s2 + $0x58] sm:$0xff]
  %v2862 = vld [vmem:[%s2 + $0x60] sm:$0xff]
  %v2863 = vld [vmem:[%s2 + $0x68] sm:$0xff]
  %v2864 = vld [vmem:[%s2 + $0x70] sm:$0xff]
  %v2865 = vld [vmem:[%s2 + $0x78] sm:$0xff]
  %2866 = vmatprep.subr.mxu0 0.0
  %2867 = vmatpush1.msra.mxu0 %v2850
  %2868 = vmatprep.subr.mxu0 0.0
  %2869 = vmatpush1.msra.mxu0 %v2851
  %2870 = vmatprep.subr.mxu0 0.0
  %2871 = vmatpush1.msra.mxu0 %v2852
  %2872 = vmatprep.subr.mxu0 0.0
  %2873 = vmatpush1.msra.mxu0 %v2853
  %2874 = vmatprep.subr.mxu0 0.0
  %2875 = vmatpush1.msra.mxu0 %v2854
  %2876 = vmatprep.subr.mxu0 0.0
  %2877 = vmatpush1.msra.mxu0 %v2855
  %2878 = vmatprep.subr.mxu0 0.0
  %2879 = vmatpush1.msra.mxu0 %v2856
  %2880 = vmatprep.subr.mxu0 0.0
  %2881 = vmatpush1.msra.mxu0 %v2857
  %2882 = vmatprep.subr.mxu0 0.0
  %2883 = vmatpush1.msra.mxu0 %v2858
  %2884 = vmatprep.subr.mxu0 0.0
  %2885 = vmatpush1.msra.mxu0 %v2859
  %2886 = vmatprep.subr.mxu0 0.0
  %2887 = vmatpush1.msra.mxu0 %v2860
  %2888 = vmatprep.subr.mxu0 0.0
  %2889 = vmatpush1.msra.mxu0 %v2861
  %2890 = vmatprep.subr.mxu0 0.0
  %2891 = vmatpush1.msra.mxu0 %v2862
  %2892 = vmatprep.subr.mxu0 0.0
  %2893 = vmatpush1.msra.mxu0 %v2863
  %2894 = vmatprep.subr.mxu0 0.0
  %2895 = vmatpush1.msra.mxu0 %v2864
  %2896 = vmatprep.subr.mxu0 0.0
  %2897 = vmatpush1.msra.mxu0 %v2865
  %2898 = vmatprep.subr.mxu0 0.0
  %2899 = vmatpush1.msra.mxu0 0.0
  %2900 = vmatprep.subr.mxu0 0.0
  %2901 = vmatpush1.msra.mxu0 0.0
  %2902 = vmatprep.subr.mxu0 0.0
  %2903 = vmatpush1.msra.mxu0 0.0
  %2904 = vmatprep.subr.mxu0 0.0
  %2905 = vmatpush1.msra.mxu0 0.0
  %2906 = vmatprep.subr.mxu0 0.0
  %2907 = vmatpush1.msra.mxu0 0.0
  %2908 = vmatprep.subr.mxu0 0.0
  %2909 = vmatpush1.msra.mxu0 0.0
  %2910 = vmatprep.subr.mxu0 0.0
  %2911 = vmatpush1.msra.mxu0 0.0
  %2912 = vmatprep.subr.mxu0 0.0
  %2913 = vmatpush1.msra.mxu0 0.0
  %2914 = vmatprep.subr.mxu0 0.0
  %2915 = vmatpush1.msra.mxu0 0.0
  %2916 = vmatprep.subr.mxu0 0.0
  %2917 = vmatpush1.msra.mxu0 0.0
  %2918 = vmatprep.subr.mxu0 0.0
  %2919 = vmatpush1.msra.mxu0 0.0
  %2920 = vmatprep.subr.mxu0 0.0
  %2921 = vmatpush1.msra.mxu0 0.0
  %2922 = vmatprep.subr.mxu0 0.0
  %2923 = vmatpush1.msra.mxu0 0.0
  %2924 = vmatprep.subr.mxu0 0.0
  %2925 = vmatpush1.msra.mxu0 0.0
  %2926 = vmatprep.subr.mxu0 0.0
  %2927 = vmatpush1.msra.mxu0 0.0
  %2928 = vmatprep.subr.mxu0 0.0
  %2929 = vmatpush1.msra.mxu0 0.0
  %2930 = vmatprep.mubr.f32.mxu0 0.0
  %2931 = vmatmul.mubr.f32.gmra.mrb[0].mxu0 %v2820
  %v2932 = vpop.f32.mrb[0].mxu0
  %v2933 = vadd.f32 0.0, %v2932
  %v2934 = vpop.f32.mrb[0].mxu0
  %2935 = vmatprep.mubr.f32.mxu0 0.0
  %2936 = vmatmul.mubr.f32.gmra.mrb[0].mxu0 %v2823
  %v2937 = vpop.f32.mrb[0].mxu0
  %v2938 = vadd.f32 0.0, %v2937
  %v2939 = vpop.f32.mrb[0].mxu0
  %2940 = vmatprep.mubr.f32.mxu0 0.0
  %2941 = vmatmul.mubr.f32.gmra.mrb[0].mxu0 %v2828
  %v2942 = vpop.f32.mrb[0].mxu0
  %v2943 = vadd.f32 0.0, %v2942
  %v2944 = vpop.f32.mrb[0].mxu0
  %2945 = vmatprep.mubr.f32.mxu0 0.0
  %2946 = vmatmul.mubr.f32.gmra.mrb[0].mxu0 %v2831
  %v2947 = vpop.f32.mrb[0].mxu0
  %v2948 = vadd.f32 0.0, %v2947
  %v2949 = vpop.f32.mrb[0].mxu0
  %2950 = vmatprep.mubr.f32.mxu0 0.0
  %2951 = vmatmul.mubr.f32.gmra.mrb[0].mxu0 %v2836
  %v2952 = vpop.f32.mrb[0].mxu0
  %v2953 = vadd.f32 0.0, %v2952
  %v2954 = vpop.f32.mrb[0].mxu0
  %2955 = vmatprep.mubr.f32.mxu0 0.0
  %2956 = vmatmul.mubr.f32.gmra.mrb[0].mxu0 %v2839
  %v2957 = vpop.f32.mrb[0].mxu0
  %v2958 = vadd.f32 0.0, %v2957
  %v2959 = vpop.f32.mrb[0].mxu0
  %2960 = vmatprep.mubr.f32.mxu0 0.0
  %2961 = vmatmul.mubr.f32.gmra.mrb[0].mxu0 %v2844
  %v2962 = vpop.f32.mrb[0].mxu0
  %v2963 = vadd.f32 0.0, %v2962
  %v2964 = vpop.f32.mrb[0].mxu0
  %2965 = vmatprep.mubr.f32.mxu0 0.0
  %2966 = vmatmul.mubr.f32.gmra.mrb[0].mxu0 %v2847
  %v2967 = vpop.f32.mrb[0].mxu0
  %v2968 = vadd.f32 0.0, %v2967
  %v2969 = vpop.f32.mrb[0].mxu0
  %2970 = vdwg.mxu0
  %v2971 = vmul.f32 %v2820, %v2820
  %v2972 = vmul.f32 %v2823, %v2823
  %v2973 = vmul.f32 %v2828, %v2828
  %v2974 = vmul.f32 %v2831, %v2831
  %v2975 = vmul.f32 %v2836, %v2836
  %v2976 = vmul.f32 %v2839, %v2839
  %v2977 = vmul.f32 %v2844, %v2844
  %v2978 = vmul.f32 %v2847, %v2847
  %2979 = vmatprep.subr.mxu0 0.0
  %2980 = vmatpush1.msra.mxu0 %v2850
  %2981 = vmatprep.subr.mxu0 0.0
  %2982 = vmatpush1.msra.mxu0 %v2851
  %2983 = vmatprep.subr.mxu0 0.0
  %2984 = vmatpush1.msra.mxu0 %v2852
  %2985 = vmatprep.subr.mxu0 0.0
  %2986 = vmatpush1.msra.mxu0 %v2853
  %2987 = vmatprep.subr.mxu0 0.0
  %2988 = vmatpush1.msra.mxu0 %v2854
  %2989 = vmatprep.subr.mxu0 0.0
  %2990 = vmatpush1.msra.mxu0 %v2855
  %2991 = vmatprep.subr.mxu0 0.0
  %2992 = vmatpush1.msra.mxu0 %v2856
  %2993 = vmatprep.subr.mxu0 0.0
  %2994 = vmatpush1.msra.mxu0 %v2857
  %2995 = vmatprep.subr.mxu0 0.0
  %2996 = vmatpush1.msra.mxu0 %v2858
  %2997 = vmatprep.subr.mxu0 0.0
  %2998 = vmatpush1.msra.mxu0 %v2859
  %2999 = vmatprep.subr.mxu0 0.0
  %3000 = vmatpush1.msra.mxu0 %v2860
  %3001 = vmatprep.subr.mxu0 0.0
  %3002 = vmatpush1.msra.mxu0 %v2861
  %3003 = vmatprep.subr.mxu0 0.0
  %3004 = vmatpush1.msra.mxu0 %v2862
  %3005 = vmatprep.subr.mxu0 0.0
  %3006 = vmatpush1.msra.mxu0 %v2863
  %3007 = vmatprep.subr.mxu0 0.0
  %3008 = vmatpush1.msra.mxu0 %v2864
  %3009 = vmatprep.subr.mxu0 0.0
  %3010 = vmatpush1.msra.mxu0 %v2865
  %3011 = vmatprep.subr.mxu0 0.0
  %3012 = vmatpush1.msra.mxu0 0.0
  %3013 = vmatprep.subr.mxu0 0.0
  %3014 = vmatpush1.msra.mxu0 0.0
  %3015 = vmatprep.subr.mxu0 0.0
  %3016 = vmatpush1.msra.mxu0 0.0
  %3017 = vmatprep.subr.mxu0 0.0
  %3018 = vmatpush1.msra.mxu0 0.0
  %3019 = vmatprep.subr.mxu0 0.0
  %3020 = vmatpush1.msra.mxu0 0.0
  %3021 = vmatprep.subr.mxu0 0.0
  %3022 = vmatpush1.msra.mxu0 0.0
  %3023 = vmatprep.subr.mxu0 0.0
  %3024 = vmatpush1.msra.mxu0 0.0
  %3025 = vmatprep.subr.mxu0 0.0
  %3026 = vmatpush1.msra.mxu0 0.0
  %3027 = vmatprep.subr.mxu0 0.0
  %3028 = vmatpush1.msra.mxu0 0.0
  %3029 = vmatprep.subr.mxu0 0.0
  %3030 = vmatpush1.msra.mxu0 0.0
  %3031 = vmatprep.subr.mxu0 0.0
  %3032 = vmatpush1.msra.mxu0 0.0
  %3033 = vmatprep.subr.mxu0 0.0
  %3034 = vmatpush1.msra.mxu0 0.0
  %3035 = vmatprep.subr.mxu0 0.0
  %3036 = vmatpush1.msra.mxu0 0.0
  %3037 = vmatprep.subr.mxu0 0.0
  %3038 = vmatpush1.msra.mxu0 0.0
  %3039 = vmatprep.subr.mxu0 0.0
  %3040 = vmatpush1.msra.mxu0 0.0
  %3041 = vmatprep.subr.mxu0 0.0
  %3042 = vmatpush1.msra.mxu0 0.0
  %3043 = vmatprep.mubr.f32.mxu0 0.0
  %3044 = vmatmul.mubr.f32.gmra.mrb[0].mxu0 %v2971
  %v3045 = vpop.f32.mrb[0].mxu0
  %v3046 = vadd.f32 0.0, %v3045
  %v3047 = vpop.f32.mrb[0].mxu0
  %3048 = vmatprep.mubr.f32.mxu0 0.0
  %3049 = vmatmul.mubr.f32.gmra.mrb[0].mxu0 %v2972
  %v3050 = vpop.f32.mrb[0].mxu0
  %v3051 = vadd.f32 0.0, %v3050
  %v3052 = vpop.f32.mrb[0].mxu0
  %3053 = vmatprep.mubr.f32.mxu0 0.0
  %3054 = vmatmul.mubr.f32.gmra.mrb[0].mxu0 %v2973
  %v3055 = vpop.f32.mrb[0].mxu0
  %v3056 = vadd.f32 0.0, %v3055
  %v3057 = vpop.f32.mrb[0].mxu0
  %3058 = vmatprep.mubr.f32.mxu0 0.0
  %3059 = vmatmul.mubr.f32.gmra.mrb[0].mxu0 %v2974
  %v3060 = vpop.f32.mrb[0].mxu0
  %v3061 = vadd.f32 0.0, %v3060
  %v3062 = vpop.f32.mrb[0].mxu0
  %3063 = vmatprep.mubr.f32.mxu0 0.0
  %3064 = vmatmul.mubr.f32.gmra.mrb[0].mxu0 %v2975
  %v3065 = vpop.f32.mrb[0].mxu0
  %v3066 = vadd.f32 0.0, %v3065
  %v3067 = vpop.f32.mrb[0].mxu0
  %3068 = vmatprep.mubr.f32.mxu0 0.0
  %3069 = vmatmul.mubr.f32.gmra.mrb[0].mxu0 %v2976
  %v3070 = vpop.f32.mrb[0].mxu0
  %v3071 = vadd.f32 0.0, %v3070
  %v3072 = vpop.f32.mrb[0].mxu0
  %3073 = vmatprep.mubr.f32.mxu0 0.0
  %3074 = vmatmul.mubr.f32.gmra.mrb[0].mxu0 %v2977
  %v3075 = vpop.f32.mrb[0].mxu0
  %v3076 = vadd.f32 0.0, %v3075
  %v3077 = vpop.f32.mrb[0].mxu0
  %3078 = vmatprep.mubr.f32.mxu0 0.0
  %3079 = vmatmul.mubr.f32.gmra.mrb[0].mxu0 %v2978
  %v3080 = vpop.f32.mrb[0].mxu0
  %v3081 = vadd.f32 0.0, %v3080
  %v3082 = vpop.f32.mrb[0].mxu0
  %3083 = vdwg.mxu0
  %v3084 = vmul.f32 %v2933, %v2933
  %v3085 = vmul.f32 %v2938, %v2938
  %v3086 = vmul.f32 %v2943, %v2943
  %v3087 = vmul.f32 %v2948, %v2948
  %v3088 = vmul.f32 %v2953, %v2953
  %v3089 = vmul.f32 %v2958, %v2958
  %v3090 = vmul.f32 %v2963, %v2963
  %v3091 = vmul.f32 %v2968, %v2968
  %v3092 = vsub.f32 %v3046, %v3084
  %v3093 = vsub.f32 %v3051, %v3085
  %v3094 = vsub.f32 %v3056, %v3086
  %v3095 = vsub.f32 %v3061, %v3087
  %v3096 = vsub.f32 %v3066, %v3088
  %v3097 = vsub.f32 %v3071, %v3089
  %v3098 = vsub.f32 %v3076, %v3090
  %v3099 = vsub.f32 %v3081, %v3091
  %v3100 = vsub.f32 %v2820, %v2933
  %v3101 = vsub.f32 %v2823, %v2938
  %v3102 = vsub.f32 %v2828, %v2943
  %v3103 = vsub.f32 %v2831, %v2948
  %v3104 = vsub.f32 %v2836, %v2953
  %v3105 = vsub.f32 %v2839, %v2958
  %v3106 = vsub.f32 %v2844, %v2963
  %v3107 = vsub.f32 %v2847, %v2968
  %v3108 = vadd.f32 %v3092, 1e-05
  %v3109 = vadd.f32 %v3093, 1e-05
  %v3110 = vadd.f32 %v3094, 1e-05
  %v3111 = vadd.f32 %v3095, 1e-05
  %v3112 = vadd.f32 %v3096, 1e-05
  %v3113 = vadd.f32 %v3097, 1e-05
  %v3114 = vadd.f32 %v3098, 1e-05
  %v3115 = vadd.f32 %v3099, 1e-05
  %v3116 = vrsqrt.pop %v3108
  %v3117 = vrsqrt.pop %v3109
  %v3118 = vrsqrt.pop %v3110
  %v3119 = vrsqrt.pop %v3111
  %v3120 = vrsqrt.pop %v3112
  %v3121 = vrsqrt.pop %v3113
  %v3122 = vrsqrt.pop %v3114
  %v3123 = vrsqrt.pop %v3115
  %v3124 = vmul.f32 %v3100, %v3116
  %v3125 = vmul.f32 %v3101, %v3117
  %v3126 = vmul.f32 %v3102, %v3118
  %v3127 = vmul.f32 %v3103, %v3119
  %v3128 = vmul.f32 %v3104, %v3120
  %v3129 = vmul.f32 %v3105, %v3121
  %v3130 = vmul.f32 %v3106, %v3122
  %v3131 = vmul.f32 %v3107, %v3123
  %v3132 = vlaneseq
  %v3133 = vshrl.u32 %v3132, 7
  %v3134 = vsub.s32 1, %v3133
  %v3135 = vrot.slane %v282, %v3134
  %v3136 = vmul.f32 %v3124, %v3135
  %v3137 = vmul.f32 %v3125, %v3135
  %v3138 = vmul.f32 %v3126, %v3135
  %v3139 = vmul.f32 %v3127, %v3135
  %v3140 = vmul.f32 %v3128, %v3135
  %v3141 = vmul.f32 %v3129, %v3135
  %v3142 = vmul.f32 %v3130, %v3135
  %v3143 = vmul.f32 %v3131, %v3135
  %v3144 = vlaneseq
  %v3145 = vshrl.u32 %v3144, 7
  %v3146 = vsub.s32 2, %v3145
  %v3147 = vrot.slane %v282, %v3146
  %v3148 = vadd.f32 %v3136, %v3147
  %v3149 = vadd.f32 %v3137, %v3147
  %v3150 = vadd.f32 %v3138, %v3147
  %v3151 = vadd.f32 %v3139, %v3147
  %v3152 = vadd.f32 %v3140, %v3147
  %v3153 = vadd.f32 %v3141, %v3147
  %v3154 = vadd.f32 %v3142, %v3147
  %v3155 = vadd.f32 %v3143, %v3147
  %3156 = vst [vmem:[%s4] sm:$0xff] %v3148
  %3157 = vst [vmem:[%s4 + $0x8] sm:$0xff] %v3149
  %3158 = vst [vmem:[%s4 + $0x10] sm:$0xff] %v3150
  %3159 = vst [vmem:[%s4 + $0x18] sm:$0xff] %v3151
  %3160 = vst [vmem:[%s4 + $0x20] sm:$0xff] %v3152
  %3161 = vst [vmem:[%s4 + $0x28] sm:$0xff] %v3153
  %3162 = vst [vmem:[%s4 + $0x30] sm:$0xff] %v3154
  %3163 = vst [vmem:[%s4 + $0x38] sm:$0xff] %v3155
  // Predicated region
  $region18: #{featurizer_forward.3} parent=0 // pred_check
    _
  $region19: #{featurizer_forward.3} parent=0 // pred_check_branch
    %3165 = sbr.rel (0) target = $region21
  $region20: #{featurizer_forward.3} parent=0 // pred_region
    _
  $region21: #{featurizer_forward.3} parent=0 // pred_fallthru
    _
  // Predicated region
  $region22: #{featurizer_forward.3} parent=0 // pred_check
    _
  $region23: #{featurizer_forward.3} parent=0 // pred_check_branch
    %3167 = sbr.rel (0) target = $region25
  $region24: #{featurizer_forward.3} parent=0 // pred_region
    _
  $region25: #{featurizer_forward.3} parent=0 // pred_fallthru
    _

</llo_original>
